<compile_context>
chip_gen: v7x
topology: tpu7x:2x2x1
jax: 0.10.0
libtpu: 0.0.40
codegen_flags: <defaults>
</compile_context>

<pallas_src>
import jax
import jax.numpy as jnp
from jax.experimental import pallas as pl
from jax.experimental.pallas import tpu as pltpu


# ----------------------------------------------------------------------------
# Concrete model_dict (what StandardModel.__init__ would have been fed):
#   conv1: Conv2d(4, 8, 3, padding=1)   src []                 (takes x)
#   relu1: ReLU                         src [conv1]
#   conv2: Conv2d(8, 8, 3, padding=1)   src [relu1]
#   relu2: ReLU                         src [conv1, conv2]     (same shape -> sum)
#   conv3: Conv2d(8, 16, 3, padding=1)  src [relu2]
#   conv4: Conv2d(24, 8, 1, padding=0)  src [relu2, conv3]     (diff shape -> cat dim=1)
# ----------------------------------------------------------------------------
MODEL_DICT = {
    "conv1": {"type": "conv", "settings": dict(cin=4, cout=8, k=3, padding=1), "src": []},
    "relu1": {"type": "relu", "settings": {}, "src": ["conv1"]},
    "conv2": {"type": "conv", "settings": dict(cin=8, cout=8, k=3, padding=1), "src": ["relu1"]},
    "relu2": {"type": "relu", "settings": {}, "src": ["conv1", "conv2"]},
    "conv3": {"type": "conv", "settings": dict(cin=8, cout=16, k=3, padding=1), "src": ["relu2"]},
    "conv4": {"type": "conv", "settings": dict(cin=24, cout=8, k=1, padding=0), "src": ["relu2", "conv3"]},
}


def init_params(model_dict, seed=0):
    params = {}
    base = jax.random.PRNGKey(seed)
    for idx, (name, info) in enumerate(model_dict.items()):
        if info["type"] != "conv":
            continue
        s = info["settings"]
        kw, kb = jax.random.split(jax.random.fold_in(base, idx))
        w = 0.1 * jax.random.normal(
            kw, (s["cout"], s["cin"], s["k"], s["k"]), jnp.float32
        )
        b = 0.01 * jax.random.normal(kb, (s["cout"],), jnp.float32)
        params[name] = (w, b)
    return params


# ----------------------------------------------------------------------------
# Single fused Pallas kernel for the whole graph
# ----------------------------------------------------------------------------
def fused_standard_model_forward(x, params):
    """Forward pass of StandardModel(MODEL_DICT) as one fused Pallas kernel."""
    N, C_in, H, W = x.shape
    HP, WP = H + 2, W + 2                  # 1-px zero padding baked into the frame
    P = N * HP * WP                        # flattened padded pixel frame (lane axis)
    FO = 128                               # frame offset inside each buffer (margin)
    margin = WP + 1                        # max |tap shift| for a 3x3 conv
    assert FO >= margin
    BW = FO + ((P + margin + 127) // 128) * 128   # scratch lane width (mult of 128)
    OUT_W = ((P + 127) // 128) * 128              # output lane width (no margin)

    w1, b1 = params["conv1"]
    w2, b2 = params["conv2"]
    w3, b3 = params["conv3"]
    w4, b4 = params["conv4"]
    C1, C2, C3, C4 = w1.shape[0], w2.shape[0], w3.shape[0], w4.shape[0]

    # ---- host-side boundary glue (runs once, outside the kernel) ------------
    def to_frame(t):                       # (N, C, H, W) -> (C, BW) padded flat
        t = jnp.transpose(t, (1, 0, 2, 3))
        t = jnp.pad(t, ((0, 0), (0, 0), (1, 1), (1, 1)))
        t = t.reshape(t.shape[0], P)
        return jnp.pad(t, ((0, 0), (FO, BW - FO - P))).astype(jnp.float32)

    def prep_w3x3(w):                      # (Co, Ci, 3, 3) -> (9, Co, Ci) tap-major
        co, ci = w.shape[0], w.shape[1]
        return jnp.transpose(w, (2, 3, 0, 1)).reshape(9, co, ci).astype(jnp.float32)

    def prep_b(b):
        return b.reshape(-1, 1).astype(jnp.float32)

    # interior-pixel (non-padding) mask over the padded frame, as f32 0/1
    f = jnp.arange(P)
    rem = f % (HP * WP)
    yy, xx = rem // WP, rem % WP
    mask = (((yy >= 1) & (yy <= H) & (xx >= 1) & (xx <= W))
            .astype(jnp.float32).reshape(1, P))

    # conv4 is 1x1 over concat([relu2 (C2 ch), conv3 (C3 ch)], dim=1):
    # split its weight so no concat is ever materialized.
    w4m = w4.reshape(C4, -1)
    w4a = w4m[:, :C2].astype(jnp.float32)      # applied to relu2
    w4b = w4m[:, C2:].astype(jnp.float32)      # applied to conv3

    bf16 = jnp.bfloat16

    def conv3x3(src_ref, w_ref):
        """3x3 'same' conv as 9 shifted-slice matmuls on the padded frame."""
        co = w_ref.shape[1]
        acc = jnp.zeros((co, P), jnp.float32)
        for t in range(9):                              # static unroll (9 taps)
            ki, kj = t // 3, t % 3
            s = (ki - 1) * WP + (kj - 1)
            xs = src_ref[:, pl.ds(FO + s, P)]           # (Ci, P) shifted tap
            acc = acc + jnp.dot(w_ref[t].astype(bf16), xs.astype(bf16),
                                preferred_element_type=jnp.float32)
        return acc

    def kernel(x_ref, m_ref, w1_ref, b1_ref, w2_ref, b2_ref, w3_ref, b3_ref,
               w4a_ref, w4b_ref, b4_ref, o_ref, a1_ref, r2_ref):
        # Zero the VMEM scratch so frame margins / padding border read as 0.
        a1_ref[...] = jnp.zeros_like(a1_ref)
        r2_ref[...] = jnp.zeros_like(r2_ref)
        m = m_ref[...]                                  # (1, P) interior mask

        # conv1 (+ bias); mask the border to keep the zero-padding invariant.
        # Store relu1 = relu(conv1) for conv2's tap reads; raw (masked) conv1
        # stays in registers for the relu2 residual sum.
        c1 = (conv3x3(x_ref, w1_ref) + b1_ref[...]) * m
        a1_ref[:, pl.ds(FO, P)] = jnp.maximum(c1, 0.0)

        # conv2 on relu1.  Border garbage is killed when relu2 is masked below.
        c2 = conv3x3(a1_ref, w2_ref) + b2_ref[...]

        # relu2 = relu(conv1 + conv2)   (same-shape srcs -> residual sum).
        r2 = jnp.maximum(c1 + c2, 0.0) * m
        r2_ref[:, pl.ds(FO, P)] = r2

        # conv3 (+ bias).  No mask needed: only consumed by the 1x1 conv below
        # and border output pixels are cropped at the model boundary.
        c3 = conv3x3(r2_ref, w3_ref) + b3_ref[...]

        # conv4: 1x1 over concat([relu2, conv3]) == two split-weight matmuls.
        o = (jnp.dot(w4a_ref[...].astype(bf16), r2.astype(bf16),
                     preferred_element_type=jnp.float32)
             + jnp.dot(w4b_ref[...].astype(bf16), c3.astype(bf16),
                       preferred_element_type=jnp.float32)
             + b4_ref[...])
        o_ref[...] = jnp.zeros_like(o_ref)
        o_ref[:, pl.ds(0, P)] = o                       # lane-aligned store

    # TODO(synk): for much larger N*H*W, tile the pixel (lane) axis with a
    # ("parallel",) grid so v7x's two TensorCores split the work; at this size
    # a single invocation with everything VMEM-resident is optimal.
    out_frame = pl.pallas_call(
        kernel,
        out_shape=jax.ShapeDtypeStruct((C4, OUT_W), jnp.float32),
        in_specs=[pl.BlockSpec(memory_space=pltpu.MemorySpace.VMEM)
                  for _ in range(11)],
        out_specs=pl.BlockSpec(memory_space=pltpu.MemorySpace.VMEM),
        scratch_shapes=[pltpu.VMEM((C1, BW), jnp.float32),   # relu1 frame
                        pltpu.VMEM((C2, BW), jnp.float32)],  # relu2 frame
    )(to_frame(x), mask,
      prep_w3x3(w1), prep_b(b1),
      prep_w3x3(w2), prep_b(b2),
      prep_w3x3(w3), prep_b(b3),
      w4a, w4b, prep_b(b4))

    # Extract interior pixels and restore NCHW once, at the model boundary.
    out = out_frame[:, :P].reshape(C4, N, HP, WP)[:, :, 1:-1, 1:-1]
    return jnp.transpose(out, (1, 0, 2, 3))


# ----------------------------------------------------------------------------
# Pure-JAX reference (generic model_dict interpreter, mirrors StandardModel)
# ----------------------------------------------------------------------------
def _ref_conv(x, w, b, padding):
    out = jax.lax.conv_general_dilated(
        x, w, window_strides=(1, 1),
        padding=[(padding, padding), (padding, padding)],
        dimension_numbers=("NCHW", "OIHW", "NCHW"),
    )
    return out + b.reshape(1, -1, 1, 1)


def _ref_forward(x, params, model_dict):
    outputs = {}
    for name, info in model_dict.items():
        srcs = info["src"]
        if not srcs:
            inputs = x
        elif len(srcs) == 1:
            inputs = outputs[srcs[0]]
        else:
            shapes = [outputs[s].shape for s in srcs]
            if all(shape == shapes[0] for shape in shapes):
                inputs = sum(outputs[s] for s in srcs)
            else:
                inputs = jnp.concatenate([outputs[s] for s in srcs], axis=1)
        if info["type"] == "conv":
            w, b = params[name]
            outputs[name] = _ref_conv(inputs, w, b, info["settings"]["padding"])
        else:
            outputs[name] = jnp.maximum(inputs, 0.0)
    return outputs[list(model_dict.keys())[-1]]


if __name__ == "__main__":
    key = jax.random.PRNGKey(0)
    x = jax.random.normal(key, (2, 4, 16, 16), jnp.float32)   # NCHW, like PyTorch
    params = init_params(MODEL_DICT, seed=0)

    fwd = jax.jit(fused_standard_model_forward)
    out = jax.block_until_ready(fwd(x, params))
    assert out.shape == (2, 8, 16, 16), out.shape

    ref = jax.block_until_ready(_ref_forward(x, params, MODEL_DICT))
    max_err = float(jnp.max(jnp.abs(out - ref)))
    assert jnp.allclose(out, ref, rtol=2e-2, atol=2e-2), max_err
    print("KERNEL_OK")
</pallas_src>

<mosaic_0001>
module attributes {stable_mosaic.version = 11 : i64} {
  func.func @kernel(%arg0: memref<4x896xf32, #tpu.memory_space<vmem>>, %arg1: memref<1x648xf32, #tpu.memory_space<vmem>>, %arg2: memref<9x8x4xf32, #tpu.memory_space<vmem>>, %arg3: memref<8x1xf32, #tpu.memory_space<vmem>>, %arg4: memref<9x8x8xf32, #tpu.memory_space<vmem>>, %arg5: memref<8x1xf32, #tpu.memory_space<vmem>>, %arg6: memref<9x16x8xf32, #tpu.memory_space<vmem>>, %arg7: memref<16x1xf32, #tpu.memory_space<vmem>>, %arg8: memref<8x8xf32, #tpu.memory_space<vmem>>, %arg9: memref<8x16xf32, #tpu.memory_space<vmem>>, %arg10: memref<8x1xf32, #tpu.memory_space<vmem>>, %arg11: memref<8x768xf32, #tpu.memory_space<vmem>>, %arg12: memref<8x896xf32, #tpu.memory_space<vmem>>, %arg13: memref<8x896xf32, #tpu.memory_space<vmem>>) attributes {dimension_semantics = [], scalar_prefetch = 0 : i64, scratch_operands = 2 : i64, tpu.core_type = #tpu.core_type<tc>} {
    %cst = arith.constant 0.000000e+00 : f32
    %0 = vector.broadcast %cst : f32 to vector<8x896xf32>
    %c0 = arith.constant 0 : index
    %c0_0 = arith.constant 0 : index
    %1 = vector.load %arg12[%c0, %c0_0] : memref<8x896xf32, #tpu.memory_space<vmem>>, vector<8x896xf32>
    tpu.vector_store %arg12[%c0, %c0_0], %0 {strides = array<i32>} : memref<8x896xf32, #tpu.memory_space<vmem>>, vector<8x896xf32>,
    %cst_1 = arith.constant 0.000000e+00 : f32
    %2 = vector.broadcast %cst_1 : f32 to vector<8x896xf32>
    %c0_2 = arith.constant 0 : index
    %c0_3 = arith.constant 0 : index
    %3 = vector.load %arg13[%c0_2, %c0_3] : memref<8x896xf32, #tpu.memory_space<vmem>>, vector<8x896xf32>
    tpu.vector_store %arg13[%c0_2, %c0_3], %2 {strides = array<i32>} : memref<8x896xf32, #tpu.memory_space<vmem>>, vector<8x896xf32>,
    %c0_4 = arith.constant 0 : index
    %c0_5 = arith.constant 0 : index
    %4 = vector.load %arg1[%c0_4, %c0_5] : memref<1x648xf32, #tpu.memory_space<vmem>>, vector<1x648xf32>
    %cst_6 = arith.constant 0.000000e+00 : f32
    %5 = vector.broadcast %cst_6 : f32 to vector<8x648xf32>
    %c0_7 = arith.constant 0 : index
    %c109 = arith.constant 109 : index
    %6 = vector.load %arg0[%c0_7, %c109] : memref<4x896xf32, #tpu.memory_space<vmem>>, vector<4x648xf32>
    %c0_8 = arith.constant 0 : index
    %c0_9 = arith.constant 0 : index
    %c0_10 = arith.constant 0 : index
    %7 = vector.load %arg2[%c0_8, %c0_9, %c0_10] : memref<9x8x4xf32, #tpu.memory_space<vmem>>, vector<1x8x4xf32>
    %8 = vector.shape_cast %7 : vector<1x8x4xf32> to vector<8x4xf32>
    %9 = arith.truncf %8 : vector<8x4xf32> to vector<8x4xbf16>
    %10 = arith.truncf %6 : vector<4x648xf32> to vector<4x648xbf16>
    %cst_11 = arith.constant dense<0.000000e+00> : vector<8x648xf32>
    %11 = tpu.matmul %9, %10, %cst_11 {dimension_numbers = #tpu.dot_dimension_numbers<[1], [0], [0], [1], [0, 0, 1, 1], [], []>} : vector<8x4xbf16>, vector<4x648xbf16>, vector<8x648xf32> -> vector<8x648xf32>
    %12 = arith.addf %5, %11 : vector<8x648xf32>
    %c0_12 = arith.constant 0 : index
    %c110 = arith.constant 110 : index
    %13 = vector.load %arg0[%c0_12, %c110] : memref<4x896xf32, #tpu.memory_space<vmem>>, vector<4x648xf32>
    %c1 = arith.constant 1 : index
    %c0_13 = arith.constant 0 : index
    %c0_14 = arith.constant 0 : index
    %14 = vector.load %arg2[%c1, %c0_13, %c0_14] : memref<9x8x4xf32, #tpu.memory_space<vmem>>, vector<1x8x4xf32>
    %15 = vector.shape_cast %14 : vector<1x8x4xf32> to vector<8x4xf32>
    %16 = arith.truncf %15 : vector<8x4xf32> to vector<8x4xbf16>
    %17 = arith.truncf %13 : vector<4x648xf32> to vector<4x648xbf16>
    %cst_15 = arith.constant dense<0.000000e+00> : vector<8x648xf32>
    %18 = tpu.matmul %16, %17, %cst_15 {dimension_numbers = #tpu.dot_dimension_numbers<[1], [0], [0], [1], [0, 0, 1, 1], [], []>} : vector<8x4xbf16>, vector<4x648xbf16>, vector<8x648xf32> -> vector<8x648xf32>
    %19 = arith.addf %12, %18 : vector<8x648xf32>
    %c0_16 = arith.constant 0 : index
    %c111 = arith.constant 111 : index
    %20 = vector.load %arg0[%c0_16, %c111] : memref<4x896xf32, #tpu.memory_space<vmem>>, vector<4x648xf32>
    %c2 = arith.constant 2 : index
    %c0_17 = arith.constant 0 : index
    %c0_18 = arith.constant 0 : index
    %21 = vector.load %arg2[%c2, %c0_17, %c0_18] : memref<9x8x4xf32, #tpu.memory_space<vmem>>, vector<1x8x4xf32>
    %22 = vector.shape_cast %21 : vector<1x8x4xf32> to vector<8x4xf32>
    %23 = arith.truncf %22 : vector<8x4xf32> to vector<8x4xbf16>
    %24 = arith.truncf %20 : vector<4x648xf32> to vector<4x648xbf16>
    %cst_19 = arith.constant dense<0.000000e+00> : vector<8x648xf32>
    %25 = tpu.matmul %23, %24, %cst_19 {dimension_numbers = #tpu.dot_dimension_numbers<[1], [0], [0], [1], [0, 0, 1, 1], [], []>} : vector<8x4xbf16>, vector<4x648xbf16>, vector<8x648xf32> -> vector<8x648xf32>
    %26 = arith.addf %19, %25 : vector<8x648xf32>
    %c0_20 = arith.constant 0 : index
    %c127 = arith.constant 127 : index
    %27 = vector.load %arg0[%c0_20, %c127] : memref<4x896xf32, #tpu.memory_space<vmem>>, vector<4x648xf32>
    %c3 = arith.constant 3 : index
    %c0_21 = arith.constant 0 : index
    %c0_22 = arith.constant 0 : index
    %28 = vector.load %arg2[%c3, %c0_21, %c0_22] : memref<9x8x4xf32, #tpu.memory_space<vmem>>, vector<1x8x4xf32>
    %29 = vector.shape_cast %28 : vector<1x8x4xf32> to vector<8x4xf32>
    %30 = arith.truncf %29 : vector<8x4xf32> to vector<8x4xbf16>
    %31 = arith.truncf %27 : vector<4x648xf32> to vector<4x648xbf16>
    %cst_23 = arith.constant dense<0.000000e+00> : vector<8x648xf32>
    %32 = tpu.matmul %30, %31, %cst_23 {dimension_numbers = #tpu.dot_dimension_numbers<[1], [0], [0], [1], [0, 0, 1, 1], [], []>} : vector<8x4xbf16>, vector<4x648xbf16>, vector<8x648xf32> -> vector<8x648xf32>
    %33 = arith.addf %26, %32 : vector<8x648xf32>
    %c0_24 = arith.constant 0 : index
    %c128 = arith.constant 128 : index
    %34 = vector.load %arg0[%c0_24, %c128] : memref<4x896xf32, #tpu.memory_space<vmem>>, vector<4x648xf32>
    %c4 = arith.constant 4 : index
    %c0_25 = arith.constant 0 : index
    %c0_26 = arith.constant 0 : index
    %35 = vector.load %arg2[%c4, %c0_25, %c0_26] : memref<9x8x4xf32, #tpu.memory_space<vmem>>, vector<1x8x4xf32>
    %36 = vector.shape_cast %35 : vector<1x8x4xf32> to vector<8x4xf32>
    %37 = arith.truncf %36 : vector<8x4xf32> to vector<8x4xbf16>
    %38 = arith.truncf %34 : vector<4x648xf32> to vector<4x648xbf16>
    %cst_27 = arith.constant dense<0.000000e+00> : vector<8x648xf32>
    %39 = tpu.matmul %37, %38, %cst_27 {dimension_numbers = #tpu.dot_dimension_numbers<[1], [0], [0], [1], [0, 0, 1, 1], [], []>} : vector<8x4xbf16>, vector<4x648xbf16>, vector<8x648xf32> -> vector<8x648xf32>
    %40 = arith.addf %33, %39 : vector<8x648xf32>
    %c0_28 = arith.constant 0 : index
    %c129 = arith.constant 129 : index
    %41 = vector.load %arg0[%c0_28, %c129] : memref<4x896xf32, #tpu.memory_space<vmem>>, vector<4x648xf32>
    %c5 = arith.constant 5 : index
    %c0_29 = arith.constant 0 : index
    %c0_30 = arith.constant 0 : index
    %42 = vector.load %arg2[%c5, %c0_29, %c0_30] : memref<9x8x4xf32, #tpu.memory_space<vmem>>, vector<1x8x4xf32>
    %43 = vector.shape_cast %42 : vector<1x8x4xf32> to vector<8x4xf32>
    %44 = arith.truncf %43 : vector<8x4xf32> to vector<8x4xbf16>
    %45 = arith.truncf %41 : vector<4x648xf32> to vector<4x648xbf16>
    %cst_31 = arith.constant dense<0.000000e+00> : vector<8x648xf32>
    %46 = tpu.matmul %44, %45, %cst_31 {dimension_numbers = #tpu.dot_dimension_numbers<[1], [0], [0], [1], [0, 0, 1, 1], [], []>} : vector<8x4xbf16>, vector<4x648xbf16>, vector<8x648xf32> -> vector<8x648xf32>
    %47 = arith.addf %40, %46 : vector<8x648xf32>
    %c0_32 = arith.constant 0 : index
    %c145 = arith.constant 145 : index
    %48 = vector.load %arg0[%c0_32, %c145] : memref<4x896xf32, #tpu.memory_space<vmem>>, vector<4x648xf32>
    %c6 = arith.constant 6 : index
    %c0_33 = arith.constant 0 : index
    %c0_34 = arith.constant 0 : index
    %49 = vector.load %arg2[%c6, %c0_33, %c0_34] : memref<9x8x4xf32, #tpu.memory_space<vmem>>, vector<1x8x4xf32>
    %50 = vector.shape_cast %49 : vector<1x8x4xf32> to vector<8x4xf32>
    %51 = arith.truncf %50 : vector<8x4xf32> to vector<8x4xbf16>
    %52 = arith.truncf %48 : vector<4x648xf32> to vector<4x648xbf16>
    %cst_35 = arith.constant dense<0.000000e+00> : vector<8x648xf32>
    %53 = tpu.matmul %51, %52, %cst_35 {dimension_numbers = #tpu.dot_dimension_numbers<[1], [0], [0], [1], [0, 0, 1, 1], [], []>} : vector<8x4xbf16>, vector<4x648xbf16>, vector<8x648xf32> -> vector<8x648xf32>
    %54 = arith.addf %47, %53 : vector<8x648xf32>
    %c0_36 = arith.constant 0 : index
    %c146 = arith.constant 146 : index
    %55 = vector.load %arg0[%c0_36, %c146] : memref<4x896xf32, #tpu.memory_space<vmem>>, vector<4x648xf32>
    %c7 = arith.constant 7 : index
    %c0_37 = arith.constant 0 : index
    %c0_38 = arith.constant 0 : index
    %56 = vector.load %arg2[%c7, %c0_37, %c0_38] : memref<9x8x4xf32, #tpu.memory_space<vmem>>, vector<1x8x4xf32>
    %57 = vector.shape_cast %56 : vector<1x8x4xf32> to vector<8x4xf32>
    %58 = arith.truncf %57 : vector<8x4xf32> to vector<8x4xbf16>
    %59 = arith.truncf %55 : vector<4x648xf32> to vector<4x648xbf16>
    %cst_39 = arith.constant dense<0.000000e+00> : vector<8x648xf32>
    %60 = tpu.matmul %58, %59, %cst_39 {dimension_numbers = #tpu.dot_dimension_numbers<[1], [0], [0], [1], [0, 0, 1, 1], [], []>} : vector<8x4xbf16>, vector<4x648xbf16>, vector<8x648xf32> -> vector<8x648xf32>
    %61 = arith.addf %54, %60 : vector<8x648xf32>
    %c0_40 = arith.constant 0 : index
    %c147 = arith.constant 147 : index
    %62 = vector.load %arg0[%c0_40, %c147] : memref<4x896xf32, #tpu.memory_space<vmem>>, vector<4x648xf32>
    %c8 = arith.constant 8 : index
    %c0_41 = arith.constant 0 : index
    %c0_42 = arith.constant 0 : index
    %63 = vector.load %arg2[%c8, %c0_41, %c0_42] : memref<9x8x4xf32, #tpu.memory_space<vmem>>, vector<1x8x4xf32>
    %64 = vector.shape_cast %63 : vector<1x8x4xf32> to vector<8x4xf32>
    %65 = arith.truncf %64 : vector<8x4xf32> to vector<8x4xbf16>
    %66 = arith.truncf %62 : vector<4x648xf32> to vector<4x648xbf16>
    %cst_43 = arith.constant dense<0.000000e+00> : vector<8x648xf32>
    %67 = tpu.matmul %65, %66, %cst_43 {dimension_numbers = #tpu.dot_dimension_numbers<[1], [0], [0], [1], [0, 0, 1, 1], [], []>} : vector<8x4xbf16>, vector<4x648xbf16>, vector<8x648xf32> -> vector<8x648xf32>
    %68 = arith.addf %61, %67 : vector<8x648xf32>
    %c0_44 = arith.constant 0 : index
    %c0_45 = arith.constant 0 : index
    %69 = vector.load %arg3[%c0_44, %c0_45] : memref<8x1xf32, #tpu.memory_space<vmem>>, vector<8x1xf32>
    %70 = vector.broadcast %69 : vector<8x1xf32> to vector<8x648xf32>
    %71 = arith.addf %68, %70 : vector<8x648xf32>
    %72 = vector.broadcast %4 : vector<1x648xf32> to vector<8x648xf32>
    %73 = arith.mulf %71, %72 : vector<8x648xf32>
    %cst_46 = arith.constant 0.000000e+00 : f32
    %74 = vector.broadcast %cst_46 : f32 to vector<8x648xf32>
    %75 = arith.maximumf %73, %74 : vector<8x648xf32>
    %c0_47 = arith.constant 0 : index
    %c128_48 = arith.constant 128 : index
    %76 = vector.load %arg12[%c0_47, %c128_48] : memref<8x896xf32, #tpu.memory_space<vmem>>, vector<8x648xf32>
    tpu.vector_store %arg12[%c0_47, %c128_48], %75 {strides = array<i32>} : memref<8x896xf32, #tpu.memory_space<vmem>>, vector<8x648xf32>,
    %cst_49 = arith.constant 0.000000e+00 : f32
    %77 = vector.broadcast %cst_49 : f32 to vector<8x648xf32>
    %c0_50 = arith.constant 0 : index
    %c109_51 = arith.constant 109 : index
    %78 = vector.load %arg12[%c0_50, %c109_51] : memref<8x896xf32, #tpu.memory_space<vmem>>, vector<8x648xf32>
    %c0_52 = arith.constant 0 : index
    %c0_53 = arith.constant 0 : index
    %c0_54 = arith.constant 0 : index
    %79 = vector.load %arg4[%c0_52, %c0_53, %c0_54] : memref<9x8x8xf32, #tpu.memory_space<vmem>>, vector<1x8x8xf32>
    %80 = vector.shape_cast %79 : vector<1x8x8xf32> to vector<8x8xf32>
    %81 = arith.truncf %80 : vector<8x8xf32> to vector<8x8xbf16>
    %82 = arith.truncf %78 : vector<8x648xf32> to vector<8x648xbf16>
    %cst_55 = arith.constant dense<0.000000e+00> : vector<8x648xf32>
    %83 = tpu.matmul %81, %82, %cst_55 {dimension_numbers = #tpu.dot_dimension_numbers<[1], [0], [0], [1], [0, 0, 1, 1], [], []>} : vector<8x8xbf16>, vector<8x648xbf16>, vector<8x648xf32> -> vector<8x648xf32>
    %84 = arith.addf %77, %83 : vector<8x648xf32>
    %c0_56 = arith.constant 0 : index
    %c110_57 = arith.constant 110 : index
    %85 = vector.load %arg12[%c0_56, %c110_57] : memref<8x896xf32, #tpu.memory_space<vmem>>, vector<8x648xf32>
    %c1_58 = arith.constant 1 : index
    %c0_59 = arith.constant 0 : index
    %c0_60 = arith.constant 0 : index
    %86 = vector.load %arg4[%c1_58, %c0_59, %c0_60] : memref<9x8x8xf32, #tpu.memory_space<vmem>>, vector<1x8x8xf32>
    %87 = vector.shape_cast %86 : vector<1x8x8xf32> to vector<8x8xf32>
    %88 = arith.truncf %87 : vector<8x8xf32> to vector<8x8xbf16>
    %89 = arith.truncf %85 : vector<8x648xf32> to vector<8x648xbf16>
    %cst_61 = arith.constant dense<0.000000e+00> : vector<8x648xf32>
    %90 = tpu.matmul %88, %89, %cst_61 {dimension_numbers = #tpu.dot_dimension_numbers<[1], [0], [0], [1], [0, 0, 1, 1], [], []>} : vector<8x8xbf16>, vector<8x648xbf16>, vector<8x648xf32> -> vector<8x648xf32>
    %91 = arith.addf %84, %90 : vector<8x648xf32>
    %c0_62 = arith.constant 0 : index
    %c111_63 = arith.constant 111 : index
    %92 = vector.load %arg12[%c0_62, %c111_63] : memref<8x896xf32, #tpu.memory_space<vmem>>, vector<8x648xf32>
    %c2_64 = arith.constant 2 : index
    %c0_65 = arith.constant 0 : index
    %c0_66 = arith.constant 0 : index
    %93 = vector.load %arg4[%c2_64, %c0_65, %c0_66] : memref<9x8x8xf32, #tpu.memory_space<vmem>>, vector<1x8x8xf32>
    %94 = vector.shape_cast %93 : vector<1x8x8xf32> to vector<8x8xf32>
    %95 = arith.truncf %94 : vector<8x8xf32> to vector<8x8xbf16>
    %96 = arith.truncf %92 : vector<8x648xf32> to vector<8x648xbf16>
    %cst_67 = arith.constant dense<0.000000e+00> : vector<8x648xf32>
    %97 = tpu.matmul %95, %96, %cst_67 {dimension_numbers = #tpu.dot_dimension_numbers<[1], [0], [0], [1], [0, 0, 1, 1], [], []>} : vector<8x8xbf16>, vector<8x648xbf16>, vector<8x648xf32> -> vector<8x648xf32>
    %98 = arith.addf %91, %97 : vector<8x648xf32>
    %c0_68 = arith.constant 0 : index
    %c127_69 = arith.constant 127 : index
    %99 = vector.load %arg12[%c0_68, %c127_69] : memref<8x896xf32, #tpu.memory_space<vmem>>, vector<8x648xf32>
    %c3_70 = arith.constant 3 : index
    %c0_71 = arith.constant 0 : index
    %c0_72 = arith.constant 0 : index
    %100 = vector.load %arg4[%c3_70, %c0_71, %c0_72] : memref<9x8x8xf32, #tpu.memory_space<vmem>>, vector<1x8x8xf32>
    %101 = vector.shape_cast %100 : vector<1x8x8xf32> to vector<8x8xf32>
    %102 = arith.truncf %101 : vector<8x8xf32> to vector<8x8xbf16>
    %103 = arith.truncf %99 : vector<8x648xf32> to vector<8x648xbf16>
    %cst_73 = arith.constant dense<0.000000e+00> : vector<8x648xf32>
    %104 = tpu.matmul %102, %103, %cst_73 {dimension_numbers = #tpu.dot_dimension_numbers<[1], [0], [0], [1], [0, 0, 1, 1], [], []>} : vector<8x8xbf16>, vector<8x648xbf16>, vector<8x648xf32> -> vector<8x648xf32>
    %105 = arith.addf %98, %104 : vector<8x648xf32>
    %c0_74 = arith.constant 0 : index
    %c128_75 = arith.constant 128 : index
    %106 = vector.load %arg12[%c0_74, %c128_75] : memref<8x896xf32, #tpu.memory_space<vmem>>, vector<8x648xf32>
    %c4_76 = arith.constant 4 : index
    %c0_77 = arith.constant 0 : index
    %c0_78 = arith.constant 0 : index
    %107 = vector.load %arg4[%c4_76, %c0_77, %c0_78] : memref<9x8x8xf32, #tpu.memory_space<vmem>>, vector<1x8x8xf32>
    %108 = vector.shape_cast %107 : vector<1x8x8xf32> to vector<8x8xf32>
    %109 = arith.truncf %108 : vector<8x8xf32> to vector<8x8xbf16>
    %110 = arith.truncf %106 : vector<8x648xf32> to vector<8x648xbf16>
    %cst_79 = arith.constant dense<0.000000e+00> : vector<8x648xf32>
    %111 = tpu.matmul %109, %110, %cst_79 {dimension_numbers = #tpu.dot_dimension_numbers<[1], [0], [0], [1], [0, 0, 1, 1], [], []>} : vector<8x8xbf16>, vector<8x648xbf16>, vector<8x648xf32> -> vector<8x648xf32>
    %112 = arith.addf %105, %111 : vector<8x648xf32>
    %c0_80 = arith.constant 0 : index
    %c129_81 = arith.constant 129 : index
    %113 = vector.load %arg12[%c0_80, %c129_81] : memref<8x896xf32, #tpu.memory_space<vmem>>, vector<8x648xf32>
    %c5_82 = arith.constant 5 : index
    %c0_83 = arith.constant 0 : index
    %c0_84 = arith.constant 0 : index
    %114 = vector.load %arg4[%c5_82, %c0_83, %c0_84] : memref<9x8x8xf32, #tpu.memory_space<vmem>>, vector<1x8x8xf32>
    %115 = vector.shape_cast %114 : vector<1x8x8xf32> to vector<8x8xf32>
    %116 = arith.truncf %115 : vector<8x8xf32> to vector<8x8xbf16>
    %117 = arith.truncf %113 : vector<8x648xf32> to vector<8x648xbf16>
    %cst_85 = arith.constant dense<0.000000e+00> : vector<8x648xf32>
    %118 = tpu.matmul %116, %117, %cst_85 {dimension_numbers = #tpu.dot_dimension_numbers<[1], [0], [0], [1], [0, 0, 1, 1], [], []>} : vector<8x8xbf16>, vector<8x648xbf16>, vector<8x648xf32> -> vector<8x648xf32>
    %119 = arith.addf %112, %118 : vector<8x648xf32>
    %c0_86 = arith.constant 0 : index
    %c145_87 = arith.constant 145 : index
    %120 = vector.load %arg12[%c0_86, %c145_87] : memref<8x896xf32, #tpu.memory_space<vmem>>, vector<8x648xf32>
    %c6_88 = arith.constant 6 : index
    %c0_89 = arith.constant 0 : index
    %c0_90 = arith.constant 0 : index
    %121 = vector.load %arg4[%c6_88, %c0_89, %c0_90] : memref<9x8x8xf32, #tpu.memory_space<vmem>>, vector<1x8x8xf32>
    %122 = vector.shape_cast %121 : vector<1x8x8xf32> to vector<8x8xf32>
    %123 = arith.truncf %122 : vector<8x8xf32> to vector<8x8xbf16>
    %124 = arith.truncf %120 : vector<8x648xf32> to vector<8x648xbf16>
    %cst_91 = arith.constant dense<0.000000e+00> : vector<8x648xf32>
    %125 = tpu.matmul %123, %124, %cst_91 {dimension_numbers = #tpu.dot_dimension_numbers<[1], [0], [0], [1], [0, 0, 1, 1], [], []>} : vector<8x8xbf16>, vector<8x648xbf16>, vector<8x648xf32> -> vector<8x648xf32>
    %126 = arith.addf %119, %125 : vector<8x648xf32>
    %c0_92 = arith.constant 0 : index
    %c146_93 = arith.constant 146 : index
    %127 = vector.load %arg12[%c0_92, %c146_93] : memref<8x896xf32, #tpu.memory_space<vmem>>, vector<8x648xf32>
    %c7_94 = arith.constant 7 : index
    %c0_95 = arith.constant 0 : index
    %c0_96 = arith.constant 0 : index
    %128 = vector.load %arg4[%c7_94, %c0_95, %c0_96] : memref<9x8x8xf32, #tpu.memory_space<vmem>>, vector<1x8x8xf32>
    %129 = vector.shape_cast %128 : vector<1x8x8xf32> to vector<8x8xf32>
    %130 = arith.truncf %129 : vector<8x8xf32> to vector<8x8xbf16>
    %131 = arith.truncf %127 : vector<8x648xf32> to vector<8x648xbf16>
    %cst_97 = arith.constant dense<0.000000e+00> : vector<8x648xf32>
    %132 = tpu.matmul %130, %131, %cst_97 {dimension_numbers = #tpu.dot_dimension_numbers<[1], [0], [0], [1], [0, 0, 1, 1], [], []>} : vector<8x8xbf16>, vector<8x648xbf16>, vector<8x648xf32> -> vector<8x648xf32>
    %133 = arith.addf %126, %132 : vector<8x648xf32>
    %c0_98 = arith.constant 0 : index
    %c147_99 = arith.constant 147 : index
    %134 = vector.load %arg12[%c0_98, %c147_99] : memref<8x896xf32, #tpu.memory_space<vmem>>, vector<8x648xf32>
    %c8_100 = arith.constant 8 : index
    %c0_101 = arith.constant 0 : index
    %c0_102 = arith.constant 0 : index
    %135 = vector.load %arg4[%c8_100, %c0_101, %c0_102] : memref<9x8x8xf32, #tpu.memory_space<vmem>>, vector<1x8x8xf32>
    %136 = vector.shape_cast %135 : vector<1x8x8xf32> to vector<8x8xf32>
    %137 = arith.truncf %136 : vector<8x8xf32> to vector<8x8xbf16>
    %138 = arith.truncf %134 : vector<8x648xf32> to vector<8x648xbf16>
    %cst_103 = arith.constant dense<0.000000e+00> : vector<8x648xf32>
    %139 = tpu.matmul %137, %138, %cst_103 {dimension_numbers = #tpu.dot_dimension_numbers<[1], [0], [0], [1], [0, 0, 1, 1], [], []>} : vector<8x8xbf16>, vector<8x648xbf16>, vector<8x648xf32> -> vector<8x648xf32>
    %140 = arith.addf %133, %139 : vector<8x648xf32>
    %c0_104 = arith.constant 0 : index
    %c0_105 = arith.constant 0 : index
    %141 = vector.load %arg5[%c0_104, %c0_105] : memref<8x1xf32, #tpu.memory_space<vmem>>, vector<8x1xf32>
    %142 = vector.broadcast %141 : vector<8x1xf32> to vector<8x648xf32>
    %143 = arith.addf %140, %142 : vector<8x648xf32>
    %144 = arith.addf %73, %143 : vector<8x648xf32>
    %cst_106 = arith.constant 0.000000e+00 : f32
    %145 = vector.broadcast %cst_106 : f32 to vector<8x648xf32>
    %146 = arith.maximumf %144, %145 : vector<8x648xf32>
    %147 = vector.broadcast %4 : vector<1x648xf32> to vector<8x648xf32>
    %148 = arith.mulf %146, %147 : vector<8x648xf32>
    %c0_107 = arith.constant 0 : index
    %c128_108 = arith.constant 128 : index
    %149 = vector.load %arg13[%c0_107, %c128_108] : memref<8x896xf32, #tpu.memory_space<vmem>>, vector<8x648xf32>
    tpu.vector_store %arg13[%c0_107, %c128_108], %148 {strides = array<i32>} : memref<8x896xf32, #tpu.memory_space<vmem>>, vector<8x648xf32>,
    %cst_109 = arith.constant 0.000000e+00 : f32
    %150 = vector.broadcast %cst_109 : f32 to vector<16x648xf32>
    %c0_110 = arith.constant 0 : index
    %c109_111 = arith.constant 109 : index
    %151 = vector.load %arg13[%c0_110, %c109_111] : memref<8x896xf32, #tpu.memory_space<vmem>>, vector<8x648xf32>
    %c0_112 = arith.constant 0 : index
    %c0_113 = arith.constant 0 : index
    %c0_114 = arith.constant 0 : index
    %152 = vector.load %arg6[%c0_112, %c0_113, %c0_114] : memref<9x16x8xf32, #tpu.memory_space<vmem>>, vector<1x16x8xf32>
    %153 = vector.shape_cast %152 : vector<1x16x8xf32> to vector<16x8xf32>
    %154 = arith.truncf %153 : vector<16x8xf32> to vector<16x8xbf16>
    %155 = arith.truncf %151 : vector<8x648xf32> to vector<8x648xbf16>
    %cst_115 = arith.constant dense<0.000000e+00> : vector<16x648xf32>
    %156 = tpu.matmul %154, %155, %cst_115 {dimension_numbers = #tpu.dot_dimension_numbers<[1], [0], [0], [1], [0, 0, 1, 1], [], []>} : vector<16x8xbf16>, vector<8x648xbf16>, vector<16x648xf32> -> vector<16x648xf32>
    %157 = arith.addf %150, %156 : vector<16x648xf32>
    %c0_116 = arith.constant 0 : index
    %c110_117 = arith.constant 110 : index
    %158 = vector.load %arg13[%c0_116, %c110_117] : memref<8x896xf32, #tpu.memory_space<vmem>>, vector<8x648xf32>
    %c1_118 = arith.constant 1 : index
    %c0_119 = arith.constant 0 : index
    %c0_120 = arith.constant 0 : index
    %159 = vector.load %arg6[%c1_118, %c0_119, %c0_120] : memref<9x16x8xf32, #tpu.memory_space<vmem>>, vector<1x16x8xf32>
    %160 = vector.shape_cast %159 : vector<1x16x8xf32> to vector<16x8xf32>
    %161 = arith.truncf %160 : vector<16x8xf32> to vector<16x8xbf16>
    %162 = arith.truncf %158 : vector<8x648xf32> to vector<8x648xbf16>
    %cst_121 = arith.constant dense<0.000000e+00> : vector<16x648xf32>
    %163 = tpu.matmul %161, %162, %cst_121 {dimension_numbers = #tpu.dot_dimension_numbers<[1], [0], [0], [1], [0, 0, 1, 1], [], []>} : vector<16x8xbf16>, vector<8x648xbf16>, vector<16x648xf32> -> vector<16x648xf32>
    %164 = arith.addf %157, %163 : vector<16x648xf32>
    %c0_122 = arith.constant 0 : index
    %c111_123 = arith.constant 111 : index
    %165 = vector.load %arg13[%c0_122, %c111_123] : memref<8x896xf32, #tpu.memory_space<vmem>>, vector<8x648xf32>
    %c2_124 = arith.constant 2 : index
    %c0_125 = arith.constant 0 : index
    %c0_126 = arith.constant 0 : index
    %166 = vector.load %arg6[%c2_124, %c0_125, %c0_126] : memref<9x16x8xf32, #tpu.memory_space<vmem>>, vector<1x16x8xf32>
    %167 = vector.shape_cast %166 : vector<1x16x8xf32> to vector<16x8xf32>
    %168 = arith.truncf %167 : vector<16x8xf32> to vector<16x8xbf16>
    %169 = arith.truncf %165 : vector<8x648xf32> to vector<8x648xbf16>
    %cst_127 = arith.constant dense<0.000000e+00> : vector<16x648xf32>
    %170 = tpu.matmul %168, %169, %cst_127 {dimension_numbers = #tpu.dot_dimension_numbers<[1], [0], [0], [1], [0, 0, 1, 1], [], []>} : vector<16x8xbf16>, vector<8x648xbf16>, vector<16x648xf32> -> vector<16x648xf32>
    %171 = arith.addf %164, %170 : vector<16x648xf32>
    %c0_128 = arith.constant 0 : index
    %c127_129 = arith.constant 127 : index
    %172 = vector.load %arg13[%c0_128, %c127_129] : memref<8x896xf32, #tpu.memory_space<vmem>>, vector<8x648xf32>
    %c3_130 = arith.constant 3 : index
    %c0_131 = arith.constant 0 : index
    %c0_132 = arith.constant 0 : index
    %173 = vector.load %arg6[%c3_130, %c0_131, %c0_132] : memref<9x16x8xf32, #tpu.memory_space<vmem>>, vector<1x16x8xf32>
    %174 = vector.shape_cast %173 : vector<1x16x8xf32> to vector<16x8xf32>
    %175 = arith.truncf %174 : vector<16x8xf32> to vector<16x8xbf16>
    %176 = arith.truncf %172 : vector<8x648xf32> to vector<8x648xbf16>
    %cst_133 = arith.constant dense<0.000000e+00> : vector<16x648xf32>
    %177 = tpu.matmul %175, %176, %cst_133 {dimension_numbers = #tpu.dot_dimension_numbers<[1], [0], [0], [1], [0, 0, 1, 1], [], []>} : vector<16x8xbf16>, vector<8x648xbf16>, vector<16x648xf32> -> vector<16x648xf32>
    %178 = arith.addf %171, %177 : vector<16x648xf32>
    %c0_134 = arith.constant 0 : index
    %c128_135 = arith.constant 128 : index
    %179 = vector.load %arg13[%c0_134, %c128_135] : memref<8x896xf32, #tpu.memory_space<vmem>>, vector<8x648xf32>
    %c4_136 = arith.constant 4 : index
    %c0_137 = arith.constant 0 : index
    %c0_138 = arith.constant 0 : index
    %180 = vector.load %arg6[%c4_136, %c0_137, %c0_138] : memref<9x16x8xf32, #tpu.memory_space<vmem>>, vector<1x16x8xf32>
    %181 = vector.shape_cast %180 : vector<1x16x8xf32> to vector<16x8xf32>
    %182 = arith.truncf %181 : vector<16x8xf32> to vector<16x8xbf16>
    %183 = arith.truncf %179 : vector<8x648xf32> to vector<8x648xbf16>
    %cst_139 = arith.constant dense<0.000000e+00> : vector<16x648xf32>
    %184 = tpu.matmul %182, %183, %cst_139 {dimension_numbers = #tpu.dot_dimension_numbers<[1], [0], [0], [1], [0, 0, 1, 1], [], []>} : vector<16x8xbf16>, vector<8x648xbf16>, vector<16x648xf32> -> vector<16x648xf32>
    %185 = arith.addf %178, %184 : vector<16x648xf32>
    %c0_140 = arith.constant 0 : index
    %c129_141 = arith.constant 129 : index
    %186 = vector.load %arg13[%c0_140, %c129_141] : memref<8x896xf32, #tpu.memory_space<vmem>>, vector<8x648xf32>
    %c5_142 = arith.constant 5 : index
    %c0_143 = arith.constant 0 : index
    %c0_144 = arith.constant 0 : index
    %187 = vector.load %arg6[%c5_142, %c0_143, %c0_144] : memref<9x16x8xf32, #tpu.memory_space<vmem>>, vector<1x16x8xf32>
    %188 = vector.shape_cast %187 : vector<1x16x8xf32> to vector<16x8xf32>
    %189 = arith.truncf %188 : vector<16x8xf32> to vector<16x8xbf16>
    %190 = arith.truncf %186 : vector<8x648xf32> to vector<8x648xbf16>
    %cst_145 = arith.constant dense<0.000000e+00> : vector<16x648xf32>
    %191 = tpu.matmul %189, %190, %cst_145 {dimension_numbers = #tpu.dot_dimension_numbers<[1], [0], [0], [1], [0, 0, 1, 1], [], []>} : vector<16x8xbf16>, vector<8x648xbf16>, vector<16x648xf32> -> vector<16x648xf32>
    %192 = arith.addf %185, %191 : vector<16x648xf32>
    %c0_146 = arith.constant 0 : index
    %c145_147 = arith.constant 145 : index
    %193 = vector.load %arg13[%c0_146, %c145_147] : memref<8x896xf32, #tpu.memory_space<vmem>>, vector<8x648xf32>
    %c6_148 = arith.constant 6 : index
    %c0_149 = arith.constant 0 : index
    %c0_150 = arith.constant 0 : index
    %194 = vector.load %arg6[%c6_148, %c0_149, %c0_150] : memref<9x16x8xf32, #tpu.memory_space<vmem>>, vector<1x16x8xf32>
    %195 = vector.shape_cast %194 : vector<1x16x8xf32> to vector<16x8xf32>
    %196 = arith.truncf %195 : vector<16x8xf32> to vector<16x8xbf16>
    %197 = arith.truncf %193 : vector<8x648xf32> to vector<8x648xbf16>
    %cst_151 = arith.constant dense<0.000000e+00> : vector<16x648xf32>
    %198 = tpu.matmul %196, %197, %cst_151 {dimension_numbers = #tpu.dot_dimension_numbers<[1], [0], [0], [1], [0, 0, 1, 1], [], []>} : vector<16x8xbf16>, vector<8x648xbf16>, vector<16x648xf32> -> vector<16x648xf32>
    %199 = arith.addf %192, %198 : vector<16x648xf32>
    %c0_152 = arith.constant 0 : index
    %c146_153 = arith.constant 146 : index
    %200 = vector.load %arg13[%c0_152, %c146_153] : memref<8x896xf32, #tpu.memory_space<vmem>>, vector<8x648xf32>
    %c7_154 = arith.constant 7 : index
    %c0_155 = arith.constant 0 : index
    %c0_156 = arith.constant 0 : index
    %201 = vector.load %arg6[%c7_154, %c0_155, %c0_156] : memref<9x16x8xf32, #tpu.memory_space<vmem>>, vector<1x16x8xf32>
    %202 = vector.shape_cast %201 : vector<1x16x8xf32> to vector<16x8xf32>
    %203 = arith.truncf %202 : vector<16x8xf32> to vector<16x8xbf16>
    %204 = arith.truncf %200 : vector<8x648xf32> to vector<8x648xbf16>
    %cst_157 = arith.constant dense<0.000000e+00> : vector<16x648xf32>
    %205 = tpu.matmul %203, %204, %cst_157 {dimension_numbers = #tpu.dot_dimension_numbers<[1], [0], [0], [1], [0, 0, 1, 1], [], []>} : vector<16x8xbf16>, vector<8x648xbf16>, vector<16x648xf32> -> vector<16x648xf32>
    %206 = arith.addf %199, %205 : vector<16x648xf32>
    %c0_158 = arith.constant 0 : index
    %c147_159 = arith.constant 147 : index
    %207 = vector.load %arg13[%c0_158, %c147_159] : memref<8x896xf32, #tpu.memory_space<vmem>>, vector<8x648xf32>
    %c8_160 = arith.constant 8 : index
    %c0_161 = arith.constant 0 : index
    %c0_162 = arith.constant 0 : index
    %208 = vector.load %arg6[%c8_160, %c0_161, %c0_162] : memref<9x16x8xf32, #tpu.memory_space<vmem>>, vector<1x16x8xf32>
    %209 = vector.shape_cast %208 : vector<1x16x8xf32> to vector<16x8xf32>
    %210 = arith.truncf %209 : vector<16x8xf32> to vector<16x8xbf16>
    %211 = arith.truncf %207 : vector<8x648xf32> to vector<8x648xbf16>
    %cst_163 = arith.constant dense<0.000000e+00> : vector<16x648xf32>
    %212 = tpu.matmul %210, %211, %cst_163 {dimension_numbers = #tpu.dot_dimension_numbers<[1], [0], [0], [1], [0, 0, 1, 1], [], []>} : vector<16x8xbf16>, vector<8x648xbf16>, vector<16x648xf32> -> vector<16x648xf32>
    %213 = arith.addf %206, %212 : vector<16x648xf32>
    %c0_164 = arith.constant 0 : index
    %c0_165 = arith.constant 0 : index
    %214 = vector.load %arg7[%c0_164, %c0_165] : memref<16x1xf32, #tpu.memory_space<vmem>>, vector<16x1xf32>
    %215 = vector.broadcast %214 : vector<16x1xf32> to vector<16x648xf32>
    %216 = arith.addf %213, %215 : vector<16x648xf32>
    %c0_166 = arith.constant 0 : index
    %c0_167 = arith.constant 0 : index
    %217 = vector.load %arg8[%c0_166, %c0_167] : memref<8x8xf32, #tpu.memory_space<vmem>>, vector<8x8xf32>
    %218 = arith.truncf %217 : vector<8x8xf32> to vector<8x8xbf16>
    %219 = arith.truncf %148 : vector<8x648xf32> to vector<8x648xbf16>
    %cst_168 = arith.constant dense<0.000000e+00> : vector<8x648xf32>
    %220 = tpu.matmul %218, %219, %cst_168 {dimension_numbers = #tpu.dot_dimension_numbers<[1], [0], [0], [1], [0, 0, 1, 1], [], []>} : vector<8x8xbf16>, vector<8x648xbf16>, vector<8x648xf32> -> vector<8x648xf32>
    %c0_169 = arith.constant 0 : index
    %c0_170 = arith.constant 0 : index
    %221 = vector.load %arg9[%c0_169, %c0_170] : memref<8x16xf32, #tpu.memory_space<vmem>>, vector<8x16xf32>
    %222 = arith.truncf %221 : vector<8x16xf32> to vector<8x16xbf16>
    %223 = arith.truncf %216 : vector<16x648xf32> to vector<16x648xbf16>
    %cst_171 = arith.constant dense<0.000000e+00> : vector<8x648xf32>
    %224 = tpu.matmul %222, %223, %cst_171 {dimension_numbers = #tpu.dot_dimension_numbers<[1], [0], [0], [1], [0, 0, 1, 1], [], []>} : vector<8x16xbf16>, vector<16x648xbf16>, vector<8x648xf32> -> vector<8x648xf32>
    %225 = arith.addf %220, %224 : vector<8x648xf32>
    %c0_172 = arith.constant 0 : index
    %c0_173 = arith.constant 0 : index
    %226 = vector.load %arg10[%c0_172, %c0_173] : memref<8x1xf32, #tpu.memory_space<vmem>>, vector<8x1xf32>
    %227 = vector.broadcast %226 : vector<8x1xf32> to vector<8x648xf32>
    %228 = arith.addf %225, %227 : vector<8x648xf32>
    %cst_174 = arith.constant 0.000000e+00 : f32
    %229 = vector.broadcast %cst_174 : f32 to vector<8x768xf32>
    %c0_175 = arith.constant 0 : index
    %c0_176 = arith.constant 0 : index
    %230 = vector.load %arg11[%c0_175, %c0_176] : memref<8x768xf32, #tpu.memory_space<vmem>>, vector<8x768xf32>
    tpu.vector_store %arg11[%c0_175, %c0_176], %229 {strides = array<i32>} : memref<8x768xf32, #tpu.memory_space<vmem>>, vector<8x768xf32>,
    %c0_177 = arith.constant 0 : index
    %c0_178 = arith.constant 0 : index
    %231 = vector.load %arg11[%c0_177, %c0_178] : memref<8x768xf32, #tpu.memory_space<vmem>>, vector<8x648xf32>
    tpu.vector_store %arg11[%c0_177, %c0_178], %228 {strides = array<i32>} : memref<8x768xf32, #tpu.memory_space<vmem>>, vector<8x648xf32>,
    return
  }
}

</mosaic_0001>

<llo_original>
// kernel: fused_standard_model_forward.1
$region0: #{fused_standard_model_forward.1}
  #allocation0 [shape = 'u32[]', space=smem, size = 0x4, offset = 0x4, fixed_abs, tag = 'smem constant byte address 0x4 - core index']
  #allocation1 [shape = 'u32[144,128]{1,0:T(1,128)}', space=vmem, size = 0x12000, scoped, tag = 'internal scratch']
  #allocation2 [shape = 'f32[8,896]{1,0:T(8,128)}', space=vmem, size = 0x7000, scoped, tag = 'scratch operand']
  #allocation3 [shape = 'f32[8,896]{1,0:T(8,128)}', space=vmem, size = 0x7000, scoped, tag = 'scratch operand']
  %s0 = inlined_call_operand.vmem [shape: f32[4,896], index: 0, kind: input, shape index: {}]
  %s1 = inlined_call_operand.vmem [shape: f32[1,648], index: 1, kind: input, shape index: {}]
  %s2 = inlined_call_operand.vmem [shape: f32[9,8,4], index: 2, kind: input, shape index: {}]
  %s3 = inlined_call_operand.vmem [shape: f32[8,1], index: 3, kind: input, shape index: {}]
  %s4 = inlined_call_operand.vmem [shape: f32[9,8,8], index: 4, kind: input, shape index: {}]
  %s5 = inlined_call_operand.vmem [shape: f32[8,1], index: 5, kind: input, shape index: {}]
  %s6 = inlined_call_operand.vmem [shape: f32[9,16,8], index: 6, kind: input, shape index: {}]
  %s7 = inlined_call_operand.vmem [shape: f32[16,1], index: 7, kind: input, shape index: {}]
  %s8 = inlined_call_operand.vmem [shape: f32[8,8], index: 8, kind: input, shape index: {}]
  %s9 = inlined_call_operand.vmem [shape: f32[8,16], index: 9, kind: input, shape index: {}]
  %s10 = inlined_call_operand.vmem [shape: f32[8,1], index: 10, kind: input, shape index: {}]
  %s11 = inlined_call_operand.vmem [shape: f32[8,768], index: 11, kind: output, shape index: {}]
  %s12 = sld [smem:[#allocation0]]
  $region54: #{fused_standard_model_forward.1} parent=0
    _
  %s14 = ssub.s32 1, %s12
  %s15 = scalar_select 0, %s14, %s12
  // Predicated region
  $region2: #{fused_standard_model_forward.1} parent=0 // pred_check
    _
  $region3: #{fused_standard_model_forward.1} parent=0 // pred_check_branch
    %17 = sbr.rel (0) target = $region5
  $region4: #{fused_standard_model_forward.1} parent=0 // pred_region
    _
  $region5: #{fused_standard_model_forward.1} parent=0 // pred_fallthru
    _
  // Predicated region
  $region6: #{fused_standard_model_forward.1} parent=0 // pred_check
    _
  $region7: #{fused_standard_model_forward.1} parent=0 // pred_check_branch
    %19 = sbr.rel (0) target = $region9
  $region8: #{fused_standard_model_forward.1} parent=0 // pred_region
    _
  $region9: #{fused_standard_model_forward.1} parent=0 // pred_fallthru
    _
  // Predicated region
  $region10: #{fused_standard_model_forward.1} parent=0 // pred_check
    _
  $region11: #{fused_standard_model_forward.1} parent=0 // pred_check_branch
    %21 = sbr.rel (0) target = $region13
  $region12: #{fused_standard_model_forward.1} parent=0 // pred_region
    _
  $region13: #{fused_standard_model_forward.1} parent=0 // pred_fallthru
    _
  // Predicated region
  $region14: #{fused_standard_model_forward.1} parent=0 // pred_check
    _
  $region15: #{fused_standard_model_forward.1} parent=0 // pred_check_branch
    %23 = sbr.rel (0) target = $region17
  $region16: #{fused_standard_model_forward.1} parent=0 // pred_region
    _
  $region17: #{fused_standard_model_forward.1} parent=0 // pred_fallthru
    _
  // Predicated region
  $region18: #{fused_standard_model_forward.1} parent=0 // pred_check
    _
  $region19: #{fused_standard_model_forward.1} parent=0 // pred_check_branch
    %25 = sbr.rel (0) target = $region21
  $region20: #{fused_standard_model_forward.1} parent=0 // pred_region
    _
  $region21: #{fused_standard_model_forward.1} parent=0 // pred_fallthru
    _
  // Predicated region
  $region22: #{fused_standard_model_forward.1} parent=0 // pred_check
    _
  $region23: #{fused_standard_model_forward.1} parent=0 // pred_check_branch
    %27 = sbr.rel (0) target = $region25
  $region24: #{fused_standard_model_forward.1} parent=0 // pred_region
    _
  $region25: #{fused_standard_model_forward.1} parent=0 // pred_fallthru
    _
  // Predicated region
  $region26: #{fused_standard_model_forward.1} parent=0 // pred_check
    _
  $region27: #{fused_standard_model_forward.1} parent=0 // pred_check_branch
    %29 = sbr.rel (0) target = $region29
  $region28: #{fused_standard_model_forward.1} parent=0 // pred_region
    _
  $region29: #{fused_standard_model_forward.1} parent=0 // pred_fallthru
    _
  // Predicated region
  $region30: #{fused_standard_model_forward.1} parent=0 // pred_check
    _
  $region31: #{fused_standard_model_forward.1} parent=0 // pred_check_branch
    %31 = sbr.rel (0) target = $region33
  $region32: #{fused_standard_model_forward.1} parent=0 // pred_region
    _
  $region33: #{fused_standard_model_forward.1} parent=0 // pred_fallthru
    _
  // Predicated region
  $region34: #{fused_standard_model_forward.1} parent=0 // pred_check
    _
  $region35: #{fused_standard_model_forward.1} parent=0 // pred_check_branch
    %33 = sbr.rel (0) target = $region37
  $region36: #{fused_standard_model_forward.1} parent=0 // pred_region
    _
  $region37: #{fused_standard_model_forward.1} parent=0 // pred_fallthru
    _
  // Predicated region
  $region38: #{fused_standard_model_forward.1} parent=0 // pred_check
    _
  $region39: #{fused_standard_model_forward.1} parent=0 // pred_check_branch
    %35 = sbr.rel (0) target = $region41
  $region40: #{fused_standard_model_forward.1} parent=0 // pred_region
    _
  $region41: #{fused_standard_model_forward.1} parent=0 // pred_fallthru
    _
  // Predicated region
  $region42: #{fused_standard_model_forward.1} parent=0 // pred_check
    _
  $region43: #{fused_standard_model_forward.1} parent=0 // pred_check_branch
    %37 = sbr.rel (0) target = $region45
  $region44: #{fused_standard_model_forward.1} parent=0 // pred_region
    _
  $region45: #{fused_standard_model_forward.1} parent=0 // pred_fallthru
    _
  %39 = vst [vmem:[#allocation2] sm:$0xff] 0.0
  %40 = vst [vmem:[#allocation2 + $0x8] sm:$0xff] 0.0
  %41 = vst [vmem:[#allocation2 + $0x10] sm:$0xff] 0.0
  %42 = vst [vmem:[#allocation2 + $0x18] sm:$0xff] 0.0
  %43 = vst [vmem:[#allocation2 + $0x20] sm:$0xff] 0.0
  %44 = vst [vmem:[#allocation2 + $0x28] sm:$0xff] 0.0
  %45 = vst [vmem:[#allocation2 + $0x30] sm:$0xff] 0.0
  %46 = vst [vmem:[#allocation3] sm:$0xff] 0.0
  %47 = vst [vmem:[#allocation3 + $0x8] sm:$0xff] 0.0
  %48 = vst [vmem:[#allocation3 + $0x10] sm:$0xff] 0.0
  %49 = vst [vmem:[#allocation3 + $0x18] sm:$0xff] 0.0
  %50 = vst [vmem:[#allocation3 + $0x20] sm:$0xff] 0.0
  %51 = vst [vmem:[#allocation3 + $0x28] sm:$0xff] 0.0
  %52 = vst [vmem:[#allocation3 + $0x30] sm:$0xff] 0.0
  %v53 = vld [vmem:[%s1] sm:$0x3f]
  %v54 = vld [vmem:[%s0] sm:$0xff]
  %v55 = vld [vmem:[%s0 + $0x8] sm:$0xff]
  %v56 = vld [vmem:[%s0 + $0x10] sm:$0xff]
  %v57 = vld [vmem:[%s2] sm:$0xff]
  %v58 = vpack.c.bf16 %v57, %v57
  %v62 = vcombine.high %v54, %v54
  %v63 = vcombine.high %v55, %v55
  %v64 = vcombine.high %v56, %v56
  %v68 = vpack.c.bf16 %v54, %v54
  %v69 = vpack.c.bf16 %v62, %v62
  %v70 = vpack.c.bf16 %v55, %v55
  %v71 = vpack.c.bf16 %v63, %v63
  %v72 = vpack.c.bf16 %v56, %v56
  %v73 = vpack.c.bf16 %v64, %v64
  %s74 = scalar_lea.vmem %s2, 8
  %v75 = vld [vmem:[%s74] sm:$0xff]
  %v76 = vpack.c.bf16 %v75, %v75
  %83 = vrot.lane.b32.xlu0 %v68, 18
  %v84 = vpop.permute.xlu0 %83
  %85 = vrot.lane.b32.xlu0 %v69, 18
  %v86 = vpop.permute.xlu0 %85
  %87 = vrot.lane.b32.xlu0 %v70, 18
  %v88 = vpop.permute.xlu0 %87
  %89 = vrot.lane.b32.xlu0 %v71, 18
  %v90 = vpop.permute.xlu0 %89
  %91 = vrot.lane.b32.xlu0 %v72, 18
  %v92 = vpop.permute.xlu0 %91
  %93 = vrot.lane.b32.xlu0 %v73, 18
  %v94 = vpop.permute.xlu0 %93
  %vm95 = vcmask 146432
  %v96 = vsel %vm95, %v84, %v86
  %v97 = vsel %vm95, %v86, %v88
  %v98 = vsel %vm95, %v88, %v90
  %v99 = vsel %vm95, %v90, %v92
  %v100 = vsel %vm95, %v92, %v94
  %vm101 = vcmask 31744
  %v103 = vsel %vm101, %v76, 0
  %vm105 = vcmask 1041408
  %v107 = vsel %vm105, %v96, 0
  %v110 = vsel %vm105, %v97, 0
  %v113 = vsel %vm105, %v98, 0
  %v116 = vsel %vm105, %v99, 0
  %v119 = vsel %vm105, %v100, 0
  %v122 = vsel %vm105, %v94, 0
  %124 = vmatprep.subr.bf16.mxu0 %v110
  %125 = vmatpush1.bf16.msra.mxu0 %v107
  %126 = vmatprep.subr.bf16.mxu0 0
  %127 = vmatpush1.bf16.msra.mxu0 0
  %128 = vmatprep.subr.bf16.mxu0 0
  %129 = vmatpush1.bf16.msra.mxu0 0
  %130 = vmatprep.subr.bf16.mxu0 0
  %131 = vmatpush1.bf16.msra.mxu0 0
  %132 = vmatprep.subr.bf16.mxu0 0
  %133 = vmatpush1.bf16.msra.mxu0 0
  %134 = vmatprep.subr.bf16.mxu0 0
  %135 = vmatpush1.bf16.msra.mxu0 0
  %136 = vmatprep.subr.bf16.mxu0 0
  %137 = vmatpush1.bf16.msra.mxu0 0
  %138 = vmatprep.subr.bf16.mxu0 0
  %139 = vmatpush1.bf16.msra.mxu0 0
  %140 = vmatprep.subr.bf16.mxu0 0
  %141 = vmatpush1.bf16.msra.mxu0 0
  %142 = vmatprep.subr.bf16.mxu0 0
  %143 = vmatpush1.bf16.msra.mxu0 0
  %144 = vmatprep.subr.bf16.mxu0 0
  %145 = vmatpush1.bf16.msra.mxu0 0
  %146 = vmatprep.subr.bf16.mxu0 0
  %147 = vmatpush1.bf16.msra.mxu0 0
  %148 = vmatprep.subr.bf16.mxu0 0
  %149 = vmatpush1.bf16.msra.mxu0 0
  %150 = vmatprep.subr.bf16.mxu0 0
  %151 = vmatpush1.bf16.msra.mxu0 0
  %152 = vmatprep.subr.bf16.mxu0 0
  %153 = vmatpush1.bf16.msra.mxu0 0
  %154 = vmatprep.subr.bf16.mxu0 0
  %155 = vmatpush1.bf16.msra.mxu0 0
  %156 = vmatprep.mubr.bf16.mxu0 0
  %157 = vmatmul.mubr.bf16.gmra.mrb[0].mxu0 %v103
  %v158 = vpop.f32.mrb[0].mxu0
  %v159 = vadd.f32 0.0, %v158
  %v160 = vpop.f32.mrb[0].mxu0
  %v161 = vadd.f32 0.0, %v160
  %v162 = vpop.f32.mrb[0].mxu0
  %v163 = vpop.f32.mrb[0].mxu0
  %164 = vdwg.mxu0
  %165 = vmatprep.subr.bf16.mxu0 %v116
  %166 = vmatpush1.bf16.msra.mxu0 %v113
  %167 = vmatprep.subr.bf16.mxu0 0
  %168 = vmatpush1.bf16.msra.mxu0 0
  %169 = vmatprep.subr.bf16.mxu0 0
  %170 = vmatpush1.bf16.msra.mxu0 0
  %171 = vmatprep.subr.bf16.mxu0 0
  %172 = vmatpush1.bf16.msra.mxu0 0
  %173 = vmatprep.subr.bf16.mxu0 0
  %174 = vmatpush1.bf16.msra.mxu0 0
  %175 = vmatprep.subr.bf16.mxu0 0
  %176 = vmatpush1.bf16.msra.mxu0 0
  %177 = vmatprep.subr.bf16.mxu0 0
  %178 = vmatpush1.bf16.msra.mxu0 0
  %179 = vmatprep.subr.bf16.mxu0 0
  %180 = vmatpush1.bf16.msra.mxu0 0
  %181 = vmatprep.subr.bf16.mxu0 0
  %182 = vmatpush1.bf16.msra.mxu0 0
  %183 = vmatprep.subr.bf16.mxu0 0
  %184 = vmatpush1.bf16.msra.mxu0 0
  %185 = vmatprep.subr.bf16.mxu0 0
  %186 = vmatpush1.bf16.msra.mxu0 0
  %187 = vmatprep.subr.bf16.mxu0 0
  %188 = vmatpush1.bf16.msra.mxu0 0
  %189 = vmatprep.subr.bf16.mxu0 0
  %190 = vmatpush1.bf16.msra.mxu0 0
  %191 = vmatprep.subr.bf16.mxu0 0
  %192 = vmatpush1.bf16.msra.mxu0 0
  %193 = vmatprep.subr.bf16.mxu0 0
  %194 = vmatpush1.bf16.msra.mxu0 0
  %195 = vmatprep.subr.bf16.mxu0 0
  %196 = vmatpush1.bf16.msra.mxu0 0
  %197 = vmatprep.mubr.bf16.mxu0 0
  %198 = vmatmul.mubr.bf16.gmra.mrb[0].mxu0 %v103
  %v199 = vpop.f32.mrb[0].mxu0
  %v200 = vadd.f32 0.0, %v199
  %v201 = vpop.f32.mrb[0].mxu0
  %v202 = vadd.f32 0.0, %v201
  %v203 = vpop.f32.mrb[0].mxu0
  %v204 = vpop.f32.mrb[0].mxu0
  %205 = vdwg.mxu0
  %206 = vmatprep.subr.bf16.mxu0 %v122
  %207 = vmatpush1.bf16.msra.mxu0 %v119
  %208 = vmatprep.subr.bf16.mxu0 0
  %209 = vmatpush1.bf16.msra.mxu0 0
  %210 = vmatprep.subr.bf16.mxu0 0
  %211 = vmatpush1.bf16.msra.mxu0 0
  %212 = vmatprep.subr.bf16.mxu0 0
  %213 = vmatpush1.bf16.msra.mxu0 0
  %214 = vmatprep.subr.bf16.mxu0 0
  %215 = vmatpush1.bf16.msra.mxu0 0
  %216 = vmatprep.subr.bf16.mxu0 0
  %217 = vmatpush1.bf16.msra.mxu0 0
  %218 = vmatprep.subr.bf16.mxu0 0
  %219 = vmatpush1.bf16.msra.mxu0 0
  %220 = vmatprep.subr.bf16.mxu0 0
  %221 = vmatpush1.bf16.msra.mxu0 0
  %222 = vmatprep.subr.bf16.mxu0 0
  %223 = vmatpush1.bf16.msra.mxu0 0
  %224 = vmatprep.subr.bf16.mxu0 0
  %225 = vmatpush1.bf16.msra.mxu0 0
  %226 = vmatprep.subr.bf16.mxu0 0
  %227 = vmatpush1.bf16.msra.mxu0 0
  %228 = vmatprep.subr.bf16.mxu0 0
  %229 = vmatpush1.bf16.msra.mxu0 0
  %230 = vmatprep.subr.bf16.mxu0 0
  %231 = vmatpush1.bf16.msra.mxu0 0
  %232 = vmatprep.subr.bf16.mxu0 0
  %233 = vmatpush1.bf16.msra.mxu0 0
  %234 = vmatprep.subr.bf16.mxu0 0
  %235 = vmatpush1.bf16.msra.mxu0 0
  %236 = vmatprep.subr.bf16.mxu0 0
  %237 = vmatpush1.bf16.msra.mxu0 0
  %238 = vmatprep.mubr.bf16.mxu0 0
  %239 = vmatmul.mubr.bf16.gmra.mrb[0].mxu0 %v103
  %v240 = vpop.f32.mrb[0].mxu0
  %v241 = vadd.f32 0.0, %v240
  %v242 = vpop.f32.mrb[0].mxu0
  %v243 = vadd.f32 0.0, %v242
  %v244 = vpop.f32.mrb[0].mxu0
  %v245 = vpop.f32.mrb[0].mxu0
  %246 = vdwg.mxu0
  %247 = vrot.lane.b32.xlu0 %v68, 19
  %v248 = vpop.permute.xlu0 %247
  %249 = vrot.lane.b32.xlu0 %v69, 19
  %v250 = vpop.permute.xlu0 %249
  %251 = vrot.lane.b32.xlu0 %v70, 19
  %v252 = vpop.permute.xlu0 %251
  %253 = vrot.lane.b32.xlu0 %v71, 19
  %v254 = vpop.permute.xlu0 %253
  %255 = vrot.lane.b32.xlu0 %v72, 19
  %v256 = vpop.permute.xlu0 %255
  %257 = vrot.lane.b32.xlu0 %v73, 19
  %v258 = vpop.permute.xlu0 %257
  %vm259 = vcmask 154624
  %v260 = vsel %vm259, %v248, %v250
  %v261 = vsel %vm259, %v250, %v252
  %v262 = vsel %vm259, %v252, %v254
  %v263 = vsel %vm259, %v254, %v256
  %v264 = vsel %vm259, %v256, %v258
  %v266 = vsel %vm101, %v58, 0
  %v269 = vsel %vm105, %v260, 0
  %v272 = vsel %vm105, %v261, 0
  %v275 = vsel %vm105, %v262, 0
  %v278 = vsel %vm105, %v263, 0
  %v281 = vsel %vm105, %v264, 0
  %v284 = vsel %vm105, %v258, 0
  %286 = vmatprep.subr.bf16.mxu0 %v272
  %287 = vmatpush1.bf16.msra.mxu0 %v269
  %288 = vmatprep.subr.bf16.mxu0 0
  %289 = vmatpush1.bf16.msra.mxu0 0
  %290 = vmatprep.subr.bf16.mxu0 0
  %291 = vmatpush1.bf16.msra.mxu0 0
  %292 = vmatprep.subr.bf16.mxu0 0
  %293 = vmatpush1.bf16.msra.mxu0 0
  %294 = vmatprep.subr.bf16.mxu0 0
  %295 = vmatpush1.bf16.msra.mxu0 0
  %296 = vmatprep.subr.bf16.mxu0 0
  %297 = vmatpush1.bf16.msra.mxu0 0
  %298 = vmatprep.subr.bf16.mxu0 0
  %299 = vmatpush1.bf16.msra.mxu0 0
  %300 = vmatprep.subr.bf16.mxu0 0
  %301 = vmatpush1.bf16.msra.mxu0 0
  %302 = vmatprep.subr.bf16.mxu0 0
  %303 = vmatpush1.bf16.msra.mxu0 0
  %304 = vmatprep.subr.bf16.mxu0 0
  %305 = vmatpush1.bf16.msra.mxu0 0
  %306 = vmatprep.subr.bf16.mxu0 0
  %307 = vmatpush1.bf16.msra.mxu0 0
  %308 = vmatprep.subr.bf16.mxu0 0
  %309 = vmatpush1.bf16.msra.mxu0 0
  %310 = vmatprep.subr.bf16.mxu0 0
  %311 = vmatpush1.bf16.msra.mxu0 0
  %312 = vmatprep.subr.bf16.mxu0 0
  %313 = vmatpush1.bf16.msra.mxu0 0
  %314 = vmatprep.subr.bf16.mxu0 0
  %315 = vmatpush1.bf16.msra.mxu0 0
  %316 = vmatprep.subr.bf16.mxu0 0
  %317 = vmatpush1.bf16.msra.mxu0 0
  %318 = vmatprep.mubr.bf16.mxu0 0
  %319 = vmatmul.mubr.bf16.gmra.mrb[0].mxu0 %v266
  %v320 = vpop.f32.mrb[0].mxu0
  %v321 = vadd.f32 %v159, %v320
  %v322 = vpop.f32.mrb[0].mxu0
  %v323 = vadd.f32 %v161, %v322
  %v324 = vpop.f32.mrb[0].mxu0
  %v325 = vpop.f32.mrb[0].mxu0
  %326 = vdwg.mxu0
  %327 = vmatprep.subr.bf16.mxu0 %v278
  %328 = vmatpush1.bf16.msra.mxu0 %v275
  %329 = vmatprep.subr.bf16.mxu0 0
  %330 = vmatpush1.bf16.msra.mxu0 0
  %331 = vmatprep.subr.bf16.mxu0 0
  %332 = vmatpush1.bf16.msra.mxu0 0
  %333 = vmatprep.subr.bf16.mxu0 0
  %334 = vmatpush1.bf16.msra.mxu0 0
  %335 = vmatprep.subr.bf16.mxu0 0
  %336 = vmatpush1.bf16.msra.mxu0 0
  %337 = vmatprep.subr.bf16.mxu0 0
  %338 = vmatpush1.bf16.msra.mxu0 0
  %339 = vmatprep.subr.bf16.mxu0 0
  %340 = vmatpush1.bf16.msra.mxu0 0
  %341 = vmatprep.subr.bf16.mxu0 0
  %342 = vmatpush1.bf16.msra.mxu0 0
  %343 = vmatprep.subr.bf16.mxu0 0
  %344 = vmatpush1.bf16.msra.mxu0 0
  %345 = vmatprep.subr.bf16.mxu0 0
  %346 = vmatpush1.bf16.msra.mxu0 0
  %347 = vmatprep.subr.bf16.mxu0 0
  %348 = vmatpush1.bf16.msra.mxu0 0
  %349 = vmatprep.subr.bf16.mxu0 0
  %350 = vmatpush1.bf16.msra.mxu0 0
  %351 = vmatprep.subr.bf16.mxu0 0
  %352 = vmatpush1.bf16.msra.mxu0 0
  %353 = vmatprep.subr.bf16.mxu0 0
  %354 = vmatpush1.bf16.msra.mxu0 0
  %355 = vmatprep.subr.bf16.mxu0 0
  %356 = vmatpush1.bf16.msra.mxu0 0
  %357 = vmatprep.subr.bf16.mxu0 0
  %358 = vmatpush1.bf16.msra.mxu0 0
  %359 = vmatprep.mubr.bf16.mxu0 0
  %360 = vmatmul.mubr.bf16.gmra.mrb[0].mxu0 %v266
  %v361 = vpop.f32.mrb[0].mxu0
  %v362 = vadd.f32 %v200, %v361
  %v363 = vpop.f32.mrb[0].mxu0
  %v364 = vadd.f32 %v202, %v363
  %v365 = vpop.f32.mrb[0].mxu0
  %v366 = vpop.f32.mrb[0].mxu0
  %367 = vdwg.mxu0
  %368 = vmatprep.subr.bf16.mxu0 %v284
  %369 = vmatpush1.bf16.msra.mxu0 %v281
  %370 = vmatprep.subr.bf16.mxu0 0
  %371 = vmatpush1.bf16.msra.mxu0 0
  %372 = vmatprep.subr.bf16.mxu0 0
  %373 = vmatpush1.bf16.msra.mxu0 0
  %374 = vmatprep.subr.bf16.mxu0 0
  %375 = vmatpush1.bf16.msra.mxu0 0
  %376 = vmatprep.subr.bf16.mxu0 0
  %377 = vmatpush1.bf16.msra.mxu0 0
  %378 = vmatprep.subr.bf16.mxu0 0
  %379 = vmatpush1.bf16.msra.mxu0 0
  %380 = vmatprep.subr.bf16.mxu0 0
  %381 = vmatpush1.bf16.msra.mxu0 0
  %382 = vmatprep.subr.bf16.mxu0 0
  %383 = vmatpush1.bf16.msra.mxu0 0
  %384 = vmatprep.subr.bf16.mxu0 0
  %385 = vmatpush1.bf16.msra.mxu0 0
  %386 = vmatprep.subr.bf16.mxu0 0
  %387 = vmatpush1.bf16.msra.mxu0 0
  %388 = vmatprep.subr.bf16.mxu0 0
  %389 = vmatpush1.bf16.msra.mxu0 0
  %390 = vmatprep.subr.bf16.mxu0 0
  %391 = vmatpush1.bf16.msra.mxu0 0
  %392 = vmatprep.subr.bf16.mxu0 0
  %393 = vmatpush1.bf16.msra.mxu0 0
  %394 = vmatprep.subr.bf16.mxu0 0
  %395 = vmatpush1.bf16.msra.mxu0 0
  %396 = vmatprep.subr.bf16.mxu0 0
  %397 = vmatpush1.bf16.msra.mxu0 0
  %398 = vmatprep.subr.bf16.mxu0 0
  %399 = vmatpush1.bf16.msra.mxu0 0
  %400 = vmatprep.mubr.bf16.mxu0 0
  %401 = vmatmul.mubr.bf16.gmra.mrb[0].mxu0 %v266
  %v402 = vpop.f32.mrb[0].mxu0
  %v403 = vadd.f32 %v241, %v402
  %v404 = vpop.f32.mrb[0].mxu0
  %v405 = vadd.f32 %v243, %v404
  %v406 = vpop.f32.mrb[0].mxu0
  %v407 = vpop.f32.mrb[0].mxu0
  %408 = vdwg.mxu0
  %v409 = vld [vmem:[%s0] sm:$0xff]
  %v410 = vld [vmem:[%s0 + $0x8] sm:$0xff]
  %v411 = vld [vmem:[%s0 + $0x10] sm:$0xff]
  %s412 = scalar_lea.vmem %s2, 16
  %v413 = vld [vmem:[%s412] sm:$0xff]
  %v414 = vpack.c.bf16 %v413, %v413
  %v418 = vcombine.high %v409, %v409
  %v419 = vcombine.high %v410, %v410
  %v420 = vcombine.high %v411, %v411
  %v424 = vpack.c.bf16 %v409, %v409
  %v425 = vpack.c.bf16 %v418, %v418
  %v426 = vpack.c.bf16 %v410, %v410
  %v427 = vpack.c.bf16 %v419, %v419
  %v428 = vpack.c.bf16 %v411, %v411
  %v429 = vpack.c.bf16 %v420, %v420
  %436 = vrot.lane.b32.xlu0 %v424, 17
  %v437 = vpop.permute.xlu0 %436
  %438 = vrot.lane.b32.xlu0 %v425, 17
  %v439 = vpop.permute.xlu0 %438
  %440 = vrot.lane.b32.xlu0 %v426, 17
  %v441 = vpop.permute.xlu0 %440
  %442 = vrot.lane.b32.xlu0 %v427, 17
  %v443 = vpop.permute.xlu0 %442
  %444 = vrot.lane.b32.xlu0 %v428, 17
  %v445 = vpop.permute.xlu0 %444
  %446 = vrot.lane.b32.xlu0 %v429, 17
  %v447 = vpop.permute.xlu0 %446
  %vm448 = vcmask 138240
  %v449 = vsel %vm448, %v437, %v439
  %v450 = vsel %vm448, %v439, %v441
  %v451 = vsel %vm448, %v441, %v443
  %v452 = vsel %vm448, %v443, %v445
  %v453 = vsel %vm448, %v445, %v447
  %v455 = vsel %vm101, %v414, 0
  %v458 = vsel %vm105, %v449, 0
  %v461 = vsel %vm105, %v450, 0
  %v464 = vsel %vm105, %v451, 0
  %v467 = vsel %vm105, %v452, 0
  %v470 = vsel %vm105, %v453, 0
  %v473 = vsel %vm105, %v447, 0
  %475 = vmatprep.subr.bf16.mxu0 %v461
  %476 = vmatpush1.bf16.msra.mxu0 %v458
  %477 = vmatprep.subr.bf16.mxu0 0
  %478 = vmatpush1.bf16.msra.mxu0 0
  %479 = vmatprep.subr.bf16.mxu0 0
  %480 = vmatpush1.bf16.msra.mxu0 0
  %481 = vmatprep.subr.bf16.mxu0 0
  %482 = vmatpush1.bf16.msra.mxu0 0
  %483 = vmatprep.subr.bf16.mxu0 0
  %484 = vmatpush1.bf16.msra.mxu0 0
  %485 = vmatprep.subr.bf16.mxu0 0
  %486 = vmatpush1.bf16.msra.mxu0 0
  %487 = vmatprep.subr.bf16.mxu0 0
  %488 = vmatpush1.bf16.msra.mxu0 0
  %489 = vmatprep.subr.bf16.mxu0 0
  %490 = vmatpush1.bf16.msra.mxu0 0
  %491 = vmatprep.subr.bf16.mxu0 0
  %492 = vmatpush1.bf16.msra.mxu0 0
  %493 = vmatprep.subr.bf16.mxu0 0
  %494 = vmatpush1.bf16.msra.mxu0 0
  %495 = vmatprep.subr.bf16.mxu0 0
  %496 = vmatpush1.bf16.msra.mxu0 0
  %497 = vmatprep.subr.bf16.mxu0 0
  %498 = vmatpush1.bf16.msra.mxu0 0
  %499 = vmatprep.subr.bf16.mxu0 0
  %500 = vmatpush1.bf16.msra.mxu0 0
  %501 = vmatprep.subr.bf16.mxu0 0
  %502 = vmatpush1.bf16.msra.mxu0 0
  %503 = vmatprep.subr.bf16.mxu0 0
  %504 = vmatpush1.bf16.msra.mxu0 0
  %505 = vmatprep.subr.bf16.mxu0 0
  %506 = vmatpush1.bf16.msra.mxu0 0
  %507 = vmatprep.mubr.bf16.mxu0 0
  %508 = vmatmul.mubr.bf16.gmra.mrb[0].mxu0 %v455
  %v509 = vpop.f32.mrb[0].mxu0
  %v510 = vadd.f32 0.0, %v509
  %v511 = vpop.f32.mrb[0].mxu0
  %v512 = vadd.f32 0.0, %v511
  %v513 = vpop.f32.mrb[0].mxu0
  %v514 = vpop.f32.mrb[0].mxu0
  %515 = vdwg.mxu0
  %516 = vmatprep.subr.bf16.mxu0 %v467
  %517 = vmatpush1.bf16.msra.mxu0 %v464
  %518 = vmatprep.subr.bf16.mxu0 0
  %519 = vmatpush1.bf16.msra.mxu0 0
  %520 = vmatprep.subr.bf16.mxu0 0
  %521 = vmatpush1.bf16.msra.mxu0 0
  %522 = vmatprep.subr.bf16.mxu0 0
  %523 = vmatpush1.bf16.msra.mxu0 0
  %524 = vmatprep.subr.bf16.mxu0 0
  %525 = vmatpush1.bf16.msra.mxu0 0
  %526 = vmatprep.subr.bf16.mxu0 0
  %527 = vmatpush1.bf16.msra.mxu0 0
  %528 = vmatprep.subr.bf16.mxu0 0
  %529 = vmatpush1.bf16.msra.mxu0 0
  %530 = vmatprep.subr.bf16.mxu0 0
  %531 = vmatpush1.bf16.msra.mxu0 0
  %532 = vmatprep.subr.bf16.mxu0 0
  %533 = vmatpush1.bf16.msra.mxu0 0
  %534 = vmatprep.subr.bf16.mxu0 0
  %535 = vmatpush1.bf16.msra.mxu0 0
  %536 = vmatprep.subr.bf16.mxu0 0
  %537 = vmatpush1.bf16.msra.mxu0 0
  %538 = vmatprep.subr.bf16.mxu0 0
  %539 = vmatpush1.bf16.msra.mxu0 0
  %540 = vmatprep.subr.bf16.mxu0 0
  %541 = vmatpush1.bf16.msra.mxu0 0
  %542 = vmatprep.subr.bf16.mxu0 0
  %543 = vmatpush1.bf16.msra.mxu0 0
  %544 = vmatprep.subr.bf16.mxu0 0
  %545 = vmatpush1.bf16.msra.mxu0 0
  %546 = vmatprep.subr.bf16.mxu0 0
  %547 = vmatpush1.bf16.msra.mxu0 0
  %548 = vmatprep.mubr.bf16.mxu0 0
  %549 = vmatmul.mubr.bf16.gmra.mrb[0].mxu0 %v455
  %v550 = vpop.f32.mrb[0].mxu0
  %v551 = vadd.f32 0.0, %v550
  %v552 = vpop.f32.mrb[0].mxu0
  %v553 = vadd.f32 0.0, %v552
  %v554 = vpop.f32.mrb[0].mxu0
  %v555 = vpop.f32.mrb[0].mxu0
  %556 = vdwg.mxu0
  %557 = vmatprep.subr.bf16.mxu0 %v473
  %558 = vmatpush1.bf16.msra.mxu0 %v470
  %559 = vmatprep.subr.bf16.mxu0 0
  %560 = vmatpush1.bf16.msra.mxu0 0
  %561 = vmatprep.subr.bf16.mxu0 0
  %562 = vmatpush1.bf16.msra.mxu0 0
  %563 = vmatprep.subr.bf16.mxu0 0
  %564 = vmatpush1.bf16.msra.mxu0 0
  %565 = vmatprep.subr.bf16.mxu0 0
  %566 = vmatpush1.bf16.msra.mxu0 0
  %567 = vmatprep.subr.bf16.mxu0 0
  %568 = vmatpush1.bf16.msra.mxu0 0
  %569 = vmatprep.subr.bf16.mxu0 0
  %570 = vmatpush1.bf16.msra.mxu0 0
  %571 = vmatprep.subr.bf16.mxu0 0
  %572 = vmatpush1.bf16.msra.mxu0 0
  %573 = vmatprep.subr.bf16.mxu0 0
  %574 = vmatpush1.bf16.msra.mxu0 0
  %575 = vmatprep.subr.bf16.mxu0 0
  %576 = vmatpush1.bf16.msra.mxu0 0
  %577 = vmatprep.subr.bf16.mxu0 0
  %578 = vmatpush1.bf16.msra.mxu0 0
  %579 = vmatprep.subr.bf16.mxu0 0
  %580 = vmatpush1.bf16.msra.mxu0 0
  %581 = vmatprep.subr.bf16.mxu0 0
  %582 = vmatpush1.bf16.msra.mxu0 0
  %583 = vmatprep.subr.bf16.mxu0 0
  %584 = vmatpush1.bf16.msra.mxu0 0
  %585 = vmatprep.subr.bf16.mxu0 0
  %586 = vmatpush1.bf16.msra.mxu0 0
  %587 = vmatprep.subr.bf16.mxu0 0
  %588 = vmatpush1.bf16.msra.mxu0 0
  %589 = vmatprep.mubr.bf16.mxu0 0
  %590 = vmatmul.mubr.bf16.gmra.mrb[0].mxu0 %v455
  %v591 = vpop.f32.mrb[0].mxu0
  %v592 = vadd.f32 0.0, %v591
  %v593 = vpop.f32.mrb[0].mxu0
  %v594 = vadd.f32 0.0, %v593
  %v595 = vpop.f32.mrb[0].mxu0
  %v596 = vpop.f32.mrb[0].mxu0
  %597 = vdwg.mxu0
  %v598 = vadd.f32 %v321, %v510
  %v599 = vadd.f32 %v323, %v512
  %v600 = vadd.f32 %v362, %v551
  %v601 = vadd.f32 %v364, %v553
  %v602 = vadd.f32 %v403, %v592
  %v603 = vadd.f32 %v405, %v594
  %v604 = vld [vmem:[%s0] sm:$0xff]
  %v605 = vld [vmem:[%s0 + $0x8] sm:$0xff]
  %v606 = vld [vmem:[%s0 + $0x10] sm:$0xff]
  %v607 = vld [vmem:[%s0 + $0x18] sm:$0xf]
  %s608 = scalar_lea.vmem %s2, 24
  %v609 = vld [vmem:[%s608] sm:$0xff]
  %v610 = vpack.c.bf16 %v609, %v609
  %v614 = vcombine.high %v604, %v604
  %v615 = vcombine.high %v605, %v605
  %v616 = vcombine.high %v606, %v606
  %v620 = vpack.c.bf16 %v604, %v604
  %v621 = vpack.c.bf16 %v614, %v614
  %v622 = vpack.c.bf16 %v605, %v605
  %v623 = vpack.c.bf16 %v615, %v615
  %v624 = vpack.c.bf16 %v606, %v606
  %v625 = vpack.c.bf16 %v616, %v616
  %v626 = vpack.c.bf16 %v607, %v607
  %634 = vrot.lane.b32.xlu0 %v620, 1
  %v635 = vpop.permute.xlu0 %634
  %636 = vrot.lane.b32.xlu0 %v621, 1
  %v637 = vpop.permute.xlu0 %636
  %638 = vrot.lane.b32.xlu0 %v622, 1
  %v639 = vpop.permute.xlu0 %638
  %640 = vrot.lane.b32.xlu0 %v623, 1
  %v641 = vpop.permute.xlu0 %640
  %642 = vrot.lane.b32.xlu0 %v624, 1
  %v643 = vpop.permute.xlu0 %642
  %644 = vrot.lane.b32.xlu0 %v625, 1
  %v645 = vpop.permute.xlu0 %644
  %646 = vrot.lane.b32.xlu0 %v626, 1
  %v647 = vpop.permute.xlu0 %646
  %vm648 = vcmask 7168
  %v649 = vsel %vm648, %v635, %v637
  %v650 = vsel %vm648, %v637, %v639
  %v651 = vsel %vm648, %v639, %v641
  %v652 = vsel %vm648, %v641, %v643
  %v653 = vsel %vm648, %v643, %v645
  %v654 = vsel %vm648, %v645, %v647
  %v656 = vsel %vm101, %v610, 0
  %v659 = vsel %vm105, %v649, 0
  %v662 = vsel %vm105, %v650, 0
  %v665 = vsel %vm105, %v651, 0
  %v668 = vsel %vm105, %v652, 0
  %v671 = vsel %vm105, %v653, 0
  %v674 = vsel %vm105, %v654, 0
  %676 = vmatprep.subr.bf16.mxu0 %v662
  %677 = vmatpush1.bf16.msra.mxu0 %v659
  %678 = vmatprep.subr.bf16.mxu0 0
  %679 = vmatpush1.bf16.msra.mxu0 0
  %680 = vmatprep.subr.bf16.mxu0 0
  %681 = vmatpush1.bf16.msra.mxu0 0
  %682 = vmatprep.subr.bf16.mxu0 0
  %683 = vmatpush1.bf16.msra.mxu0 0
  %684 = vmatprep.subr.bf16.mxu0 0
  %685 = vmatpush1.bf16.msra.mxu0 0
  %686 = vmatprep.subr.bf16.mxu0 0
  %687 = vmatpush1.bf16.msra.mxu0 0
  %688 = vmatprep.subr.bf16.mxu0 0
  %689 = vmatpush1.bf16.msra.mxu0 0
  %690 = vmatprep.subr.bf16.mxu0 0
  %691 = vmatpush1.bf16.msra.mxu0 0
  %692 = vmatprep.subr.bf16.mxu0 0
  %693 = vmatpush1.bf16.msra.mxu0 0
  %694 = vmatprep.subr.bf16.mxu0 0
  %695 = vmatpush1.bf16.msra.mxu0 0
  %696 = vmatprep.subr.bf16.mxu0 0
  %697 = vmatpush1.bf16.msra.mxu0 0
  %698 = vmatprep.subr.bf16.mxu0 0
  %699 = vmatpush1.bf16.msra.mxu0 0
  %700 = vmatprep.subr.bf16.mxu0 0
  %701 = vmatpush1.bf16.msra.mxu0 0
  %702 = vmatprep.subr.bf16.mxu0 0
  %703 = vmatpush1.bf16.msra.mxu0 0
  %704 = vmatprep.subr.bf16.mxu0 0
  %705 = vmatpush1.bf16.msra.mxu0 0
  %706 = vmatprep.subr.bf16.mxu0 0
  %707 = vmatpush1.bf16.msra.mxu0 0
  %708 = vmatprep.mubr.bf16.mxu0 0
  %709 = vmatmul.mubr.bf16.gmra.mrb[0].mxu0 %v656
  %v710 = vpop.f32.mrb[0].mxu0
  %v711 = vadd.f32 0.0, %v710
  %v712 = vpop.f32.mrb[0].mxu0
  %v713 = vadd.f32 0.0, %v712
  %v714 = vpop.f32.mrb[0].mxu0
  %v715 = vpop.f32.mrb[0].mxu0
  %716 = vdwg.mxu0
  %717 = vmatprep.subr.bf16.mxu0 %v668
  %718 = vmatpush1.bf16.msra.mxu0 %v665
  %719 = vmatprep.subr.bf16.mxu0 0
  %720 = vmatpush1.bf16.msra.mxu0 0
  %721 = vmatprep.subr.bf16.mxu0 0
  %722 = vmatpush1.bf16.msra.mxu0 0
  %723 = vmatprep.subr.bf16.mxu0 0
  %724 = vmatpush1.bf16.msra.mxu0 0
  %725 = vmatprep.subr.bf16.mxu0 0
  %726 = vmatpush1.bf16.msra.mxu0 0
  %727 = vmatprep.subr.bf16.mxu0 0
  %728 = vmatpush1.bf16.msra.mxu0 0
  %729 = vmatprep.subr.bf16.mxu0 0
  %730 = vmatpush1.bf16.msra.mxu0 0
  %731 = vmatprep.subr.bf16.mxu0 0
  %732 = vmatpush1.bf16.msra.mxu0 0
  %733 = vmatprep.subr.bf16.mxu0 0
  %734 = vmatpush1.bf16.msra.mxu0 0
  %735 = vmatprep.subr.bf16.mxu0 0
  %736 = vmatpush1.bf16.msra.mxu0 0
  %737 = vmatprep.subr.bf16.mxu0 0
  %738 = vmatpush1.bf16.msra.mxu0 0
  %739 = vmatprep.subr.bf16.mxu0 0
  %740 = vmatpush1.bf16.msra.mxu0 0
  %741 = vmatprep.subr.bf16.mxu0 0
  %742 = vmatpush1.bf16.msra.mxu0 0
  %743 = vmatprep.subr.bf16.mxu0 0
  %744 = vmatpush1.bf16.msra.mxu0 0
  %745 = vmatprep.subr.bf16.mxu0 0
  %746 = vmatpush1.bf16.msra.mxu0 0
  %747 = vmatprep.subr.bf16.mxu0 0
  %748 = vmatpush1.bf16.msra.mxu0 0
  %749 = vmatprep.mubr.bf16.mxu0 0
  %750 = vmatmul.mubr.bf16.gmra.mrb[0].mxu0 %v656
  %v751 = vpop.f32.mrb[0].mxu0
  %v752 = vadd.f32 0.0, %v751
  %v753 = vpop.f32.mrb[0].mxu0
  %v754 = vadd.f32 0.0, %v753
  %v755 = vpop.f32.mrb[0].mxu0
  %v756 = vpop.f32.mrb[0].mxu0
  %757 = vdwg.mxu0
  %758 = vmatprep.subr.bf16.mxu0 %v674
  %759 = vmatpush1.bf16.msra.mxu0 %v671
  %760 = vmatprep.subr.bf16.mxu0 0
  %761 = vmatpush1.bf16.msra.mxu0 0
  %762 = vmatprep.subr.bf16.mxu0 0
  %763 = vmatpush1.bf16.msra.mxu0 0
  %764 = vmatprep.subr.bf16.mxu0 0
  %765 = vmatpush1.bf16.msra.mxu0 0
  %766 = vmatprep.subr.bf16.mxu0 0
  %767 = vmatpush1.bf16.msra.mxu0 0
  %768 = vmatprep.subr.bf16.mxu0 0
  %769 = vmatpush1.bf16.msra.mxu0 0
  %770 = vmatprep.subr.bf16.mxu0 0
  %771 = vmatpush1.bf16.msra.mxu0 0
  %772 = vmatprep.subr.bf16.mxu0 0
  %773 = vmatpush1.bf16.msra.mxu0 0
  %774 = vmatprep.subr.bf16.mxu0 0
  %775 = vmatpush1.bf16.msra.mxu0 0
  %776 = vmatprep.subr.bf16.mxu0 0
  %777 = vmatpush1.bf16.msra.mxu0 0
  %778 = vmatprep.subr.bf16.mxu0 0
  %779 = vmatpush1.bf16.msra.mxu0 0
  %780 = vmatprep.subr.bf16.mxu0 0
  %781 = vmatpush1.bf16.msra.mxu0 0
  %782 = vmatprep.subr.bf16.mxu0 0
  %783 = vmatpush1.bf16.msra.mxu0 0
  %784 = vmatprep.subr.bf16.mxu0 0
  %785 = vmatpush1.bf16.msra.mxu0 0
  %786 = vmatprep.subr.bf16.mxu0 0
  %787 = vmatpush1.bf16.msra.mxu0 0
  %788 = vmatprep.subr.bf16.mxu0 0
  %789 = vmatpush1.bf16.msra.mxu0 0
  %790 = vmatprep.mubr.bf16.mxu0 0
  %791 = vmatmul.mubr.bf16.gmra.mrb[0].mxu0 %v656
  %v792 = vpop.f32.mrb[0].mxu0
  %v793 = vadd.f32 0.0, %v792
  %v794 = vpop.f32.mrb[0].mxu0
  %v795 = vadd.f32 0.0, %v794
  %v796 = vpop.f32.mrb[0].mxu0
  %v797 = vpop.f32.mrb[0].mxu0
  %798 = vdwg.mxu0
  %v799 = vadd.f32 %v598, %v711
  %v800 = vadd.f32 %v599, %v713
  %v801 = vadd.f32 %v600, %v752
  %v802 = vadd.f32 %v601, %v754
  %v803 = vadd.f32 %v602, %v793
  %v804 = vadd.f32 %v603, %v795
  %v805 = vld [vmem:[%s0 + $0x4] sm:$0xff]
  %v806 = vld [vmem:[%s0 + $0xc] sm:$0xff]
  %v807 = vld [vmem:[%s0 + $0x14] sm:$0xff]
  %s808 = scalar_lea.vmem %s2, 32
  %v809 = vld [vmem:[%s808] sm:$0xff]
  %v810 = vpack.c.bf16 %v809, %v809
  %v814 = vcombine.high %v805, %v805
  %v815 = vcombine.high %v806, %v806
  %v816 = vcombine.high %v807, %v807
  %v820 = vpack.c.bf16 %v805, %v805
  %v821 = vpack.c.bf16 %v814, %v814
  %v822 = vpack.c.bf16 %v806, %v806
  %v823 = vpack.c.bf16 %v815, %v815
  %v824 = vpack.c.bf16 %v807, %v807
  %v825 = vpack.c.bf16 %v816, %v816
  %v827 = vsel %vm101, %v810, 0
  %v830 = vsel %vm105, %v820, 0
  %v833 = vsel %vm105, %v821, 0
  %v836 = vsel %vm105, %v822, 0
  %v839 = vsel %vm105, %v823, 0
  %v842 = vsel %vm105, %v824, 0
  %v845 = vsel %vm105, %v825, 0
  %847 = vmatprep.subr.bf16.mxu0 %v833
  %848 = vmatpush1.bf16.msra.mxu0 %v830
  %849 = vmatprep.subr.bf16.mxu0 0
  %850 = vmatpush1.bf16.msra.mxu0 0
  %851 = vmatprep.subr.bf16.mxu0 0
  %852 = vmatpush1.bf16.msra.mxu0 0
  %853 = vmatprep.subr.bf16.mxu0 0
  %854 = vmatpush1.bf16.msra.mxu0 0
  %855 = vmatprep.subr.bf16.mxu0 0
  %856 = vmatpush1.bf16.msra.mxu0 0
  %857 = vmatprep.subr.bf16.mxu0 0
  %858 = vmatpush1.bf16.msra.mxu0 0
  %859 = vmatprep.subr.bf16.mxu0 0
  %860 = vmatpush1.bf16.msra.mxu0 0
  %861 = vmatprep.subr.bf16.mxu0 0
  %862 = vmatpush1.bf16.msra.mxu0 0
  %863 = vmatprep.subr.bf16.mxu0 0
  %864 = vmatpush1.bf16.msra.mxu0 0
  %865 = vmatprep.subr.bf16.mxu0 0
  %866 = vmatpush1.bf16.msra.mxu0 0
  %867 = vmatprep.subr.bf16.mxu0 0
  %868 = vmatpush1.bf16.msra.mxu0 0
  %869 = vmatprep.subr.bf16.mxu0 0
  %870 = vmatpush1.bf16.msra.mxu0 0
  %871 = vmatprep.subr.bf16.mxu0 0
  %872 = vmatpush1.bf16.msra.mxu0 0
  %873 = vmatprep.subr.bf16.mxu0 0
  %874 = vmatpush1.bf16.msra.mxu0 0
  %875 = vmatprep.subr.bf16.mxu0 0
  %876 = vmatpush1.bf16.msra.mxu0 0
  %877 = vmatprep.subr.bf16.mxu0 0
  %878 = vmatpush1.bf16.msra.mxu0 0
  %879 = vmatprep.mubr.bf16.mxu0 0
  %880 = vmatmul.mubr.bf16.gmra.mrb[0].mxu0 %v827
  %v881 = vpop.f32.mrb[0].mxu0
  %v882 = vadd.f32 0.0, %v881
  %v883 = vpop.f32.mrb[0].mxu0
  %v884 = vadd.f32 0.0, %v883
  %v885 = vpop.f32.mrb[0].mxu0
  %v886 = vpop.f32.mrb[0].mxu0
  %887 = vdwg.mxu0
  %888 = vmatprep.subr.bf16.mxu0 %v839
  %889 = vmatpush1.bf16.msra.mxu0 %v836
  %890 = vmatprep.subr.bf16.mxu0 0
  %891 = vmatpush1.bf16.msra.mxu0 0
  %892 = vmatprep.subr.bf16.mxu0 0
  %893 = vmatpush1.bf16.msra.mxu0 0
  %894 = vmatprep.subr.bf16.mxu0 0
  %895 = vmatpush1.bf16.msra.mxu0 0
  %896 = vmatprep.subr.bf16.mxu0 0
  %897 = vmatpush1.bf16.msra.mxu0 0
  %898 = vmatprep.subr.bf16.mxu0 0
  %899 = vmatpush1.bf16.msra.mxu0 0
  %900 = vmatprep.subr.bf16.mxu0 0
  %901 = vmatpush1.bf16.msra.mxu0 0
  %902 = vmatprep.subr.bf16.mxu0 0
  %903 = vmatpush1.bf16.msra.mxu0 0
  %904 = vmatprep.subr.bf16.mxu0 0
  %905 = vmatpush1.bf16.msra.mxu0 0
  %906 = vmatprep.subr.bf16.mxu0 0
  %907 = vmatpush1.bf16.msra.mxu0 0
  %908 = vmatprep.subr.bf16.mxu0 0
  %909 = vmatpush1.bf16.msra.mxu0 0
  %910 = vmatprep.subr.bf16.mxu0 0
  %911 = vmatpush1.bf16.msra.mxu0 0
  %912 = vmatprep.subr.bf16.mxu0 0
  %913 = vmatpush1.bf16.msra.mxu0 0
  %914 = vmatprep.subr.bf16.mxu0 0
  %915 = vmatpush1.bf16.msra.mxu0 0
  %916 = vmatprep.subr.bf16.mxu0 0
  %917 = vmatpush1.bf16.msra.mxu0 0
  %918 = vmatprep.subr.bf16.mxu0 0
  %919 = vmatpush1.bf16.msra.mxu0 0
  %920 = vmatprep.mubr.bf16.mxu0 0
  %921 = vmatmul.mubr.bf16.gmra.mrb[0].mxu0 %v827
  %v922 = vpop.f32.mrb[0].mxu0
  %v923 = vadd.f32 0.0, %v922
  %v924 = vpop.f32.mrb[0].mxu0
  %v925 = vadd.f32 0.0, %v924
  %v926 = vpop.f32.mrb[0].mxu0
  %v927 = vpop.f32.mrb[0].mxu0
  %928 = vdwg.mxu0
  %929 = vmatprep.subr.bf16.mxu0 %v845
  %930 = vmatpush1.bf16.msra.mxu0 %v842
  %931 = vmatprep.subr.bf16.mxu0 0
  %932 = vmatpush1.bf16.msra.mxu0 0
  %933 = vmatprep.subr.bf16.mxu0 0
  %934 = vmatpush1.bf16.msra.mxu0 0
  %935 = vmatprep.subr.bf16.mxu0 0
  %936 = vmatpush1.bf16.msra.mxu0 0
  %937 = vmatprep.subr.bf16.mxu0 0
  %938 = vmatpush1.bf16.msra.mxu0 0
  %939 = vmatprep.subr.bf16.mxu0 0
  %940 = vmatpush1.bf16.msra.mxu0 0
  %941 = vmatprep.subr.bf16.mxu0 0
  %942 = vmatpush1.bf16.msra.mxu0 0
  %943 = vmatprep.subr.bf16.mxu0 0
  %944 = vmatpush1.bf16.msra.mxu0 0
  %945 = vmatprep.subr.bf16.mxu0 0
  %946 = vmatpush1.bf16.msra.mxu0 0
  %947 = vmatprep.subr.bf16.mxu0 0
  %948 = vmatpush1.bf16.msra.mxu0 0
  %949 = vmatprep.subr.bf16.mxu0 0
  %950 = vmatpush1.bf16.msra.mxu0 0
  %951 = vmatprep.subr.bf16.mxu0 0
  %952 = vmatpush1.bf16.msra.mxu0 0
  %953 = vmatprep.subr.bf16.mxu0 0
  %954 = vmatpush1.bf16.msra.mxu0 0
  %955 = vmatprep.subr.bf16.mxu0 0
  %956 = vmatpush1.bf16.msra.mxu0 0
  %957 = vmatprep.subr.bf16.mxu0 0
  %958 = vmatpush1.bf16.msra.mxu0 0
  %959 = vmatprep.subr.bf16.mxu0 0
  %960 = vmatpush1.bf16.msra.mxu0 0
  %961 = vmatprep.mubr.bf16.mxu0 0
  %962 = vmatmul.mubr.bf16.gmra.mrb[0].mxu0 %v827
  %v963 = vpop.f32.mrb[0].mxu0
  %v964 = vadd.f32 0.0, %v963
  %v965 = vpop.f32.mrb[0].mxu0
  %v966 = vadd.f32 0.0, %v965
  %v967 = vpop.f32.mrb[0].mxu0
  %v968 = vpop.f32.mrb[0].mxu0
  %969 = vdwg.mxu0
  %v970 = vadd.f32 %v799, %v882
  %v971 = vadd.f32 %v800, %v884
  %v972 = vadd.f32 %v801, %v923
  %v973 = vadd.f32 %v802, %v925
  %v974 = vadd.f32 %v803, %v964
  %v975 = vadd.f32 %v804, %v966
  %v976 = vld [vmem:[%s0 + $0x4] sm:$0xff]
  %v977 = vld [vmem:[%s0 + $0xc] sm:$0xff]
  %v978 = vld [vmem:[%s0 + $0x14] sm:$0xff]
  %s979 = scalar_lea.vmem %s2, 40
  %v980 = vld [vmem:[%s979] sm:$0xff]
  %v981 = vpack.c.bf16 %v980, %v980
  %v985 = vcombine.high %v976, %v976
  %v986 = vcombine.high %v977, %v977
  %v987 = vcombine.high %v978, %v978
  %v991 = vpack.c.bf16 %v976, %v976
  %v992 = vpack.c.bf16 %v985, %v985
  %v993 = vpack.c.bf16 %v977, %v977
  %v994 = vpack.c.bf16 %v986, %v986
  %v995 = vpack.c.bf16 %v978, %v978
  %v996 = vpack.c.bf16 %v987, %v987
  %1003 = vrot.lane.b32.xlu0 %v991, 127
  %v1004 = vpop.permute.xlu0 %1003
  %1005 = vrot.lane.b32.xlu0 %v992, 127
  %v1006 = vpop.permute.xlu0 %1005
  %1007 = vrot.lane.b32.xlu0 %v993, 127
  %v1008 = vpop.permute.xlu0 %1007
  %1009 = vrot.lane.b32.xlu0 %v994, 127
  %v1010 = vpop.permute.xlu0 %1009
  %1011 = vrot.lane.b32.xlu0 %v995, 127
  %v1012 = vpop.permute.xlu0 %1011
  %1013 = vrot.lane.b32.xlu0 %v996, 127
  %v1014 = vpop.permute.xlu0 %1013
  %vm1015 = vcmask 1039360
  %v1016 = vsel %vm1015, %v1004, %v1006
  %v1017 = vsel %vm1015, %v1006, %v1008
  %v1018 = vsel %vm1015, %v1008, %v1010
  %v1019 = vsel %vm1015, %v1010, %v1012
  %v1020 = vsel %vm1015, %v1012, %v1014
  %v1022 = vsel %vm101, %v981, 0
  %v1025 = vsel %vm105, %v1016, 0
  %v1028 = vsel %vm105, %v1017, 0
  %v1031 = vsel %vm105, %v1018, 0
  %v1034 = vsel %vm105, %v1019, 0
  %v1037 = vsel %vm105, %v1020, 0
  %v1040 = vsel %vm105, %v1014, 0
  %1042 = vmatprep.subr.bf16.mxu0 %v1028
  %1043 = vmatpush1.bf16.msra.mxu0 %v1025
  %1044 = vmatprep.subr.bf16.mxu0 0
  %1045 = vmatpush1.bf16.msra.mxu0 0
  %1046 = vmatprep.subr.bf16.mxu0 0
  %1047 = vmatpush1.bf16.msra.mxu0 0
  %1048 = vmatprep.subr.bf16.mxu0 0
  %1049 = vmatpush1.bf16.msra.mxu0 0
  %1050 = vmatprep.subr.bf16.mxu0 0
  %1051 = vmatpush1.bf16.msra.mxu0 0
  %1052 = vmatprep.subr.bf16.mxu0 0
  %1053 = vmatpush1.bf16.msra.mxu0 0
  %1054 = vmatprep.subr.bf16.mxu0 0
  %1055 = vmatpush1.bf16.msra.mxu0 0
  %1056 = vmatprep.subr.bf16.mxu0 0
  %1057 = vmatpush1.bf16.msra.mxu0 0
  %1058 = vmatprep.subr.bf16.mxu0 0
  %1059 = vmatpush1.bf16.msra.mxu0 0
  %1060 = vmatprep.subr.bf16.mxu0 0
  %1061 = vmatpush1.bf16.msra.mxu0 0
  %1062 = vmatprep.subr.bf16.mxu0 0
  %1063 = vmatpush1.bf16.msra.mxu0 0
  %1064 = vmatprep.subr.bf16.mxu0 0
  %1065 = vmatpush1.bf16.msra.mxu0 0
  %1066 = vmatprep.subr.bf16.mxu0 0
  %1067 = vmatpush1.bf16.msra.mxu0 0
  %1068 = vmatprep.subr.bf16.mxu0 0
  %1069 = vmatpush1.bf16.msra.mxu0 0
  %1070 = vmatprep.subr.bf16.mxu0 0
  %1071 = vmatpush1.bf16.msra.mxu0 0
  %1072 = vmatprep.subr.bf16.mxu0 0
  %1073 = vmatpush1.bf16.msra.mxu0 0
  %1074 = vmatprep.mubr.bf16.mxu0 0
  %1075 = vmatmul.mubr.bf16.gmra.mrb[0].mxu0 %v1022
  %v1076 = vpop.f32.mrb[0].mxu0
  %v1077 = vadd.f32 0.0, %v1076
  %v1078 = vpop.f32.mrb[0].mxu0
  %v1079 = vadd.f32 0.0, %v1078
  %v1080 = vpop.f32.mrb[0].mxu0
  %v1081 = vpop.f32.mrb[0].mxu0
  %1082 = vdwg.mxu0
  %1083 = vmatprep.subr.bf16.mxu0 %v1034
  %1084 = vmatpush1.bf16.msra.mxu0 %v1031
  %1085 = vmatprep.subr.bf16.mxu0 0
  %1086 = vmatpush1.bf16.msra.mxu0 0
  %1087 = vmatprep.subr.bf16.mxu0 0
  %1088 = vmatpush1.bf16.msra.mxu0 0
  %1089 = vmatprep.subr.bf16.mxu0 0
  %1090 = vmatpush1.bf16.msra.mxu0 0
  %1091 = vmatprep.subr.bf16.mxu0 0
  %1092 = vmatpush1.bf16.msra.mxu0 0
  %1093 = vmatprep.subr.bf16.mxu0 0
  %1094 = vmatpush1.bf16.msra.mxu0 0
  %1095 = vmatprep.subr.bf16.mxu0 0
  %1096 = vmatpush1.bf16.msra.mxu0 0
  %1097 = vmatprep.subr.bf16.mxu0 0
  %1098 = vmatpush1.bf16.msra.mxu0 0
  %1099 = vmatprep.subr.bf16.mxu0 0
  %1100 = vmatpush1.bf16.msra.mxu0 0
  %1101 = vmatprep.subr.bf16.mxu0 0
  %1102 = vmatpush1.bf16.msra.mxu0 0
  %1103 = vmatprep.subr.bf16.mxu0 0
  %1104 = vmatpush1.bf16.msra.mxu0 0
  %1105 = vmatprep.subr.bf16.mxu0 0
  %1106 = vmatpush1.bf16.msra.mxu0 0
  %1107 = vmatprep.subr.bf16.mxu0 0
  %1108 = vmatpush1.bf16.msra.mxu0 0
  %1109 = vmatprep.subr.bf16.mxu0 0
  %1110 = vmatpush1.bf16.msra.mxu0 0
  %1111 = vmatprep.subr.bf16.mxu0 0
  %1112 = vmatpush1.bf16.msra.mxu0 0
  %1113 = vmatprep.subr.bf16.mxu0 0
  %1114 = vmatpush1.bf16.msra.mxu0 0
  %1115 = vmatprep.mubr.bf16.mxu0 0
  %1116 = vmatmul.mubr.bf16.gmra.mrb[0].mxu0 %v1022
  %v1117 = vpop.f32.mrb[0].mxu0
  %v1118 = vadd.f32 0.0, %v1117
  %v1119 = vpop.f32.mrb[0].mxu0
  %v1120 = vadd.f32 0.0, %v1119
  %v1121 = vpop.f32.mrb[0].mxu0
  %v1122 = vpop.f32.mrb[0].mxu0
  %1123 = vdwg.mxu0
  %1124 = vmatprep.subr.bf16.mxu0 %v1040
  %1125 = vmatpush1.bf16.msra.mxu0 %v1037
  %1126 = vmatprep.subr.bf16.mxu0 0
  %1127 = vmatpush1.bf16.msra.mxu0 0
  %1128 = vmatprep.subr.bf16.mxu0 0
  %1129 = vmatpush1.bf16.msra.mxu0 0
  %1130 = vmatprep.subr.bf16.mxu0 0
  %1131 = vmatpush1.bf16.msra.mxu0 0
  %1132 = vmatprep.subr.bf16.mxu0 0
  %1133 = vmatpush1.bf16.msra.mxu0 0
  %1134 = vmatprep.subr.bf16.mxu0 0
  %1135 = vmatpush1.bf16.msra.mxu0 0
  %1136 = vmatprep.subr.bf16.mxu0 0
  %1137 = vmatpush1.bf16.msra.mxu0 0
  %1138 = vmatprep.subr.bf16.mxu0 0
  %1139 = vmatpush1.bf16.msra.mxu0 0
  %1140 = vmatprep.subr.bf16.mxu0 0
  %1141 = vmatpush1.bf16.msra.mxu0 0
  %1142 = vmatprep.subr.bf16.mxu0 0
  %1143 = vmatpush1.bf16.msra.mxu0 0
  %1144 = vmatprep.subr.bf16.mxu0 0
  %1145 = vmatpush1.bf16.msra.mxu0 0
  %1146 = vmatprep.subr.bf16.mxu0 0
  %1147 = vmatpush1.bf16.msra.mxu0 0
  %1148 = vmatprep.subr.bf16.mxu0 0
  %1149 = vmatpush1.bf16.msra.mxu0 0
  %1150 = vmatprep.subr.bf16.mxu0 0
  %1151 = vmatpush1.bf16.msra.mxu0 0
  %1152 = vmatprep.subr.bf16.mxu0 0
  %1153 = vmatpush1.bf16.msra.mxu0 0
  %1154 = vmatprep.subr.bf16.mxu0 0
  %1155 = vmatpush1.bf16.msra.mxu0 0
  %1156 = vmatprep.mubr.bf16.mxu0 0
  %1157 = vmatmul.mubr.bf16.gmra.mrb[0].mxu0 %v1022
  %v1158 = vpop.f32.mrb[0].mxu0
  %v1159 = vadd.f32 0.0, %v1158
  %v1160 = vpop.f32.mrb[0].mxu0
  %v1161 = vadd.f32 0.0, %v1160
  %v1162 = vpop.f32.mrb[0].mxu0
  %v1163 = vpop.f32.mrb[0].mxu0
  %1164 = vdwg.mxu0
  %v1165 = vadd.f32 %v970, %v1077
  %v1166 = vadd.f32 %v971, %v1079
  %v1167 = vadd.f32 %v972, %v1118
  %v1168 = vadd.f32 %v973, %v1120
  %v1169 = vadd.f32 %v974, %v1159
  %v1170 = vadd.f32 %v975, %v1161
  %v1171 = vld [vmem:[%s0 + $0x4] sm:$0xff]
  %v1172 = vld [vmem:[%s0 + $0xc] sm:$0xff]
  %v1173 = vld [vmem:[%s0 + $0x14] sm:$0xff]
  %s1174 = scalar_lea.vmem %s2, 48
  %v1175 = vld [vmem:[%s1174] sm:$0xff]
  %v1176 = vpack.c.bf16 %v1175, %v1175
  %v1180 = vcombine.high %v1171, %v1171
  %v1181 = vcombine.high %v1172, %v1172
  %v1182 = vcombine.high %v1173, %v1173
  %v1186 = vpack.c.bf16 %v1171, %v1171
  %v1187 = vpack.c.bf16 %v1180, %v1180
  %v1188 = vpack.c.bf16 %v1172, %v1172
  %v1189 = vpack.c.bf16 %v1181, %v1181
  %v1190 = vpack.c.bf16 %v1173, %v1173
  %v1191 = vpack.c.bf16 %v1182, %v1182
  %1198 = vrot.lane.b32.xlu0 %v1186, 111
  %v1199 = vpop.permute.xlu0 %1198
  %1200 = vrot.lane.b32.xlu0 %v1187, 111
  %v1201 = vpop.permute.xlu0 %1200
  %1202 = vrot.lane.b32.xlu0 %v1188, 111
  %v1203 = vpop.permute.xlu0 %1202
  %1204 = vrot.lane.b32.xlu0 %v1189, 111
  %v1205 = vpop.permute.xlu0 %1204
  %1206 = vrot.lane.b32.xlu0 %v1190, 111
  %v1207 = vpop.permute.xlu0 %1206
  %1208 = vrot.lane.b32.xlu0 %v1191, 111
  %v1209 = vpop.permute.xlu0 %1208
  %vm1210 = vcmask 908288
  %v1211 = vsel %vm1210, %v1199, %v1201
  %v1212 = vsel %vm1210, %v1201, %v1203
  %v1213 = vsel %vm1210, %v1203, %v1205
  %v1214 = vsel %vm1210, %v1205, %v1207
  %v1215 = vsel %vm1210, %v1207, %v1209
  %v1217 = vsel %vm101, %v1176, 0
  %v1220 = vsel %vm105, %v1211, 0
  %v1223 = vsel %vm105, %v1212, 0
  %v1226 = vsel %vm105, %v1213, 0
  %v1229 = vsel %vm105, %v1214, 0
  %v1232 = vsel %vm105, %v1215, 0
  %v1235 = vsel %vm105, %v1209, 0
  %1237 = vmatprep.subr.bf16.mxu0 %v1223
  %1238 = vmatpush1.bf16.msra.mxu0 %v1220
  %1239 = vmatprep.subr.bf16.mxu0 0
  %1240 = vmatpush1.bf16.msra.mxu0 0
  %1241 = vmatprep.subr.bf16.mxu0 0
  %1242 = vmatpush1.bf16.msra.mxu0 0
  %1243 = vmatprep.subr.bf16.mxu0 0
  %1244 = vmatpush1.bf16.msra.mxu0 0
  %1245 = vmatprep.subr.bf16.mxu0 0
  %1246 = vmatpush1.bf16.msra.mxu0 0
  %1247 = vmatprep.subr.bf16.mxu0 0
  %1248 = vmatpush1.bf16.msra.mxu0 0
  %1249 = vmatprep.subr.bf16.mxu0 0
  %1250 = vmatpush1.bf16.msra.mxu0 0
  %1251 = vmatprep.subr.bf16.mxu0 0
  %1252 = vmatpush1.bf16.msra.mxu0 0
  %1253 = vmatprep.subr.bf16.mxu0 0
  %1254 = vmatpush1.bf16.msra.mxu0 0
  %1255 = vmatprep.subr.bf16.mxu0 0
  %1256 = vmatpush1.bf16.msra.mxu0 0
  %1257 = vmatprep.subr.bf16.mxu0 0
  %1258 = vmatpush1.bf16.msra.mxu0 0
  %1259 = vmatprep.subr.bf16.mxu0 0
  %1260 = vmatpush1.bf16.msra.mxu0 0
  %1261 = vmatprep.subr.bf16.mxu0 0
  %1262 = vmatpush1.bf16.msra.mxu0 0
  %1263 = vmatprep.subr.bf16.mxu0 0
  %1264 = vmatpush1.bf16.msra.mxu0 0
  %1265 = vmatprep.subr.bf16.mxu0 0
  %1266 = vmatpush1.bf16.msra.mxu0 0
  %1267 = vmatprep.subr.bf16.mxu0 0
  %1268 = vmatpush1.bf16.msra.mxu0 0
  %1269 = vmatprep.mubr.bf16.mxu0 0
  %1270 = vmatmul.mubr.bf16.gmra.mrb[0].mxu0 %v1217
  %v1271 = vpop.f32.mrb[0].mxu0
  %v1272 = vadd.f32 0.0, %v1271
  %v1273 = vpop.f32.mrb[0].mxu0
  %v1274 = vadd.f32 0.0, %v1273
  %v1275 = vpop.f32.mrb[0].mxu0
  %v1276 = vpop.f32.mrb[0].mxu0
  %1277 = vdwg.mxu0
  %1278 = vmatprep.subr.bf16.mxu0 %v1229
  %1279 = vmatpush1.bf16.msra.mxu0 %v1226
  %1280 = vmatprep.subr.bf16.mxu0 0
  %1281 = vmatpush1.bf16.msra.mxu0 0
  %1282 = vmatprep.subr.bf16.mxu0 0
  %1283 = vmatpush1.bf16.msra.mxu0 0
  %1284 = vmatprep.subr.bf16.mxu0 0
  %1285 = vmatpush1.bf16.msra.mxu0 0
  %1286 = vmatprep.subr.bf16.mxu0 0
  %1287 = vmatpush1.bf16.msra.mxu0 0
  %1288 = vmatprep.subr.bf16.mxu0 0
  %1289 = vmatpush1.bf16.msra.mxu0 0
  %1290 = vmatprep.subr.bf16.mxu0 0
  %1291 = vmatpush1.bf16.msra.mxu0 0
  %1292 = vmatprep.subr.bf16.mxu0 0
  %1293 = vmatpush1.bf16.msra.mxu0 0
  %1294 = vmatprep.subr.bf16.mxu0 0
  %1295 = vmatpush1.bf16.msra.mxu0 0
  %1296 = vmatprep.subr.bf16.mxu0 0
  %1297 = vmatpush1.bf16.msra.mxu0 0
  %1298 = vmatprep.subr.bf16.mxu0 0
  %1299 = vmatpush1.bf16.msra.mxu0 0
  %1300 = vmatprep.subr.bf16.mxu0 0
  %1301 = vmatpush1.bf16.msra.mxu0 0
  %1302 = vmatprep.subr.bf16.mxu0 0
  %1303 = vmatpush1.bf16.msra.mxu0 0
  %1304 = vmatprep.subr.bf16.mxu0 0
  %1305 = vmatpush1.bf16.msra.mxu0 0
  %1306 = vmatprep.subr.bf16.mxu0 0
  %1307 = vmatpush1.bf16.msra.mxu0 0
  %1308 = vmatprep.subr.bf16.mxu0 0
  %1309 = vmatpush1.bf16.msra.mxu0 0
  %1310 = vmatprep.mubr.bf16.mxu0 0
  %1311 = vmatmul.mubr.bf16.gmra.mrb[0].mxu0 %v1217
  %v1312 = vpop.f32.mrb[0].mxu0
  %v1313 = vadd.f32 0.0, %v1312
  %v1314 = vpop.f32.mrb[0].mxu0
  %v1315 = vadd.f32 0.0, %v1314
  %v1316 = vpop.f32.mrb[0].mxu0
  %v1317 = vpop.f32.mrb[0].mxu0
  %1318 = vdwg.mxu0
  %1319 = vmatprep.subr.bf16.mxu0 %v1235
  %1320 = vmatpush1.bf16.msra.mxu0 %v1232
  %1321 = vmatprep.subr.bf16.mxu0 0
  %1322 = vmatpush1.bf16.msra.mxu0 0
  %1323 = vmatprep.subr.bf16.mxu0 0
  %1324 = vmatpush1.bf16.msra.mxu0 0
  %1325 = vmatprep.subr.bf16.mxu0 0
  %1326 = vmatpush1.bf16.msra.mxu0 0
  %1327 = vmatprep.subr.bf16.mxu0 0
  %1328 = vmatpush1.bf16.msra.mxu0 0
  %1329 = vmatprep.subr.bf16.mxu0 0
  %1330 = vmatpush1.bf16.msra.mxu0 0
  %1331 = vmatprep.subr.bf16.mxu0 0
  %1332 = vmatpush1.bf16.msra.mxu0 0
  %1333 = vmatprep.subr.bf16.mxu0 0
  %1334 = vmatpush1.bf16.msra.mxu0 0
  %1335 = vmatprep.subr.bf16.mxu0 0
  %1336 = vmatpush1.bf16.msra.mxu0 0
  %1337 = vmatprep.subr.bf16.mxu0 0
  %1338 = vmatpush1.bf16.msra.mxu0 0
  %1339 = vmatprep.subr.bf16.mxu0 0
  %1340 = vmatpush1.bf16.msra.mxu0 0
  %1341 = vmatprep.subr.bf16.mxu0 0
  %1342 = vmatpush1.bf16.msra.mxu0 0
  %1343 = vmatprep.subr.bf16.mxu0 0
  %1344 = vmatpush1.bf16.msra.mxu0 0
  %1345 = vmatprep.subr.bf16.mxu0 0
  %1346 = vmatpush1.bf16.msra.mxu0 0
  %1347 = vmatprep.subr.bf16.mxu0 0
  %1348 = vmatpush1.bf16.msra.mxu0 0
  %1349 = vmatprep.subr.bf16.mxu0 0
  %1350 = vmatpush1.bf16.msra.mxu0 0
  %1351 = vmatprep.mubr.bf16.mxu0 0
  %1352 = vmatmul.mubr.bf16.gmra.mrb[0].mxu0 %v1217
  %v1353 = vpop.f32.mrb[0].mxu0
  %v1354 = vadd.f32 0.0, %v1353
  %v1355 = vpop.f32.mrb[0].mxu0
  %v1356 = vadd.f32 0.0, %v1355
  %v1357 = vpop.f32.mrb[0].mxu0
  %v1358 = vpop.f32.mrb[0].mxu0
  %1359 = vdwg.mxu0
  %v1360 = vadd.f32 %v1165, %v1272
  %v1361 = vadd.f32 %v1166, %v1274
  %v1362 = vadd.f32 %v1167, %v1313
  %v1363 = vadd.f32 %v1168, %v1315
  %v1364 = vadd.f32 %v1169, %v1354
  %v1365 = vadd.f32 %v1170, %v1356
  %v1366 = vld [vmem:[%s0 + $0x4] sm:$0xff]
  %v1367 = vld [vmem:[%s0 + $0xc] sm:$0xff]
  %v1368 = vld [vmem:[%s0 + $0x14] sm:$0xff]
  %s1369 = scalar_lea.vmem %s2, 56
  %v1370 = vld [vmem:[%s1369] sm:$0xff]
  %v1371 = vpack.c.bf16 %v1370, %v1370
  %v1375 = vcombine.high %v1366, %v1366
  %v1376 = vcombine.high %v1367, %v1367
  %v1377 = vcombine.high %v1368, %v1368
  %v1381 = vpack.c.bf16 %v1366, %v1366
  %v1382 = vpack.c.bf16 %v1375, %v1375
  %v1383 = vpack.c.bf16 %v1367, %v1367
  %v1384 = vpack.c.bf16 %v1376, %v1376
  %v1385 = vpack.c.bf16 %v1368, %v1368
  %v1386 = vpack.c.bf16 %v1377, %v1377
  %1393 = vrot.lane.b32.xlu0 %v1381, 110
  %v1394 = vpop.permute.xlu0 %1393
  %1395 = vrot.lane.b32.xlu0 %v1382, 110
  %v1396 = vpop.permute.xlu0 %1395
  %1397 = vrot.lane.b32.xlu0 %v1383, 110
  %v1398 = vpop.permute.xlu0 %1397
  %1399 = vrot.lane.b32.xlu0 %v1384, 110
  %v1400 = vpop.permute.xlu0 %1399
  %1401 = vrot.lane.b32.xlu0 %v1385, 110
  %v1402 = vpop.permute.xlu0 %1401
  %1403 = vrot.lane.b32.xlu0 %v1386, 110
  %v1404 = vpop.permute.xlu0 %1403
  %vm1405 = vcmask 900096
  %v1406 = vsel %vm1405, %v1394, %v1396
  %v1407 = vsel %vm1405, %v1396, %v1398
  %v1408 = vsel %vm1405, %v1398, %v1400
  %v1409 = vsel %vm1405, %v1400, %v1402
  %v1410 = vsel %vm1405, %v1402, %v1404
  %v1412 = vsel %vm101, %v1371, 0
  %v1415 = vsel %vm105, %v1406, 0
  %v1418 = vsel %vm105, %v1407, 0
  %v1421 = vsel %vm105, %v1408, 0
  %v1424 = vsel %vm105, %v1409, 0
  %v1427 = vsel %vm105, %v1410, 0
  %v1430 = vsel %vm105, %v1404, 0
  %1432 = vmatprep.subr.bf16.mxu0 %v1418
  %1433 = vmatpush1.bf16.msra.mxu0 %v1415
  %1434 = vmatprep.subr.bf16.mxu0 0
  %1435 = vmatpush1.bf16.msra.mxu0 0
  %1436 = vmatprep.subr.bf16.mxu0 0
  %1437 = vmatpush1.bf16.msra.mxu0 0
  %1438 = vmatprep.subr.bf16.mxu0 0
  %1439 = vmatpush1.bf16.msra.mxu0 0
  %1440 = vmatprep.subr.bf16.mxu0 0
  %1441 = vmatpush1.bf16.msra.mxu0 0
  %1442 = vmatprep.subr.bf16.mxu0 0
  %1443 = vmatpush1.bf16.msra.mxu0 0
  %1444 = vmatprep.subr.bf16.mxu0 0
  %1445 = vmatpush1.bf16.msra.mxu0 0
  %1446 = vmatprep.subr.bf16.mxu0 0
  %1447 = vmatpush1.bf16.msra.mxu0 0
  %1448 = vmatprep.subr.bf16.mxu0 0
  %1449 = vmatpush1.bf16.msra.mxu0 0
  %1450 = vmatprep.subr.bf16.mxu0 0
  %1451 = vmatpush1.bf16.msra.mxu0 0
  %1452 = vmatprep.subr.bf16.mxu0 0
  %1453 = vmatpush1.bf16.msra.mxu0 0
  %1454 = vmatprep.subr.bf16.mxu0 0
  %1455 = vmatpush1.bf16.msra.mxu0 0
  %1456 = vmatprep.subr.bf16.mxu0 0
  %1457 = vmatpush1.bf16.msra.mxu0 0
  %1458 = vmatprep.subr.bf16.mxu0 0
  %1459 = vmatpush1.bf16.msra.mxu0 0
  %1460 = vmatprep.subr.bf16.mxu0 0
  %1461 = vmatpush1.bf16.msra.mxu0 0
  %1462 = vmatprep.subr.bf16.mxu0 0
  %1463 = vmatpush1.bf16.msra.mxu0 0
  %1464 = vmatprep.mubr.bf16.mxu0 0
  %1465 = vmatmul.mubr.bf16.gmra.mrb[0].mxu0 %v1412
  %v1466 = vpop.f32.mrb[0].mxu0
  %v1467 = vadd.f32 0.0, %v1466
  %v1468 = vpop.f32.mrb[0].mxu0
  %v1469 = vadd.f32 0.0, %v1468
  %v1470 = vpop.f32.mrb[0].mxu0
  %v1471 = vpop.f32.mrb[0].mxu0
  %1472 = vdwg.mxu0
  %1473 = vmatprep.subr.bf16.mxu0 %v1424
  %1474 = vmatpush1.bf16.msra.mxu0 %v1421
  %1475 = vmatprep.subr.bf16.mxu0 0
  %1476 = vmatpush1.bf16.msra.mxu0 0
  %1477 = vmatprep.subr.bf16.mxu0 0
  %1478 = vmatpush1.bf16.msra.mxu0 0
  %1479 = vmatprep.subr.bf16.mxu0 0
  %1480 = vmatpush1.bf16.msra.mxu0 0
  %1481 = vmatprep.subr.bf16.mxu0 0
  %1482 = vmatpush1.bf16.msra.mxu0 0
  %1483 = vmatprep.subr.bf16.mxu0 0
  %1484 = vmatpush1.bf16.msra.mxu0 0
  %1485 = vmatprep.subr.bf16.mxu0 0
  %1486 = vmatpush1.bf16.msra.mxu0 0
  %1487 = vmatprep.subr.bf16.mxu0 0
  %1488 = vmatpush1.bf16.msra.mxu0 0
  %1489 = vmatprep.subr.bf16.mxu0 0
  %1490 = vmatpush1.bf16.msra.mxu0 0
  %1491 = vmatprep.subr.bf16.mxu0 0
  %1492 = vmatpush1.bf16.msra.mxu0 0
  %1493 = vmatprep.subr.bf16.mxu0 0
  %1494 = vmatpush1.bf16.msra.mxu0 0
  %1495 = vmatprep.subr.bf16.mxu0 0
  %1496 = vmatpush1.bf16.msra.mxu0 0
  %1497 = vmatprep.subr.bf16.mxu0 0
  %1498 = vmatpush1.bf16.msra.mxu0 0
  %1499 = vmatprep.subr.bf16.mxu0 0
  %1500 = vmatpush1.bf16.msra.mxu0 0
  %1501 = vmatprep.subr.bf16.mxu0 0
  %1502 = vmatpush1.bf16.msra.mxu0 0
  %1503 = vmatprep.subr.bf16.mxu0 0
  %1504 = vmatpush1.bf16.msra.mxu0 0
  %1505 = vmatprep.mubr.bf16.mxu0 0
  %1506 = vmatmul.mubr.bf16.gmra.mrb[0].mxu0 %v1412
  %v1507 = vpop.f32.mrb[0].mxu0
  %v1508 = vadd.f32 0.0, %v1507
  %v1509 = vpop.f32.mrb[0].mxu0
  %v1510 = vadd.f32 0.0, %v1509
  %v1511 = vpop.f32.mrb[0].mxu0
  %v1512 = vpop.f32.mrb[0].mxu0
  %1513 = vdwg.mxu0
  %1514 = vmatprep.subr.bf16.mxu0 %v1430
  %1515 = vmatpush1.bf16.msra.mxu0 %v1427
  %1516 = vmatprep.subr.bf16.mxu0 0
  %1517 = vmatpush1.bf16.msra.mxu0 0
  %1518 = vmatprep.subr.bf16.mxu0 0
  %1519 = vmatpush1.bf16.msra.mxu0 0
  %1520 = vmatprep.subr.bf16.mxu0 0
  %1521 = vmatpush1.bf16.msra.mxu0 0
  %1522 = vmatprep.subr.bf16.mxu0 0
  %1523 = vmatpush1.bf16.msra.mxu0 0
  %1524 = vmatprep.subr.bf16.mxu0 0
  %1525 = vmatpush1.bf16.msra.mxu0 0
  %1526 = vmatprep.subr.bf16.mxu0 0
  %1527 = vmatpush1.bf16.msra.mxu0 0
  %1528 = vmatprep.subr.bf16.mxu0 0
  %1529 = vmatpush1.bf16.msra.mxu0 0
  %1530 = vmatprep.subr.bf16.mxu0 0
  %1531 = vmatpush1.bf16.msra.mxu0 0
  %1532 = vmatprep.subr.bf16.mxu0 0
  %1533 = vmatpush1.bf16.msra.mxu0 0
  %1534 = vmatprep.subr.bf16.mxu0 0
  %1535 = vmatpush1.bf16.msra.mxu0 0
  %1536 = vmatprep.subr.bf16.mxu0 0
  %1537 = vmatpush1.bf16.msra.mxu0 0
  %1538 = vmatprep.subr.bf16.mxu0 0
  %1539 = vmatpush1.bf16.msra.mxu0 0
  %1540 = vmatprep.subr.bf16.mxu0 0
  %1541 = vmatpush1.bf16.msra.mxu0 0
  %1542 = vmatprep.subr.bf16.mxu0 0
  %1543 = vmatpush1.bf16.msra.mxu0 0
  %1544 = vmatprep.subr.bf16.mxu0 0
  %1545 = vmatpush1.bf16.msra.mxu0 0
  %1546 = vmatprep.mubr.bf16.mxu0 0
  %1547 = vmatmul.mubr.bf16.gmra.mrb[0].mxu0 %v1412
  %v1548 = vpop.f32.mrb[0].mxu0
  %v1549 = vadd.f32 0.0, %v1548
  %v1550 = vpop.f32.mrb[0].mxu0
  %v1551 = vadd.f32 0.0, %v1550
  %v1552 = vpop.f32.mrb[0].mxu0
  %v1553 = vpop.f32.mrb[0].mxu0
  %1554 = vdwg.mxu0
  %v1555 = vadd.f32 %v1360, %v1467
  %v1556 = vadd.f32 %v1361, %v1469
  %v1557 = vadd.f32 %v1362, %v1508
  %v1558 = vadd.f32 %v1363, %v1510
  %v1559 = vadd.f32 %v1364, %v1549
  %v1560 = vadd.f32 %v1365, %v1551
  %v1561 = vld [vmem:[%s0 + $0x4] sm:$0xff]
  %v1562 = vld [vmem:[%s0 + $0xc] sm:$0xff]
  %v1563 = vld [vmem:[%s0 + $0x14] sm:$0xff]
  %s1564 = scalar_lea.vmem %s2, 64
  %v1565 = vld [vmem:[%s1564] sm:$0xff]
  %v1566 = vpack.c.bf16 %v1565, %v1565
  %v1570 = vcombine.high %v1561, %v1561
  %v1571 = vcombine.high %v1562, %v1562
  %v1572 = vcombine.high %v1563, %v1563
  %v1576 = vpack.c.bf16 %v1561, %v1561
  %v1577 = vpack.c.bf16 %v1570, %v1570
  %v1578 = vpack.c.bf16 %v1562, %v1562
  %v1579 = vpack.c.bf16 %v1571, %v1571
  %v1580 = vpack.c.bf16 %v1563, %v1563
  %v1581 = vpack.c.bf16 %v1572, %v1572
  %1588 = vrot.lane.b32.xlu0 %v1576, 109
  %v1589 = vpop.permute.xlu0 %1588
  %1590 = vrot.lane.b32.xlu0 %v1577, 109
  %v1591 = vpop.permute.xlu0 %1590
  %1592 = vrot.lane.b32.xlu0 %v1578, 109
  %v1593 = vpop.permute.xlu0 %1592
  %1594 = vrot.lane.b32.xlu0 %v1579, 109
  %v1595 = vpop.permute.xlu0 %1594
  %1596 = vrot.lane.b32.xlu0 %v1580, 109
  %v1597 = vpop.permute.xlu0 %1596
  %1598 = vrot.lane.b32.xlu0 %v1581, 109
  %v1599 = vpop.permute.xlu0 %1598
  %vm1600 = vcmask 891904
  %v1601 = vsel %vm1600, %v1589, %v1591
  %v1602 = vsel %vm1600, %v1591, %v1593
  %v1603 = vsel %vm1600, %v1593, %v1595
  %v1604 = vsel %vm1600, %v1595, %v1597
  %v1605 = vsel %vm1600, %v1597, %v1599
  %v1607 = vsel %vm101, %v1566, 0
  %v1610 = vsel %vm105, %v1601, 0
  %v1613 = vsel %vm105, %v1602, 0
  %v1616 = vsel %vm105, %v1603, 0
  %v1619 = vsel %vm105, %v1604, 0
  %v1622 = vsel %vm105, %v1605, 0
  %v1625 = vsel %vm105, %v1599, 0
  %1627 = vmatprep.subr.bf16.mxu0 %v1613
  %1628 = vmatpush1.bf16.msra.mxu0 %v1610
  %1629 = vmatprep.subr.bf16.mxu0 0
  %1630 = vmatpush1.bf16.msra.mxu0 0
  %1631 = vmatprep.subr.bf16.mxu0 0
  %1632 = vmatpush1.bf16.msra.mxu0 0
  %1633 = vmatprep.subr.bf16.mxu0 0
  %1634 = vmatpush1.bf16.msra.mxu0 0
  %1635 = vmatprep.subr.bf16.mxu0 0
  %1636 = vmatpush1.bf16.msra.mxu0 0
  %1637 = vmatprep.subr.bf16.mxu0 0
  %1638 = vmatpush1.bf16.msra.mxu0 0
  %1639 = vmatprep.subr.bf16.mxu0 0
  %1640 = vmatpush1.bf16.msra.mxu0 0
  %1641 = vmatprep.subr.bf16.mxu0 0
  %1642 = vmatpush1.bf16.msra.mxu0 0
  %1643 = vmatprep.subr.bf16.mxu0 0
  %1644 = vmatpush1.bf16.msra.mxu0 0
  %1645 = vmatprep.subr.bf16.mxu0 0
  %1646 = vmatpush1.bf16.msra.mxu0 0
  %1647 = vmatprep.subr.bf16.mxu0 0
  %1648 = vmatpush1.bf16.msra.mxu0 0
  %1649 = vmatprep.subr.bf16.mxu0 0
  %1650 = vmatpush1.bf16.msra.mxu0 0
  %1651 = vmatprep.subr.bf16.mxu0 0
  %1652 = vmatpush1.bf16.msra.mxu0 0
  %1653 = vmatprep.subr.bf16.mxu0 0
  %1654 = vmatpush1.bf16.msra.mxu0 0
  %1655 = vmatprep.subr.bf16.mxu0 0
  %1656 = vmatpush1.bf16.msra.mxu0 0
  %1657 = vmatprep.subr.bf16.mxu0 0
  %1658 = vmatpush1.bf16.msra.mxu0 0
  %1659 = vmatprep.mubr.bf16.mxu0 0
  %1660 = vmatmul.mubr.bf16.gmra.mrb[0].mxu0 %v1607
  %v1661 = vpop.f32.mrb[0].mxu0
  %v1662 = vadd.f32 0.0, %v1661
  %v1663 = vpop.f32.mrb[0].mxu0
  %v1664 = vadd.f32 0.0, %v1663
  %v1665 = vpop.f32.mrb[0].mxu0
  %v1666 = vpop.f32.mrb[0].mxu0
  %1667 = vdwg.mxu0
  %1668 = vmatprep.subr.bf16.mxu0 %v1619
  %1669 = vmatpush1.bf16.msra.mxu0 %v1616
  %1670 = vmatprep.subr.bf16.mxu0 0
  %1671 = vmatpush1.bf16.msra.mxu0 0
  %1672 = vmatprep.subr.bf16.mxu0 0
  %1673 = vmatpush1.bf16.msra.mxu0 0
  %1674 = vmatprep.subr.bf16.mxu0 0
  %1675 = vmatpush1.bf16.msra.mxu0 0
  %1676 = vmatprep.subr.bf16.mxu0 0
  %1677 = vmatpush1.bf16.msra.mxu0 0
  %1678 = vmatprep.subr.bf16.mxu0 0
  %1679 = vmatpush1.bf16.msra.mxu0 0
  %1680 = vmatprep.subr.bf16.mxu0 0
  %1681 = vmatpush1.bf16.msra.mxu0 0
  %1682 = vmatprep.subr.bf16.mxu0 0
  %1683 = vmatpush1.bf16.msra.mxu0 0
  %1684 = vmatprep.subr.bf16.mxu0 0
  %1685 = vmatpush1.bf16.msra.mxu0 0
  %1686 = vmatprep.subr.bf16.mxu0 0
  %1687 = vmatpush1.bf16.msra.mxu0 0
  %1688 = vmatprep.subr.bf16.mxu0 0
  %1689 = vmatpush1.bf16.msra.mxu0 0
  %1690 = vmatprep.subr.bf16.mxu0 0
  %1691 = vmatpush1.bf16.msra.mxu0 0
  %1692 = vmatprep.subr.bf16.mxu0 0
  %1693 = vmatpush1.bf16.msra.mxu0 0
  %1694 = vmatprep.subr.bf16.mxu0 0
  %1695 = vmatpush1.bf16.msra.mxu0 0
  %1696 = vmatprep.subr.bf16.mxu0 0
  %1697 = vmatpush1.bf16.msra.mxu0 0
  %1698 = vmatprep.subr.bf16.mxu0 0
  %1699 = vmatpush1.bf16.msra.mxu0 0
  %1700 = vmatprep.mubr.bf16.mxu0 0
  %1701 = vmatmul.mubr.bf16.gmra.mrb[0].mxu0 %v1607
  %v1702 = vpop.f32.mrb[0].mxu0
  %v1703 = vadd.f32 0.0, %v1702
  %v1704 = vpop.f32.mrb[0].mxu0
  %v1705 = vadd.f32 0.0, %v1704
  %v1706 = vpop.f32.mrb[0].mxu0
  %v1707 = vpop.f32.mrb[0].mxu0
  %1708 = vdwg.mxu0
  %1709 = vmatprep.subr.bf16.mxu0 %v1625
  %1710 = vmatpush1.bf16.msra.mxu0 %v1622
  %1711 = vmatprep.subr.bf16.mxu0 0
  %1712 = vmatpush1.bf16.msra.mxu0 0
  %1713 = vmatprep.subr.bf16.mxu0 0
  %1714 = vmatpush1.bf16.msra.mxu0 0
  %1715 = vmatprep.subr.bf16.mxu0 0
  %1716 = vmatpush1.bf16.msra.mxu0 0
  %1717 = vmatprep.subr.bf16.mxu0 0
  %1718 = vmatpush1.bf16.msra.mxu0 0
  %1719 = vmatprep.subr.bf16.mxu0 0
  %1720 = vmatpush1.bf16.msra.mxu0 0
  %1721 = vmatprep.subr.bf16.mxu0 0
  %1722 = vmatpush1.bf16.msra.mxu0 0
  %1723 = vmatprep.subr.bf16.mxu0 0
  %1724 = vmatpush1.bf16.msra.mxu0 0
  %1725 = vmatprep.subr.bf16.mxu0 0
  %1726 = vmatpush1.bf16.msra.mxu0 0
  %1727 = vmatprep.subr.bf16.mxu0 0
  %1728 = vmatpush1.bf16.msra.mxu0 0
  %1729 = vmatprep.subr.bf16.mxu0 0
  %1730 = vmatpush1.bf16.msra.mxu0 0
  %1731 = vmatprep.subr.bf16.mxu0 0
  %1732 = vmatpush1.bf16.msra.mxu0 0
  %1733 = vmatprep.subr.bf16.mxu0 0
  %1734 = vmatpush1.bf16.msra.mxu0 0
  %1735 = vmatprep.subr.bf16.mxu0 0
  %1736 = vmatpush1.bf16.msra.mxu0 0
  %1737 = vmatprep.subr.bf16.mxu0 0
  %1738 = vmatpush1.bf16.msra.mxu0 0
  %1739 = vmatprep.subr.bf16.mxu0 0
  %1740 = vmatpush1.bf16.msra.mxu0 0
  %1741 = vmatprep.mubr.bf16.mxu0 0
  %1742 = vmatmul.mubr.bf16.gmra.mrb[0].mxu0 %v1607
  %v1743 = vpop.f32.mrb[0].mxu0
  %v1744 = vadd.f32 0.0, %v1743
  %v1745 = vpop.f32.mrb[0].mxu0
  %v1746 = vadd.f32 0.0, %v1745
  %v1747 = vpop.f32.mrb[0].mxu0
  %v1748 = vpop.f32.mrb[0].mxu0
  %1749 = vdwg.mxu0
  %v1750 = vadd.f32 %v1555, %v1662
  %v1751 = vadd.f32 %v1556, %v1664
  %v1752 = vadd.f32 %v1557, %v1703
  %v1753 = vadd.f32 %v1558, %v1705
  %v1754 = vadd.f32 %v1559, %v1744
  %v1755 = vadd.f32 %v1560, %v1746
  %v1756 = vld [vmem:[%s3] sm:$0xff]
  %1758 = vset.pattern.permute.xlu0 0
  %1759 = vperm.xlu0 %1758, %v1756
  %v1760 = vpop.permute.xlu0 %1759
  %v1762 = vadd.f32 %v1750, %v1760
  %v1763 = vadd.f32 %v1751, %v1760
  %v1764 = vadd.f32 %v1752, %v1760
  %v1765 = vadd.f32 %v1753, %v1760
  %v1766 = vadd.f32 %v1754, %v1760
  %v1767 = vadd.f32 %v1755, %v1760
  %v1769 = vlaneseq
  %v1770 = vshrl.u32 %v1769, 7
  %v1771 = vsub.s32 0, %v1770
  %v1772 = vrot.slane %v53, %v1771
  %v1773 = vlaneseq
  %v1774 = vshrl.u32 %v1773, 7
  %v1775 = vsub.s32 1, %v1774
  %v1776 = vrot.slane %v53, %v1775
  %v1777 = vlaneseq
  %v1778 = vshrl.u32 %v1777, 7
  %v1779 = vsub.s32 2, %v1778
  %v1780 = vrot.slane %v53, %v1779
  %v1781 = vlaneseq
  %v1782 = vshrl.u32 %v1781, 7
  %v1783 = vsub.s32 3, %v1782
  %v1784 = vrot.slane %v53, %v1783
  %v1785 = vlaneseq
  %v1786 = vshrl.u32 %v1785, 7
  %v1787 = vsub.s32 4, %v1786
  %v1788 = vrot.slane %v53, %v1787
  %v1789 = vlaneseq
  %v1790 = vshrl.u32 %v1789, 7
  %v1791 = vsub.s32 5, %v1790
  %v1792 = vrot.slane %v53, %v1791
  %v1799 = vmul.f32 %v1762, %v1772
  %v1800 = vmul.f32 %v1763, %v1776
  %v1801 = vmul.f32 %v1764, %v1780
  %v1802 = vmul.f32 %v1765, %v1784
  %v1803 = vmul.f32 %v1766, %v1788
  %v1804 = vmul.f32 %v1767, %v1792
  %v1805 = vmax.f32 %v1799, 0.0
  %v1806 = vmax.f32 %v1800, 0.0
  %v1807 = vmax.f32 %v1801, 0.0
  %v1808 = vmax.f32 %v1802, 0.0
  %v1809 = vmax.f32 %v1803, 0.0
  %v1810 = vmax.f32 %v1804, 0.0
  %1811 = vst [vmem:[#allocation2 + $0x8] sm:$0xff] %v1805
  %1812 = vst [vmem:[#allocation2 + $0x10] sm:$0xff] %v1806
  %1813 = vst [vmem:[#allocation2 + $0x18] sm:$0xff] %v1807
  %1814 = vst [vmem:[#allocation2 + $0x20] sm:$0xff] %v1808
  %1815 = vst [vmem:[#allocation2 + $0x28] sm:$0xff] %v1809
  %vm1816 = vcmask 64512
  %1817 = vst.msk [vmem:[#allocation2 + $0x30] sm:$0xff] %vm1816, %v1810
  %v1818 = vld [vmem:[#allocation2] sm:$0xff]
  %v1819 = vld [vmem:[#allocation2 + $0x8] sm:$0xff]
  %v1820 = vld [vmem:[#allocation2 + $0x10] sm:$0xff]
  %v1821 = vld [vmem:[#allocation2 + $0x18] sm:$0xff]
  %v1822 = vld [vmem:[#allocation2 + $0x20] sm:$0xff]
  %v1823 = vld [vmem:[#allocation2 + $0x28] sm:$0xff]
  %v1824 = vld [vmem:[%s4] sm:$0xff]
  %v1825 = vpack.c.bf16 %v1824, %v1824
  %v1826 = vpack.c.bf16 %v1818, %v1818
  %v1827 = vpack.c.bf16 %v1819, %v1819
  %v1828 = vpack.c.bf16 %v1820, %v1820
  %v1829 = vpack.c.bf16 %v1821, %v1821
  %v1830 = vpack.c.bf16 %v1822, %v1822
  %v1831 = vpack.c.bf16 %v1823, %v1823
  %s1832 = scalar_lea.vmem %s4, 8
  %v1833 = vld [vmem:[%s1832] sm:$0xff]
  %v1834 = vpack.c.bf16 %v1833, %v1833
  %1841 = vrot.lane.b32.xlu0 %v1826, 18
  %v1842 = vpop.permute.xlu0 %1841
  %1843 = vrot.lane.b32.xlu0 %v1827, 18
  %v1844 = vpop.permute.xlu0 %1843
  %1845 = vrot.lane.b32.xlu0 %v1828, 18
  %v1846 = vpop.permute.xlu0 %1845
  %1847 = vrot.lane.b32.xlu0 %v1829, 18
  %v1848 = vpop.permute.xlu0 %1847
  %1849 = vrot.lane.b32.xlu0 %v1830, 18
  %v1850 = vpop.permute.xlu0 %1849
  %1851 = vrot.lane.b32.xlu0 %v1831, 18
  %v1852 = vpop.permute.xlu0 %1851
  %v1853 = vsel %vm95, %v1842, %v1844
  %v1854 = vsel %vm95, %v1844, %v1846
  %v1855 = vsel %vm95, %v1846, %v1848
  %v1856 = vsel %vm95, %v1848, %v1850
  %v1857 = vsel %vm95, %v1850, %v1852
  %v1859 = vsel %vm1816, %v1834, 0
  %vm1861 = vcmask 1043456
  %v1863 = vsel %vm1861, %v1853, 0
  %v1866 = vsel %vm1861, %v1854, 0
  %v1869 = vsel %vm1861, %v1855, 0
  %v1872 = vsel %vm1861, %v1856, 0
  %v1875 = vsel %vm1861, %v1857, 0
  %v1878 = vsel %vm1861, %v1852, 0
  %1880 = vmatprep.subr.bf16.mxu0 %v1866
  %1881 = vmatpush1.bf16.msra.mxu0 %v1863
  %1882 = vmatprep.subr.bf16.mxu0 0
  %1883 = vmatpush1.bf16.msra.mxu0 0
  %1884 = vmatprep.subr.bf16.mxu0 0
  %1885 = vmatpush1.bf16.msra.mxu0 0
  %1886 = vmatprep.subr.bf16.mxu0 0
  %1887 = vmatpush1.bf16.msra.mxu0 0
  %1888 = vmatprep.subr.bf16.mxu0 0
  %1889 = vmatpush1.bf16.msra.mxu0 0
  %1890 = vmatprep.subr.bf16.mxu0 0
  %1891 = vmatpush1.bf16.msra.mxu0 0
  %1892 = vmatprep.subr.bf16.mxu0 0
  %1893 = vmatpush1.bf16.msra.mxu0 0
  %1894 = vmatprep.subr.bf16.mxu0 0
  %1895 = vmatpush1.bf16.msra.mxu0 0
  %1896 = vmatprep.subr.bf16.mxu0 0
  %1897 = vmatpush1.bf16.msra.mxu0 0
  %1898 = vmatprep.subr.bf16.mxu0 0
  %1899 = vmatpush1.bf16.msra.mxu0 0
  %1900 = vmatprep.subr.bf16.mxu0 0
  %1901 = vmatpush1.bf16.msra.mxu0 0
  %1902 = vmatprep.subr.bf16.mxu0 0
  %1903 = vmatpush1.bf16.msra.mxu0 0
  %1904 = vmatprep.subr.bf16.mxu0 0
  %1905 = vmatpush1.bf16.msra.mxu0 0
  %1906 = vmatprep.subr.bf16.mxu0 0
  %1907 = vmatpush1.bf16.msra.mxu0 0
  %1908 = vmatprep.subr.bf16.mxu0 0
  %1909 = vmatpush1.bf16.msra.mxu0 0
  %1910 = vmatprep.subr.bf16.mxu0 0
  %1911 = vmatpush1.bf16.msra.mxu0 0
  %1912 = vmatprep.mubr.bf16.mxu0 0
  %1913 = vmatmul.mubr.bf16.gmra.mrb[0].mxu0 %v1859
  %v1914 = vpop.f32.mrb[0].mxu0
  %v1915 = vadd.f32 0.0, %v1914
  %v1916 = vpop.f32.mrb[0].mxu0
  %v1917 = vadd.f32 0.0, %v1916
  %v1918 = vpop.f32.mrb[0].mxu0
  %v1919 = vpop.f32.mrb[0].mxu0
  %1920 = vdwg.mxu0
  %1921 = vmatprep.subr.bf16.mxu0 %v1872
  %1922 = vmatpush1.bf16.msra.mxu0 %v1869
  %1923 = vmatprep.subr.bf16.mxu0 0
  %1924 = vmatpush1.bf16.msra.mxu0 0
  %1925 = vmatprep.subr.bf16.mxu0 0
  %1926 = vmatpush1.bf16.msra.mxu0 0
  %1927 = vmatprep.subr.bf16.mxu0 0
  %1928 = vmatpush1.bf16.msra.mxu0 0
  %1929 = vmatprep.subr.bf16.mxu0 0
  %1930 = vmatpush1.bf16.msra.mxu0 0
  %1931 = vmatprep.subr.bf16.mxu0 0
  %1932 = vmatpush1.bf16.msra.mxu0 0
  %1933 = vmatprep.subr.bf16.mxu0 0
  %1934 = vmatpush1.bf16.msra.mxu0 0
  %1935 = vmatprep.subr.bf16.mxu0 0
  %1936 = vmatpush1.bf16.msra.mxu0 0
  %1937 = vmatprep.subr.bf16.mxu0 0
  %1938 = vmatpush1.bf16.msra.mxu0 0
  %1939 = vmatprep.subr.bf16.mxu0 0
  %1940 = vmatpush1.bf16.msra.mxu0 0
  %1941 = vmatprep.subr.bf16.mxu0 0
  %1942 = vmatpush1.bf16.msra.mxu0 0
  %1943 = vmatprep.subr.bf16.mxu0 0
  %1944 = vmatpush1.bf16.msra.mxu0 0
  %1945 = vmatprep.subr.bf16.mxu0 0
  %1946 = vmatpush1.bf16.msra.mxu0 0
  %1947 = vmatprep.subr.bf16.mxu0 0
  %1948 = vmatpush1.bf16.msra.mxu0 0
  %1949 = vmatprep.subr.bf16.mxu0 0
  %1950 = vmatpush1.bf16.msra.mxu0 0
  %1951 = vmatprep.subr.bf16.mxu0 0
  %1952 = vmatpush1.bf16.msra.mxu0 0
  %1953 = vmatprep.mubr.bf16.mxu0 0
  %1954 = vmatmul.mubr.bf16.gmra.mrb[0].mxu0 %v1859
  %v1955 = vpop.f32.mrb[0].mxu0
  %v1956 = vadd.f32 0.0, %v1955
  %v1957 = vpop.f32.mrb[0].mxu0
  %v1958 = vadd.f32 0.0, %v1957
  %v1959 = vpop.f32.mrb[0].mxu0
  %v1960 = vpop.f32.mrb[0].mxu0
  %1961 = vdwg.mxu0
  %1962 = vmatprep.subr.bf16.mxu0 %v1878
  %1963 = vmatpush1.bf16.msra.mxu0 %v1875
  %1964 = vmatprep.subr.bf16.mxu0 0
  %1965 = vmatpush1.bf16.msra.mxu0 0
  %1966 = vmatprep.subr.bf16.mxu0 0
  %1967 = vmatpush1.bf16.msra.mxu0 0
  %1968 = vmatprep.subr.bf16.mxu0 0
  %1969 = vmatpush1.bf16.msra.mxu0 0
  %1970 = vmatprep.subr.bf16.mxu0 0
  %1971 = vmatpush1.bf16.msra.mxu0 0
  %1972 = vmatprep.subr.bf16.mxu0 0
  %1973 = vmatpush1.bf16.msra.mxu0 0
  %1974 = vmatprep.subr.bf16.mxu0 0
  %1975 = vmatpush1.bf16.msra.mxu0 0
  %1976 = vmatprep.subr.bf16.mxu0 0
  %1977 = vmatpush1.bf16.msra.mxu0 0
  %1978 = vmatprep.subr.bf16.mxu0 0
  %1979 = vmatpush1.bf16.msra.mxu0 0
  %1980 = vmatprep.subr.bf16.mxu0 0
  %1981 = vmatpush1.bf16.msra.mxu0 0
  %1982 = vmatprep.subr.bf16.mxu0 0
  %1983 = vmatpush1.bf16.msra.mxu0 0
  %1984 = vmatprep.subr.bf16.mxu0 0
  %1985 = vmatpush1.bf16.msra.mxu0 0
  %1986 = vmatprep.subr.bf16.mxu0 0
  %1987 = vmatpush1.bf16.msra.mxu0 0
  %1988 = vmatprep.subr.bf16.mxu0 0
  %1989 = vmatpush1.bf16.msra.mxu0 0
  %1990 = vmatprep.subr.bf16.mxu0 0
  %1991 = vmatpush1.bf16.msra.mxu0 0
  %1992 = vmatprep.subr.bf16.mxu0 0
  %1993 = vmatpush1.bf16.msra.mxu0 0
  %1994 = vmatprep.mubr.bf16.mxu0 0
  %1995 = vmatmul.mubr.bf16.gmra.mrb[0].mxu0 %v1859
  %v1996 = vpop.f32.mrb[0].mxu0
  %v1997 = vadd.f32 0.0, %v1996
  %v1998 = vpop.f32.mrb[0].mxu0
  %v1999 = vadd.f32 0.0, %v1998
  %v2000 = vpop.f32.mrb[0].mxu0
  %v2001 = vpop.f32.mrb[0].mxu0
  %2002 = vdwg.mxu0
  %2003 = vrot.lane.b32.xlu0 %v1826, 19
  %v2004 = vpop.permute.xlu0 %2003
  %2005 = vrot.lane.b32.xlu0 %v1827, 19
  %v2006 = vpop.permute.xlu0 %2005
  %2007 = vrot.lane.b32.xlu0 %v1828, 19
  %v2008 = vpop.permute.xlu0 %2007
  %2009 = vrot.lane.b32.xlu0 %v1829, 19
  %v2010 = vpop.permute.xlu0 %2009
  %2011 = vrot.lane.b32.xlu0 %v1830, 19
  %v2012 = vpop.permute.xlu0 %2011
  %2013 = vrot.lane.b32.xlu0 %v1831, 19
  %v2014 = vpop.permute.xlu0 %2013
  %v2015 = vsel %vm259, %v2004, %v2006
  %v2016 = vsel %vm259, %v2006, %v2008
  %v2017 = vsel %vm259, %v2008, %v2010
  %v2018 = vsel %vm259, %v2010, %v2012
  %v2019 = vsel %vm259, %v2012, %v2014
  %v2021 = vsel %vm1816, %v1825, 0
  %v2024 = vsel %vm1861, %v2015, 0
  %v2027 = vsel %vm1861, %v2016, 0
  %v2030 = vsel %vm1861, %v2017, 0
  %v2033 = vsel %vm1861, %v2018, 0
  %v2036 = vsel %vm1861, %v2019, 0
  %v2039 = vsel %vm1861, %v2014, 0
  %2041 = vmatprep.subr.bf16.mxu0 %v2027
  %2042 = vmatpush1.bf16.msra.mxu0 %v2024
  %2043 = vmatprep.subr.bf16.mxu0 0
  %2044 = vmatpush1.bf16.msra.mxu0 0
  %2045 = vmatprep.subr.bf16.mxu0 0
  %2046 = vmatpush1.bf16.msra.mxu0 0
  %2047 = vmatprep.subr.bf16.mxu0 0
  %2048 = vmatpush1.bf16.msra.mxu0 0
  %2049 = vmatprep.subr.bf16.mxu0 0
  %2050 = vmatpush1.bf16.msra.mxu0 0
  %2051 = vmatprep.subr.bf16.mxu0 0
  %2052 = vmatpush1.bf16.msra.mxu0 0
  %2053 = vmatprep.subr.bf16.mxu0 0
  %2054 = vmatpush1.bf16.msra.mxu0 0
  %2055 = vmatprep.subr.bf16.mxu0 0
  %2056 = vmatpush1.bf16.msra.mxu0 0
  %2057 = vmatprep.subr.bf16.mxu0 0
  %2058 = vmatpush1.bf16.msra.mxu0 0
  %2059 = vmatprep.subr.bf16.mxu0 0
  %2060 = vmatpush1.bf16.msra.mxu0 0
  %2061 = vmatprep.subr.bf16.mxu0 0
  %2062 = vmatpush1.bf16.msra.mxu0 0
  %2063 = vmatprep.subr.bf16.mxu0 0
  %2064 = vmatpush1.bf16.msra.mxu0 0
  %2065 = vmatprep.subr.bf16.mxu0 0
  %2066 = vmatpush1.bf16.msra.mxu0 0
  %2067 = vmatprep.subr.bf16.mxu0 0
  %2068 = vmatpush1.bf16.msra.mxu0 0
  %2069 = vmatprep.subr.bf16.mxu0 0
  %2070 = vmatpush1.bf16.msra.mxu0 0
  %2071 = vmatprep.subr.bf16.mxu0 0
  %2072 = vmatpush1.bf16.msra.mxu0 0
  %2073 = vmatprep.mubr.bf16.mxu0 0
  %2074 = vmatmul.mubr.bf16.gmra.mrb[0].mxu0 %v2021
  %v2075 = vpop.f32.mrb[0].mxu0
  %v2076 = vadd.f32 %v1915, %v2075
  %v2077 = vpop.f32.mrb[0].mxu0
  %v2078 = vadd.f32 %v1917, %v2077
  %v2079 = vpop.f32.mrb[0].mxu0
  %v2080 = vpop.f32.mrb[0].mxu0
  %2081 = vdwg.mxu0
  %2082 = vmatprep.subr.bf16.mxu0 %v2033
  %2083 = vmatpush1.bf16.msra.mxu0 %v2030
  %2084 = vmatprep.subr.bf16.mxu0 0
  %2085 = vmatpush1.bf16.msra.mxu0 0
  %2086 = vmatprep.subr.bf16.mxu0 0
  %2087 = vmatpush1.bf16.msra.mxu0 0
  %2088 = vmatprep.subr.bf16.mxu0 0
  %2089 = vmatpush1.bf16.msra.mxu0 0
  %2090 = vmatprep.subr.bf16.mxu0 0
  %2091 = vmatpush1.bf16.msra.mxu0 0
  %2092 = vmatprep.subr.bf16.mxu0 0
  %2093 = vmatpush1.bf16.msra.mxu0 0
  %2094 = vmatprep.subr.bf16.mxu0 0
  %2095 = vmatpush1.bf16.msra.mxu0 0
  %2096 = vmatprep.subr.bf16.mxu0 0
  %2097 = vmatpush1.bf16.msra.mxu0 0
  %2098 = vmatprep.subr.bf16.mxu0 0
  %2099 = vmatpush1.bf16.msra.mxu0 0
  %2100 = vmatprep.subr.bf16.mxu0 0
  %2101 = vmatpush1.bf16.msra.mxu0 0
  %2102 = vmatprep.subr.bf16.mxu0 0
  %2103 = vmatpush1.bf16.msra.mxu0 0
  %2104 = vmatprep.subr.bf16.mxu0 0
  %2105 = vmatpush1.bf16.msra.mxu0 0
  %2106 = vmatprep.subr.bf16.mxu0 0
  %2107 = vmatpush1.bf16.msra.mxu0 0
  %2108 = vmatprep.subr.bf16.mxu0 0
  %2109 = vmatpush1.bf16.msra.mxu0 0
  %2110 = vmatprep.subr.bf16.mxu0 0
  %2111 = vmatpush1.bf16.msra.mxu0 0
  %2112 = vmatprep.subr.bf16.mxu0 0
  %2113 = vmatpush1.bf16.msra.mxu0 0
  %2114 = vmatprep.mubr.bf16.mxu0 0
  %2115 = vmatmul.mubr.bf16.gmra.mrb[0].mxu0 %v2021
  %v2116 = vpop.f32.mrb[0].mxu0
  %v2117 = vadd.f32 %v1956, %v2116
  %v2118 = vpop.f32.mrb[0].mxu0
  %v2119 = vadd.f32 %v1958, %v2118
  %v2120 = vpop.f32.mrb[0].mxu0
  %v2121 = vpop.f32.mrb[0].mxu0
  %2122 = vdwg.mxu0
  %2123 = vmatprep.subr.bf16.mxu0 %v2039
  %2124 = vmatpush1.bf16.msra.mxu0 %v2036
  %2125 = vmatprep.subr.bf16.mxu0 0
  %2126 = vmatpush1.bf16.msra.mxu0 0
  %2127 = vmatprep.subr.bf16.mxu0 0
  %2128 = vmatpush1.bf16.msra.mxu0 0
  %2129 = vmatprep.subr.bf16.mxu0 0
  %2130 = vmatpush1.bf16.msra.mxu0 0
  %2131 = vmatprep.subr.bf16.mxu0 0
  %2132 = vmatpush1.bf16.msra.mxu0 0
  %2133 = vmatprep.subr.bf16.mxu0 0
  %2134 = vmatpush1.bf16.msra.mxu0 0
  %2135 = vmatprep.subr.bf16.mxu0 0
  %2136 = vmatpush1.bf16.msra.mxu0 0
  %2137 = vmatprep.subr.bf16.mxu0 0
  %2138 = vmatpush1.bf16.msra.mxu0 0
  %2139 = vmatprep.subr.bf16.mxu0 0
  %2140 = vmatpush1.bf16.msra.mxu0 0
  %2141 = vmatprep.subr.bf16.mxu0 0
  %2142 = vmatpush1.bf16.msra.mxu0 0
  %2143 = vmatprep.subr.bf16.mxu0 0
  %2144 = vmatpush1.bf16.msra.mxu0 0
  %2145 = vmatprep.subr.bf16.mxu0 0
  %2146 = vmatpush1.bf16.msra.mxu0 0
  %2147 = vmatprep.subr.bf16.mxu0 0
  %2148 = vmatpush1.bf16.msra.mxu0 0
  %2149 = vmatprep.subr.bf16.mxu0 0
  %2150 = vmatpush1.bf16.msra.mxu0 0
  %2151 = vmatprep.subr.bf16.mxu0 0
  %2152 = vmatpush1.bf16.msra.mxu0 0
  %2153 = vmatprep.subr.bf16.mxu0 0
  %2154 = vmatpush1.bf16.msra.mxu0 0
  %2155 = vmatprep.mubr.bf16.mxu0 0
  %2156 = vmatmul.mubr.bf16.gmra.mrb[0].mxu0 %v2021
  %v2157 = vpop.f32.mrb[0].mxu0
  %v2158 = vadd.f32 %v1997, %v2157
  %v2159 = vpop.f32.mrb[0].mxu0
  %v2160 = vadd.f32 %v1999, %v2159
  %v2161 = vpop.f32.mrb[0].mxu0
  %v2162 = vpop.f32.mrb[0].mxu0
  %2163 = vdwg.mxu0
  %s2164 = scalar_lea.vmem %s4, 16
  %v2165 = vld [vmem:[%s2164] sm:$0xff]
  %v2166 = vpack.c.bf16 %v2165, %v2165
  %2167 = vrot.lane.b32.xlu0 %v1826, 17
  %v2168 = vpop.permute.xlu0 %2167
  %2169 = vrot.lane.b32.xlu0 %v1827, 17
  %v2170 = vpop.permute.xlu0 %2169
  %2171 = vrot.lane.b32.xlu0 %v1828, 17
  %v2172 = vpop.permute.xlu0 %2171
  %2173 = vrot.lane.b32.xlu0 %v1829, 17
  %v2174 = vpop.permute.xlu0 %2173
  %2175 = vrot.lane.b32.xlu0 %v1830, 17
  %v2176 = vpop.permute.xlu0 %2175
  %2177 = vrot.lane.b32.xlu0 %v1831, 17
  %v2178 = vpop.permute.xlu0 %2177
  %v2179 = vsel %vm448, %v2168, %v2170
  %v2180 = vsel %vm448, %v2170, %v2172
  %v2181 = vsel %vm448, %v2172, %v2174
  %v2182 = vsel %vm448, %v2174, %v2176
  %v2183 = vsel %vm448, %v2176, %v2178
  %v2185 = vsel %vm1816, %v2166, 0
  %v2188 = vsel %vm1861, %v2179, 0
  %v2191 = vsel %vm1861, %v2180, 0
  %v2194 = vsel %vm1861, %v2181, 0
  %v2197 = vsel %vm1861, %v2182, 0
  %v2200 = vsel %vm1861, %v2183, 0
  %v2203 = vsel %vm1861, %v2178, 0
  %2205 = vmatprep.subr.bf16.mxu0 %v2191
  %2206 = vmatpush1.bf16.msra.mxu0 %v2188
  %2207 = vmatprep.subr.bf16.mxu0 0
  %2208 = vmatpush1.bf16.msra.mxu0 0
  %2209 = vmatprep.subr.bf16.mxu0 0
  %2210 = vmatpush1.bf16.msra.mxu0 0
  %2211 = vmatprep.subr.bf16.mxu0 0
  %2212 = vmatpush1.bf16.msra.mxu0 0
  %2213 = vmatprep.subr.bf16.mxu0 0
  %2214 = vmatpush1.bf16.msra.mxu0 0
  %2215 = vmatprep.subr.bf16.mxu0 0
  %2216 = vmatpush1.bf16.msra.mxu0 0
  %2217 = vmatprep.subr.bf16.mxu0 0
  %2218 = vmatpush1.bf16.msra.mxu0 0
  %2219 = vmatprep.subr.bf16.mxu0 0
  %2220 = vmatpush1.bf16.msra.mxu0 0
  %2221 = vmatprep.subr.bf16.mxu0 0
  %2222 = vmatpush1.bf16.msra.mxu0 0
  %2223 = vmatprep.subr.bf16.mxu0 0
  %2224 = vmatpush1.bf16.msra.mxu0 0
  %2225 = vmatprep.subr.bf16.mxu0 0
  %2226 = vmatpush1.bf16.msra.mxu0 0
  %2227 = vmatprep.subr.bf16.mxu0 0
  %2228 = vmatpush1.bf16.msra.mxu0 0
  %2229 = vmatprep.subr.bf16.mxu0 0
  %2230 = vmatpush1.bf16.msra.mxu0 0
  %2231 = vmatprep.subr.bf16.mxu0 0
  %2232 = vmatpush1.bf16.msra.mxu0 0
  %2233 = vmatprep.subr.bf16.mxu0 0
  %2234 = vmatpush1.bf16.msra.mxu0 0
  %2235 = vmatprep.subr.bf16.mxu0 0
  %2236 = vmatpush1.bf16.msra.mxu0 0
  %2237 = vmatprep.mubr.bf16.mxu0 0
  %2238 = vmatmul.mubr.bf16.gmra.mrb[0].mxu0 %v2185
  %v2239 = vpop.f32.mrb[0].mxu0
  %v2240 = vadd.f32 0.0, %v2239
  %v2241 = vpop.f32.mrb[0].mxu0
  %v2242 = vadd.f32 0.0, %v2241
  %v2243 = vpop.f32.mrb[0].mxu0
  %v2244 = vpop.f32.mrb[0].mxu0
  %2245 = vdwg.mxu0
  %2246 = vmatprep.subr.bf16.mxu0 %v2197
  %2247 = vmatpush1.bf16.msra.mxu0 %v2194
  %2248 = vmatprep.subr.bf16.mxu0 0
  %2249 = vmatpush1.bf16.msra.mxu0 0
  %2250 = vmatprep.subr.bf16.mxu0 0
  %2251 = vmatpush1.bf16.msra.mxu0 0
  %2252 = vmatprep.subr.bf16.mxu0 0
  %2253 = vmatpush1.bf16.msra.mxu0 0
  %2254 = vmatprep.subr.bf16.mxu0 0
  %2255 = vmatpush1.bf16.msra.mxu0 0
  %2256 = vmatprep.subr.bf16.mxu0 0
  %2257 = vmatpush1.bf16.msra.mxu0 0
  %2258 = vmatprep.subr.bf16.mxu0 0
  %2259 = vmatpush1.bf16.msra.mxu0 0
  %2260 = vmatprep.subr.bf16.mxu0 0
  %2261 = vmatpush1.bf16.msra.mxu0 0
  %2262 = vmatprep.subr.bf16.mxu0 0
  %2263 = vmatpush1.bf16.msra.mxu0 0
  %2264 = vmatprep.subr.bf16.mxu0 0
  %2265 = vmatpush1.bf16.msra.mxu0 0
  %2266 = vmatprep.subr.bf16.mxu0 0
  %2267 = vmatpush1.bf16.msra.mxu0 0
  %2268 = vmatprep.subr.bf16.mxu0 0
  %2269 = vmatpush1.bf16.msra.mxu0 0
  %2270 = vmatprep.subr.bf16.mxu0 0
  %2271 = vmatpush1.bf16.msra.mxu0 0
  %2272 = vmatprep.subr.bf16.mxu0 0
  %2273 = vmatpush1.bf16.msra.mxu0 0
  %2274 = vmatprep.subr.bf16.mxu0 0
  %2275 = vmatpush1.bf16.msra.mxu0 0
  %2276 = vmatprep.subr.bf16.mxu0 0
  %2277 = vmatpush1.bf16.msra.mxu0 0
  %2278 = vmatprep.mubr.bf16.mxu0 0
  %2279 = vmatmul.mubr.bf16.gmra.mrb[0].mxu0 %v2185
  %v2280 = vpop.f32.mrb[0].mxu0
  %v2281 = vadd.f32 0.0, %v2280
  %v2282 = vpop.f32.mrb[0].mxu0
  %v2283 = vadd.f32 0.0, %v2282
  %v2284 = vpop.f32.mrb[0].mxu0
  %v2285 = vpop.f32.mrb[0].mxu0
  %2286 = vdwg.mxu0
  %2287 = vmatprep.subr.bf16.mxu0 %v2203
  %2288 = vmatpush1.bf16.msra.mxu0 %v2200
  %2289 = vmatprep.subr.bf16.mxu0 0
  %2290 = vmatpush1.bf16.msra.mxu0 0
  %2291 = vmatprep.subr.bf16.mxu0 0
  %2292 = vmatpush1.bf16.msra.mxu0 0
  %2293 = vmatprep.subr.bf16.mxu0 0
  %2294 = vmatpush1.bf16.msra.mxu0 0
  %2295 = vmatprep.subr.bf16.mxu0 0
  %2296 = vmatpush1.bf16.msra.mxu0 0
  %2297 = vmatprep.subr.bf16.mxu0 0
  %2298 = vmatpush1.bf16.msra.mxu0 0
  %2299 = vmatprep.subr.bf16.mxu0 0
  %2300 = vmatpush1.bf16.msra.mxu0 0
  %2301 = vmatprep.subr.bf16.mxu0 0
  %2302 = vmatpush1.bf16.msra.mxu0 0
  %2303 = vmatprep.subr.bf16.mxu0 0
  %2304 = vmatpush1.bf16.msra.mxu0 0
  %2305 = vmatprep.subr.bf16.mxu0 0
  %2306 = vmatpush1.bf16.msra.mxu0 0
  %2307 = vmatprep.subr.bf16.mxu0 0
  %2308 = vmatpush1.bf16.msra.mxu0 0
  %2309 = vmatprep.subr.bf16.mxu0 0
  %2310 = vmatpush1.bf16.msra.mxu0 0
  %2311 = vmatprep.subr.bf16.mxu0 0
  %2312 = vmatpush1.bf16.msra.mxu0 0
  %2313 = vmatprep.subr.bf16.mxu0 0
  %2314 = vmatpush1.bf16.msra.mxu0 0
  %2315 = vmatprep.subr.bf16.mxu0 0
  %2316 = vmatpush1.bf16.msra.mxu0 0
  %2317 = vmatprep.subr.bf16.mxu0 0
  %2318 = vmatpush1.bf16.msra.mxu0 0
  %2319 = vmatprep.mubr.bf16.mxu0 0
  %2320 = vmatmul.mubr.bf16.gmra.mrb[0].mxu0 %v2185
  %v2321 = vpop.f32.mrb[0].mxu0
  %v2322 = vadd.f32 0.0, %v2321
  %v2323 = vpop.f32.mrb[0].mxu0
  %v2324 = vadd.f32 0.0, %v2323
  %v2325 = vpop.f32.mrb[0].mxu0
  %v2326 = vpop.f32.mrb[0].mxu0
  %2327 = vdwg.mxu0
  %v2328 = vadd.f32 %v2076, %v2240
  %v2329 = vadd.f32 %v2078, %v2242
  %v2330 = vadd.f32 %v2117, %v2281
  %v2331 = vadd.f32 %v2119, %v2283
  %v2332 = vadd.f32 %v2158, %v2322
  %v2333 = vadd.f32 %v2160, %v2324
  %v2334 = vld [vmem:[#allocation2] sm:$0xff]
  %v2335 = vld [vmem:[#allocation2 + $0x8] sm:$0xff]
  %v2336 = vld [vmem:[#allocation2 + $0x10] sm:$0xff]
  %v2337 = vld [vmem:[#allocation2 + $0x18] sm:$0xff]
  %v2338 = vld [vmem:[#allocation2 + $0x20] sm:$0xff]
  %v2339 = vld [vmem:[#allocation2 + $0x28] sm:$0xff]
  %v2340 = vld [vmem:[#allocation2 + $0x30] sm:$0xff]
  %s2341 = scalar_lea.vmem %s4, 24
  %v2342 = vld [vmem:[%s2341] sm:$0xff]
  %v2343 = vpack.c.bf16 %v2342, %v2342
  %v2344 = vpack.c.bf16 %v2334, %v2334
  %v2345 = vpack.c.bf16 %v2335, %v2335
  %v2346 = vpack.c.bf16 %v2336, %v2336
  %v2347 = vpack.c.bf16 %v2337, %v2337
  %v2348 = vpack.c.bf16 %v2338, %v2338
  %v2349 = vpack.c.bf16 %v2339, %v2339
  %v2350 = vpack.c.bf16 %v2340, %v2340
  %2358 = vrot.lane.b32.xlu0 %v2344, 1
  %v2359 = vpop.permute.xlu0 %2358
  %2360 = vrot.lane.b32.xlu0 %v2345, 1
  %v2361 = vpop.permute.xlu0 %2360
  %2362 = vrot.lane.b32.xlu0 %v2346, 1
  %v2363 = vpop.permute.xlu0 %2362
  %2364 = vrot.lane.b32.xlu0 %v2347, 1
  %v2365 = vpop.permute.xlu0 %2364
  %2366 = vrot.lane.b32.xlu0 %v2348, 1
  %v2367 = vpop.permute.xlu0 %2366
  %2368 = vrot.lane.b32.xlu0 %v2349, 1
  %v2369 = vpop.permute.xlu0 %2368
  %2370 = vrot.lane.b32.xlu0 %v2350, 1
  %v2371 = vpop.permute.xlu0 %2370
  %v2372 = vsel %vm648, %v2359, %v2361
  %v2373 = vsel %vm648, %v2361, %v2363
  %v2374 = vsel %vm648, %v2363, %v2365
  %v2375 = vsel %vm648, %v2365, %v2367
  %v2376 = vsel %vm648, %v2367, %v2369
  %v2377 = vsel %vm648, %v2369, %v2371
  %v2379 = vsel %vm1816, %v2343, 0
  %v2382 = vsel %vm1861, %v2372, 0
  %v2385 = vsel %vm1861, %v2373, 0
  %v2388 = vsel %vm1861, %v2374, 0
  %v2391 = vsel %vm1861, %v2375, 0
  %v2394 = vsel %vm1861, %v2376, 0
  %v2397 = vsel %vm1861, %v2377, 0
  %2399 = vmatprep.subr.bf16.mxu0 %v2385
  %2400 = vmatpush1.bf16.msra.mxu0 %v2382
  %2401 = vmatprep.subr.bf16.mxu0 0
  %2402 = vmatpush1.bf16.msra.mxu0 0
  %2403 = vmatprep.subr.bf16.mxu0 0
  %2404 = vmatpush1.bf16.msra.mxu0 0
  %2405 = vmatprep.subr.bf16.mxu0 0
  %2406 = vmatpush1.bf16.msra.mxu0 0
  %2407 = vmatprep.subr.bf16.mxu0 0
  %2408 = vmatpush1.bf16.msra.mxu0 0
  %2409 = vmatprep.subr.bf16.mxu0 0
  %2410 = vmatpush1.bf16.msra.mxu0 0
  %2411 = vmatprep.subr.bf16.mxu0 0
  %2412 = vmatpush1.bf16.msra.mxu0 0
  %2413 = vmatprep.subr.bf16.mxu0 0
  %2414 = vmatpush1.bf16.msra.mxu0 0
  %2415 = vmatprep.subr.bf16.mxu0 0
  %2416 = vmatpush1.bf16.msra.mxu0 0
  %2417 = vmatprep.subr.bf16.mxu0 0
  %2418 = vmatpush1.bf16.msra.mxu0 0
  %2419 = vmatprep.subr.bf16.mxu0 0
  %2420 = vmatpush1.bf16.msra.mxu0 0
  %2421 = vmatprep.subr.bf16.mxu0 0
  %2422 = vmatpush1.bf16.msra.mxu0 0
  %2423 = vmatprep.subr.bf16.mxu0 0
  %2424 = vmatpush1.bf16.msra.mxu0 0
  %2425 = vmatprep.subr.bf16.mxu0 0
  %2426 = vmatpush1.bf16.msra.mxu0 0
  %2427 = vmatprep.subr.bf16.mxu0 0
  %2428 = vmatpush1.bf16.msra.mxu0 0
  %2429 = vmatprep.subr.bf16.mxu0 0
  %2430 = vmatpush1.bf16.msra.mxu0 0
  %2431 = vmatprep.mubr.bf16.mxu0 0
  %2432 = vmatmul.mubr.bf16.gmra.mrb[0].mxu0 %v2379
  %v2433 = vpop.f32.mrb[0].mxu0
  %v2434 = vadd.f32 0.0, %v2433
  %v2435 = vpop.f32.mrb[0].mxu0
  %v2436 = vadd.f32 0.0, %v2435
  %v2437 = vpop.f32.mrb[0].mxu0
  %v2438 = vpop.f32.mrb[0].mxu0
  %2439 = vdwg.mxu0
  %2440 = vmatprep.subr.bf16.mxu0 %v2391
  %2441 = vmatpush1.bf16.msra.mxu0 %v2388
  %2442 = vmatprep.subr.bf16.mxu0 0
  %2443 = vmatpush1.bf16.msra.mxu0 0
  %2444 = vmatprep.subr.bf16.mxu0 0
  %2445 = vmatpush1.bf16.msra.mxu0 0
  %2446 = vmatprep.subr.bf16.mxu0 0
  %2447 = vmatpush1.bf16.msra.mxu0 0
  %2448 = vmatprep.subr.bf16.mxu0 0
  %2449 = vmatpush1.bf16.msra.mxu0 0
  %2450 = vmatprep.subr.bf16.mxu0 0
  %2451 = vmatpush1.bf16.msra.mxu0 0
  %2452 = vmatprep.subr.bf16.mxu0 0
  %2453 = vmatpush1.bf16.msra.mxu0 0
  %2454 = vmatprep.subr.bf16.mxu0 0
  %2455 = vmatpush1.bf16.msra.mxu0 0
  %2456 = vmatprep.subr.bf16.mxu0 0
  %2457 = vmatpush1.bf16.msra.mxu0 0
  %2458 = vmatprep.subr.bf16.mxu0 0
  %2459 = vmatpush1.bf16.msra.mxu0 0
  %2460 = vmatprep.subr.bf16.mxu0 0
  %2461 = vmatpush1.bf16.msra.mxu0 0
  %2462 = vmatprep.subr.bf16.mxu0 0
  %2463 = vmatpush1.bf16.msra.mxu0 0
  %2464 = vmatprep.subr.bf16.mxu0 0
  %2465 = vmatpush1.bf16.msra.mxu0 0
  %2466 = vmatprep.subr.bf16.mxu0 0
  %2467 = vmatpush1.bf16.msra.mxu0 0
  %2468 = vmatprep.subr.bf16.mxu0 0
  %2469 = vmatpush1.bf16.msra.mxu0 0
  %2470 = vmatprep.subr.bf16.mxu0 0
  %2471 = vmatpush1.bf16.msra.mxu0 0
  %2472 = vmatprep.mubr.bf16.mxu0 0
  %2473 = vmatmul.mubr.bf16.gmra.mrb[0].mxu0 %v2379
  %v2474 = vpop.f32.mrb[0].mxu0
  %v2475 = vadd.f32 0.0, %v2474
  %v2476 = vpop.f32.mrb[0].mxu0
  %v2477 = vadd.f32 0.0, %v2476
  %v2478 = vpop.f32.mrb[0].mxu0
  %v2479 = vpop.f32.mrb[0].mxu0
  %2480 = vdwg.mxu0
  %2481 = vmatprep.subr.bf16.mxu0 %v2397
  %2482 = vmatpush1.bf16.msra.mxu0 %v2394
  %2483 = vmatprep.subr.bf16.mxu0 0
  %2484 = vmatpush1.bf16.msra.mxu0 0
  %2485 = vmatprep.subr.bf16.mxu0 0
  %2486 = vmatpush1.bf16.msra.mxu0 0
  %2487 = vmatprep.subr.bf16.mxu0 0
  %2488 = vmatpush1.bf16.msra.mxu0 0
  %2489 = vmatprep.subr.bf16.mxu0 0
  %2490 = vmatpush1.bf16.msra.mxu0 0
  %2491 = vmatprep.subr.bf16.mxu0 0
  %2492 = vmatpush1.bf16.msra.mxu0 0
  %2493 = vmatprep.subr.bf16.mxu0 0
  %2494 = vmatpush1.bf16.msra.mxu0 0
  %2495 = vmatprep.subr.bf16.mxu0 0
  %2496 = vmatpush1.bf16.msra.mxu0 0
  %2497 = vmatprep.subr.bf16.mxu0 0
  %2498 = vmatpush1.bf16.msra.mxu0 0
  %2499 = vmatprep.subr.bf16.mxu0 0
  %2500 = vmatpush1.bf16.msra.mxu0 0
  %2501 = vmatprep.subr.bf16.mxu0 0
  %2502 = vmatpush1.bf16.msra.mxu0 0
  %2503 = vmatprep.subr.bf16.mxu0 0
  %2504 = vmatpush1.bf16.msra.mxu0 0
  %2505 = vmatprep.subr.bf16.mxu0 0
  %2506 = vmatpush1.bf16.msra.mxu0 0
  %2507 = vmatprep.subr.bf16.mxu0 0
  %2508 = vmatpush1.bf16.msra.mxu0 0
  %2509 = vmatprep.subr.bf16.mxu0 0
  %2510 = vmatpush1.bf16.msra.mxu0 0
  %2511 = vmatprep.subr.bf16.mxu0 0
  %2512 = vmatpush1.bf16.msra.mxu0 0
  %2513 = vmatprep.mubr.bf16.mxu0 0
  %2514 = vmatmul.mubr.bf16.gmra.mrb[0].mxu0 %v2379
  %v2515 = vpop.f32.mrb[0].mxu0
  %v2516 = vadd.f32 0.0, %v2515
  %v2517 = vpop.f32.mrb[0].mxu0
  %v2518 = vadd.f32 0.0, %v2517
  %v2519 = vpop.f32.mrb[0].mxu0
  %v2520 = vpop.f32.mrb[0].mxu0
  %2521 = vdwg.mxu0
  %v2522 = vadd.f32 %v2328, %v2434
  %v2523 = vadd.f32 %v2329, %v2436
  %v2524 = vadd.f32 %v2330, %v2475
  %v2525 = vadd.f32 %v2331, %v2477
  %v2526 = vadd.f32 %v2332, %v2516
  %v2527 = vadd.f32 %v2333, %v2518
  %s2528 = scalar_lea.vmem %s4, 32
  %v2529 = vld [vmem:[%s2528] sm:$0xff]
  %v2530 = vpack.c.bf16 %v2529, %v2529
  %v2532 = vsel %vm1816, %v2530, 0
  %v2535 = vsel %vm1861, %v2345, 0
  %v2538 = vsel %vm1861, %v2346, 0
  %v2541 = vsel %vm1861, %v2347, 0
  %v2544 = vsel %vm1861, %v2348, 0
  %v2547 = vsel %vm1861, %v2349, 0
  %v2550 = vsel %vm1861, %v2350, 0
  %2552 = vmatprep.subr.bf16.mxu0 %v2538
  %2553 = vmatpush1.bf16.msra.mxu0 %v2535
  %2554 = vmatprep.subr.bf16.mxu0 0
  %2555 = vmatpush1.bf16.msra.mxu0 0
  %2556 = vmatprep.subr.bf16.mxu0 0
  %2557 = vmatpush1.bf16.msra.mxu0 0
  %2558 = vmatprep.subr.bf16.mxu0 0
  %2559 = vmatpush1.bf16.msra.mxu0 0
  %2560 = vmatprep.subr.bf16.mxu0 0
  %2561 = vmatpush1.bf16.msra.mxu0 0
  %2562 = vmatprep.subr.bf16.mxu0 0
  %2563 = vmatpush1.bf16.msra.mxu0 0
  %2564 = vmatprep.subr.bf16.mxu0 0
  %2565 = vmatpush1.bf16.msra.mxu0 0
  %2566 = vmatprep.subr.bf16.mxu0 0
  %2567 = vmatpush1.bf16.msra.mxu0 0
  %2568 = vmatprep.subr.bf16.mxu0 0
  %2569 = vmatpush1.bf16.msra.mxu0 0
  %2570 = vmatprep.subr.bf16.mxu0 0
  %2571 = vmatpush1.bf16.msra.mxu0 0
  %2572 = vmatprep.subr.bf16.mxu0 0
  %2573 = vmatpush1.bf16.msra.mxu0 0
  %2574 = vmatprep.subr.bf16.mxu0 0
  %2575 = vmatpush1.bf16.msra.mxu0 0
  %2576 = vmatprep.subr.bf16.mxu0 0
  %2577 = vmatpush1.bf16.msra.mxu0 0
  %2578 = vmatprep.subr.bf16.mxu0 0
  %2579 = vmatpush1.bf16.msra.mxu0 0
  %2580 = vmatprep.subr.bf16.mxu0 0
  %2581 = vmatpush1.bf16.msra.mxu0 0
  %2582 = vmatprep.subr.bf16.mxu0 0
  %2583 = vmatpush1.bf16.msra.mxu0 0
  %2584 = vmatprep.mubr.bf16.mxu0 0
  %2585 = vmatmul.mubr.bf16.gmra.mrb[0].mxu0 %v2532
  %v2586 = vpop.f32.mrb[0].mxu0
  %v2587 = vadd.f32 0.0, %v2586
  %v2588 = vpop.f32.mrb[0].mxu0
  %v2589 = vadd.f32 0.0, %v2588
  %v2590 = vpop.f32.mrb[0].mxu0
  %v2591 = vpop.f32.mrb[0].mxu0
  %2592 = vdwg.mxu0
  %2593 = vmatprep.subr.bf16.mxu0 %v2544
  %2594 = vmatpush1.bf16.msra.mxu0 %v2541
  %2595 = vmatprep.subr.bf16.mxu0 0
  %2596 = vmatpush1.bf16.msra.mxu0 0
  %2597 = vmatprep.subr.bf16.mxu0 0
  %2598 = vmatpush1.bf16.msra.mxu0 0
  %2599 = vmatprep.subr.bf16.mxu0 0
  %2600 = vmatpush1.bf16.msra.mxu0 0
  %2601 = vmatprep.subr.bf16.mxu0 0
  %2602 = vmatpush1.bf16.msra.mxu0 0
  %2603 = vmatprep.subr.bf16.mxu0 0
  %2604 = vmatpush1.bf16.msra.mxu0 0
  %2605 = vmatprep.subr.bf16.mxu0 0
  %2606 = vmatpush1.bf16.msra.mxu0 0
  %2607 = vmatprep.subr.bf16.mxu0 0
  %2608 = vmatpush1.bf16.msra.mxu0 0
  %2609 = vmatprep.subr.bf16.mxu0 0
  %2610 = vmatpush1.bf16.msra.mxu0 0
  %2611 = vmatprep.subr.bf16.mxu0 0
  %2612 = vmatpush1.bf16.msra.mxu0 0
  %2613 = vmatprep.subr.bf16.mxu0 0
  %2614 = vmatpush1.bf16.msra.mxu0 0
  %2615 = vmatprep.subr.bf16.mxu0 0
  %2616 = vmatpush1.bf16.msra.mxu0 0
  %2617 = vmatprep.subr.bf16.mxu0 0
  %2618 = vmatpush1.bf16.msra.mxu0 0
  %2619 = vmatprep.subr.bf16.mxu0 0
  %2620 = vmatpush1.bf16.msra.mxu0 0
  %2621 = vmatprep.subr.bf16.mxu0 0
  %2622 = vmatpush1.bf16.msra.mxu0 0
  %2623 = vmatprep.subr.bf16.mxu0 0
  %2624 = vmatpush1.bf16.msra.mxu0 0
  %2625 = vmatprep.mubr.bf16.mxu0 0
  %2626 = vmatmul.mubr.bf16.gmra.mrb[0].mxu0 %v2532
  %v2627 = vpop.f32.mrb[0].mxu0
  %v2628 = vadd.f32 0.0, %v2627
  %v2629 = vpop.f32.mrb[0].mxu0
  %v2630 = vadd.f32 0.0, %v2629
  %v2631 = vpop.f32.mrb[0].mxu0
  %v2632 = vpop.f32.mrb[0].mxu0
  %2633 = vdwg.mxu0
  %2634 = vmatprep.subr.bf16.mxu0 %v2550
  %2635 = vmatpush1.bf16.msra.mxu0 %v2547
  %2636 = vmatprep.subr.bf16.mxu0 0
  %2637 = vmatpush1.bf16.msra.mxu0 0
  %2638 = vmatprep.subr.bf16.mxu0 0
  %2639 = vmatpush1.bf16.msra.mxu0 0
  %2640 = vmatprep.subr.bf16.mxu0 0
  %2641 = vmatpush1.bf16.msra.mxu0 0
  %2642 = vmatprep.subr.bf16.mxu0 0
  %2643 = vmatpush1.bf16.msra.mxu0 0
  %2644 = vmatprep.subr.bf16.mxu0 0
  %2645 = vmatpush1.bf16.msra.mxu0 0
  %2646 = vmatprep.subr.bf16.mxu0 0
  %2647 = vmatpush1.bf16.msra.mxu0 0
  %2648 = vmatprep.subr.bf16.mxu0 0
  %2649 = vmatpush1.bf16.msra.mxu0 0
  %2650 = vmatprep.subr.bf16.mxu0 0
  %2651 = vmatpush1.bf16.msra.mxu0 0
  %2652 = vmatprep.subr.bf16.mxu0 0
  %2653 = vmatpush1.bf16.msra.mxu0 0
  %2654 = vmatprep.subr.bf16.mxu0 0
  %2655 = vmatpush1.bf16.msra.mxu0 0
  %2656 = vmatprep.subr.bf16.mxu0 0
  %2657 = vmatpush1.bf16.msra.mxu0 0
  %2658 = vmatprep.subr.bf16.mxu0 0
  %2659 = vmatpush1.bf16.msra.mxu0 0
  %2660 = vmatprep.subr.bf16.mxu0 0
  %2661 = vmatpush1.bf16.msra.mxu0 0
  %2662 = vmatprep.subr.bf16.mxu0 0
  %2663 = vmatpush1.bf16.msra.mxu0 0
  %2664 = vmatprep.subr.bf16.mxu0 0
  %2665 = vmatpush1.bf16.msra.mxu0 0
  %2666 = vmatprep.mubr.bf16.mxu0 0
  %2667 = vmatmul.mubr.bf16.gmra.mrb[0].mxu0 %v2532
  %v2668 = vpop.f32.mrb[0].mxu0
  %v2669 = vadd.f32 0.0, %v2668
  %v2670 = vpop.f32.mrb[0].mxu0
  %v2671 = vadd.f32 0.0, %v2670
  %v2672 = vpop.f32.mrb[0].mxu0
  %v2673 = vpop.f32.mrb[0].mxu0
  %2674 = vdwg.mxu0
  %v2675 = vadd.f32 %v2522, %v2587
  %v2676 = vadd.f32 %v2523, %v2589
  %v2677 = vadd.f32 %v2524, %v2628
  %v2678 = vadd.f32 %v2525, %v2630
  %v2679 = vadd.f32 %v2526, %v2669
  %v2680 = vadd.f32 %v2527, %v2671
  %s2681 = scalar_lea.vmem %s4, 40
  %v2682 = vld [vmem:[%s2681] sm:$0xff]
  %v2683 = vpack.c.bf16 %v2682, %v2682
  %2684 = vrot.lane.b32.xlu0 %v2345, 127
  %v2685 = vpop.permute.xlu0 %2684
  %2686 = vrot.lane.b32.xlu0 %v2346, 127
  %v2687 = vpop.permute.xlu0 %2686
  %2688 = vrot.lane.b32.xlu0 %v2347, 127
  %v2689 = vpop.permute.xlu0 %2688
  %2690 = vrot.lane.b32.xlu0 %v2348, 127
  %v2691 = vpop.permute.xlu0 %2690
  %2692 = vrot.lane.b32.xlu0 %v2349, 127
  %v2693 = vpop.permute.xlu0 %2692
  %2694 = vrot.lane.b32.xlu0 %v2350, 127
  %v2695 = vpop.permute.xlu0 %2694
  %v2696 = vsel %vm1015, %v2685, %v2687
  %v2697 = vsel %vm1015, %v2687, %v2689
  %v2698 = vsel %vm1015, %v2689, %v2691
  %v2699 = vsel %vm1015, %v2691, %v2693
  %v2700 = vsel %vm1015, %v2693, %v2695
  %v2702 = vsel %vm1816, %v2683, 0
  %v2705 = vsel %vm1861, %v2696, 0
  %v2708 = vsel %vm1861, %v2697, 0
  %v2711 = vsel %vm1861, %v2698, 0
  %v2714 = vsel %vm1861, %v2699, 0
  %v2717 = vsel %vm1861, %v2700, 0
  %v2720 = vsel %vm1861, %v2695, 0
  %2722 = vmatprep.subr.bf16.mxu0 %v2708
  %2723 = vmatpush1.bf16.msra.mxu0 %v2705
  %2724 = vmatprep.subr.bf16.mxu0 0
  %2725 = vmatpush1.bf16.msra.mxu0 0
  %2726 = vmatprep.subr.bf16.mxu0 0
  %2727 = vmatpush1.bf16.msra.mxu0 0
  %2728 = vmatprep.subr.bf16.mxu0 0
  %2729 = vmatpush1.bf16.msra.mxu0 0
  %2730 = vmatprep.subr.bf16.mxu0 0
  %2731 = vmatpush1.bf16.msra.mxu0 0
  %2732 = vmatprep.subr.bf16.mxu0 0
  %2733 = vmatpush1.bf16.msra.mxu0 0
  %2734 = vmatprep.subr.bf16.mxu0 0
  %2735 = vmatpush1.bf16.msra.mxu0 0
  %2736 = vmatprep.subr.bf16.mxu0 0
  %2737 = vmatpush1.bf16.msra.mxu0 0
  %2738 = vmatprep.subr.bf16.mxu0 0
  %2739 = vmatpush1.bf16.msra.mxu0 0
  %2740 = vmatprep.subr.bf16.mxu0 0
  %2741 = vmatpush1.bf16.msra.mxu0 0
  %2742 = vmatprep.subr.bf16.mxu0 0
  %2743 = vmatpush1.bf16.msra.mxu0 0
  %2744 = vmatprep.subr.bf16.mxu0 0
  %2745 = vmatpush1.bf16.msra.mxu0 0
  %2746 = vmatprep.subr.bf16.mxu0 0
  %2747 = vmatpush1.bf16.msra.mxu0 0
  %2748 = vmatprep.subr.bf16.mxu0 0
  %2749 = vmatpush1.bf16.msra.mxu0 0
  %2750 = vmatprep.subr.bf16.mxu0 0
  %2751 = vmatpush1.bf16.msra.mxu0 0
  %2752 = vmatprep.subr.bf16.mxu0 0
  %2753 = vmatpush1.bf16.msra.mxu0 0
  %2754 = vmatprep.mubr.bf16.mxu0 0
  %2755 = vmatmul.mubr.bf16.gmra.mrb[0].mxu0 %v2702
  %v2756 = vpop.f32.mrb[0].mxu0
  %v2757 = vadd.f32 0.0, %v2756
  %v2758 = vpop.f32.mrb[0].mxu0
  %v2759 = vadd.f32 0.0, %v2758
  %v2760 = vpop.f32.mrb[0].mxu0
  %v2761 = vpop.f32.mrb[0].mxu0
  %2762 = vdwg.mxu0
  %2763 = vmatprep.subr.bf16.mxu0 %v2714
  %2764 = vmatpush1.bf16.msra.mxu0 %v2711
  %2765 = vmatprep.subr.bf16.mxu0 0
  %2766 = vmatpush1.bf16.msra.mxu0 0
  %2767 = vmatprep.subr.bf16.mxu0 0
  %2768 = vmatpush1.bf16.msra.mxu0 0
  %2769 = vmatprep.subr.bf16.mxu0 0
  %2770 = vmatpush1.bf16.msra.mxu0 0
  %2771 = vmatprep.subr.bf16.mxu0 0
  %2772 = vmatpush1.bf16.msra.mxu0 0
  %2773 = vmatprep.subr.bf16.mxu0 0
  %2774 = vmatpush1.bf16.msra.mxu0 0
  %2775 = vmatprep.subr.bf16.mxu0 0
  %2776 = vmatpush1.bf16.msra.mxu0 0
  %2777 = vmatprep.subr.bf16.mxu0 0
  %2778 = vmatpush1.bf16.msra.mxu0 0
  %2779 = vmatprep.subr.bf16.mxu0 0
  %2780 = vmatpush1.bf16.msra.mxu0 0
  %2781 = vmatprep.subr.bf16.mxu0 0
  %2782 = vmatpush1.bf16.msra.mxu0 0
  %2783 = vmatprep.subr.bf16.mxu0 0
  %2784 = vmatpush1.bf16.msra.mxu0 0
  %2785 = vmatprep.subr.bf16.mxu0 0
  %2786 = vmatpush1.bf16.msra.mxu0 0
  %2787 = vmatprep.subr.bf16.mxu0 0
  %2788 = vmatpush1.bf16.msra.mxu0 0
  %2789 = vmatprep.subr.bf16.mxu0 0
  %2790 = vmatpush1.bf16.msra.mxu0 0
  %2791 = vmatprep.subr.bf16.mxu0 0
  %2792 = vmatpush1.bf16.msra.mxu0 0
  %2793 = vmatprep.subr.bf16.mxu0 0
  %2794 = vmatpush1.bf16.msra.mxu0 0
  %2795 = vmatprep.mubr.bf16.mxu0 0
  %2796 = vmatmul.mubr.bf16.gmra.mrb[0].mxu0 %v2702
  %v2797 = vpop.f32.mrb[0].mxu0
  %v2798 = vadd.f32 0.0, %v2797
  %v2799 = vpop.f32.mrb[0].mxu0
  %v2800 = vadd.f32 0.0, %v2799
  %v2801 = vpop.f32.mrb[0].mxu0
  %v2802 = vpop.f32.mrb[0].mxu0
  %2803 = vdwg.mxu0
  %2804 = vmatprep.subr.bf16.mxu0 %v2720
  %2805 = vmatpush1.bf16.msra.mxu0 %v2717
  %2806 = vmatprep.subr.bf16.mxu0 0
  %2807 = vmatpush1.bf16.msra.mxu0 0
  %2808 = vmatprep.subr.bf16.mxu0 0
  %2809 = vmatpush1.bf16.msra.mxu0 0
  %2810 = vmatprep.subr.bf16.mxu0 0
  %2811 = vmatpush1.bf16.msra.mxu0 0
  %2812 = vmatprep.subr.bf16.mxu0 0
  %2813 = vmatpush1.bf16.msra.mxu0 0
  %2814 = vmatprep.subr.bf16.mxu0 0
  %2815 = vmatpush1.bf16.msra.mxu0 0
  %2816 = vmatprep.subr.bf16.mxu0 0
  %2817 = vmatpush1.bf16.msra.mxu0 0
  %2818 = vmatprep.subr.bf16.mxu0 0
  %2819 = vmatpush1.bf16.msra.mxu0 0
  %2820 = vmatprep.subr.bf16.mxu0 0
  %2821 = vmatpush1.bf16.msra.mxu0 0
  %2822 = vmatprep.subr.bf16.mxu0 0
  %2823 = vmatpush1.bf16.msra.mxu0 0
  %2824 = vmatprep.subr.bf16.mxu0 0
  %2825 = vmatpush1.bf16.msra.mxu0 0
  %2826 = vmatprep.subr.bf16.mxu0 0
  %2827 = vmatpush1.bf16.msra.mxu0 0
  %2828 = vmatprep.subr.bf16.mxu0 0
  %2829 = vmatpush1.bf16.msra.mxu0 0
  %2830 = vmatprep.subr.bf16.mxu0 0
  %2831 = vmatpush1.bf16.msra.mxu0 0
  %2832 = vmatprep.subr.bf16.mxu0 0
  %2833 = vmatpush1.bf16.msra.mxu0 0
  %2834 = vmatprep.subr.bf16.mxu0 0
  %2835 = vmatpush1.bf16.msra.mxu0 0
  %2836 = vmatprep.mubr.bf16.mxu0 0
  %2837 = vmatmul.mubr.bf16.gmra.mrb[0].mxu0 %v2702
  %v2838 = vpop.f32.mrb[0].mxu0
  %v2839 = vadd.f32 0.0, %v2838
  %v2840 = vpop.f32.mrb[0].mxu0
  %v2841 = vadd.f32 0.0, %v2840
  %v2842 = vpop.f32.mrb[0].mxu0
  %v2843 = vpop.f32.mrb[0].mxu0
  %2844 = vdwg.mxu0
  %v2845 = vadd.f32 %v2675, %v2757
  %v2846 = vadd.f32 %v2676, %v2759
  %v2847 = vadd.f32 %v2677, %v2798
  %v2848 = vadd.f32 %v2678, %v2800
  %v2849 = vadd.f32 %v2679, %v2839
  %v2850 = vadd.f32 %v2680, %v2841
  %s2851 = scalar_lea.vmem %s4, 48
  %v2852 = vld [vmem:[%s2851] sm:$0xff]
  %v2853 = vpack.c.bf16 %v2852, %v2852
  %2854 = vrot.lane.b32.xlu0 %v2345, 111
  %v2855 = vpop.permute.xlu0 %2854
  %2856 = vrot.lane.b32.xlu0 %v2346, 111
  %v2857 = vpop.permute.xlu0 %2856
  %2858 = vrot.lane.b32.xlu0 %v2347, 111
  %v2859 = vpop.permute.xlu0 %2858
  %2860 = vrot.lane.b32.xlu0 %v2348, 111
  %v2861 = vpop.permute.xlu0 %2860
  %2862 = vrot.lane.b32.xlu0 %v2349, 111
  %v2863 = vpop.permute.xlu0 %2862
  %2864 = vrot.lane.b32.xlu0 %v2350, 111
  %v2865 = vpop.permute.xlu0 %2864
  %v2866 = vsel %vm1210, %v2855, %v2857
  %v2867 = vsel %vm1210, %v2857, %v2859
  %v2868 = vsel %vm1210, %v2859, %v2861
  %v2869 = vsel %vm1210, %v2861, %v2863
  %v2870 = vsel %vm1210, %v2863, %v2865
  %v2872 = vsel %vm1816, %v2853, 0
  %v2875 = vsel %vm1861, %v2866, 0
  %v2878 = vsel %vm1861, %v2867, 0
  %v2881 = vsel %vm1861, %v2868, 0
  %v2884 = vsel %vm1861, %v2869, 0
  %v2887 = vsel %vm1861, %v2870, 0
  %v2890 = vsel %vm1861, %v2865, 0
  %2892 = vmatprep.subr.bf16.mxu0 %v2878
  %2893 = vmatpush1.bf16.msra.mxu0 %v2875
  %2894 = vmatprep.subr.bf16.mxu0 0
  %2895 = vmatpush1.bf16.msra.mxu0 0
  %2896 = vmatprep.subr.bf16.mxu0 0
  %2897 = vmatpush1.bf16.msra.mxu0 0
  %2898 = vmatprep.subr.bf16.mxu0 0
  %2899 = vmatpush1.bf16.msra.mxu0 0
  %2900 = vmatprep.subr.bf16.mxu0 0
  %2901 = vmatpush1.bf16.msra.mxu0 0
  %2902 = vmatprep.subr.bf16.mxu0 0
  %2903 = vmatpush1.bf16.msra.mxu0 0
  %2904 = vmatprep.subr.bf16.mxu0 0
  %2905 = vmatpush1.bf16.msra.mxu0 0
  %2906 = vmatprep.subr.bf16.mxu0 0
  %2907 = vmatpush1.bf16.msra.mxu0 0
  %2908 = vmatprep.subr.bf16.mxu0 0
  %2909 = vmatpush1.bf16.msra.mxu0 0
  %2910 = vmatprep.subr.bf16.mxu0 0
  %2911 = vmatpush1.bf16.msra.mxu0 0
  %2912 = vmatprep.subr.bf16.mxu0 0
  %2913 = vmatpush1.bf16.msra.mxu0 0
  %2914 = vmatprep.subr.bf16.mxu0 0
  %2915 = vmatpush1.bf16.msra.mxu0 0
  %2916 = vmatprep.subr.bf16.mxu0 0
  %2917 = vmatpush1.bf16.msra.mxu0 0
  %2918 = vmatprep.subr.bf16.mxu0 0
  %2919 = vmatpush1.bf16.msra.mxu0 0
  %2920 = vmatprep.subr.bf16.mxu0 0
  %2921 = vmatpush1.bf16.msra.mxu0 0
  %2922 = vmatprep.subr.bf16.mxu0 0
  %2923 = vmatpush1.bf16.msra.mxu0 0
  %2924 = vmatprep.mubr.bf16.mxu0 0
  %2925 = vmatmul.mubr.bf16.gmra.mrb[0].mxu0 %v2872
  %v2926 = vpop.f32.mrb[0].mxu0
  %v2927 = vadd.f32 0.0, %v2926
  %v2928 = vpop.f32.mrb[0].mxu0
  %v2929 = vadd.f32 0.0, %v2928
  %v2930 = vpop.f32.mrb[0].mxu0
  %v2931 = vpop.f32.mrb[0].mxu0
  %2932 = vdwg.mxu0
  %2933 = vmatprep.subr.bf16.mxu0 %v2884
  %2934 = vmatpush1.bf16.msra.mxu0 %v2881
  %2935 = vmatprep.subr.bf16.mxu0 0
  %2936 = vmatpush1.bf16.msra.mxu0 0
  %2937 = vmatprep.subr.bf16.mxu0 0
  %2938 = vmatpush1.bf16.msra.mxu0 0
  %2939 = vmatprep.subr.bf16.mxu0 0
  %2940 = vmatpush1.bf16.msra.mxu0 0
  %2941 = vmatprep.subr.bf16.mxu0 0
  %2942 = vmatpush1.bf16.msra.mxu0 0
  %2943 = vmatprep.subr.bf16.mxu0 0
  %2944 = vmatpush1.bf16.msra.mxu0 0
  %2945 = vmatprep.subr.bf16.mxu0 0
  %2946 = vmatpush1.bf16.msra.mxu0 0
  %2947 = vmatprep.subr.bf16.mxu0 0
  %2948 = vmatpush1.bf16.msra.mxu0 0
  %2949 = vmatprep.subr.bf16.mxu0 0
  %2950 = vmatpush1.bf16.msra.mxu0 0
  %2951 = vmatprep.subr.bf16.mxu0 0
  %2952 = vmatpush1.bf16.msra.mxu0 0
  %2953 = vmatprep.subr.bf16.mxu0 0
  %2954 = vmatpush1.bf16.msra.mxu0 0
  %2955 = vmatprep.subr.bf16.mxu0 0
  %2956 = vmatpush1.bf16.msra.mxu0 0
  %2957 = vmatprep.subr.bf16.mxu0 0
  %2958 = vmatpush1.bf16.msra.mxu0 0
  %2959 = vmatprep.subr.bf16.mxu0 0
  %2960 = vmatpush1.bf16.msra.mxu0 0
  %2961 = vmatprep.subr.bf16.mxu0 0
  %2962 = vmatpush1.bf16.msra.mxu0 0
  %2963 = vmatprep.subr.bf16.mxu0 0
  %2964 = vmatpush1.bf16.msra.mxu0 0
  %2965 = vmatprep.mubr.bf16.mxu0 0
  %2966 = vmatmul.mubr.bf16.gmra.mrb[0].mxu0 %v2872
  %v2967 = vpop.f32.mrb[0].mxu0
  %v2968 = vadd.f32 0.0, %v2967
  %v2969 = vpop.f32.mrb[0].mxu0
  %v2970 = vadd.f32 0.0, %v2969
  %v2971 = vpop.f32.mrb[0].mxu0
  %v2972 = vpop.f32.mrb[0].mxu0
  %2973 = vdwg.mxu0
  %2974 = vmatprep.subr.bf16.mxu0 %v2890
  %2975 = vmatpush1.bf16.msra.mxu0 %v2887
  %2976 = vmatprep.subr.bf16.mxu0 0
  %2977 = vmatpush1.bf16.msra.mxu0 0
  %2978 = vmatprep.subr.bf16.mxu0 0
  %2979 = vmatpush1.bf16.msra.mxu0 0
  %2980 = vmatprep.subr.bf16.mxu0 0
  %2981 = vmatpush1.bf16.msra.mxu0 0
  %2982 = vmatprep.subr.bf16.mxu0 0
  %2983 = vmatpush1.bf16.msra.mxu0 0
  %2984 = vmatprep.subr.bf16.mxu0 0
  %2985 = vmatpush1.bf16.msra.mxu0 0
  %2986 = vmatprep.subr.bf16.mxu0 0
  %2987 = vmatpush1.bf16.msra.mxu0 0
  %2988 = vmatprep.subr.bf16.mxu0 0
  %2989 = vmatpush1.bf16.msra.mxu0 0
  %2990 = vmatprep.subr.bf16.mxu0 0
  %2991 = vmatpush1.bf16.msra.mxu0 0
  %2992 = vmatprep.subr.bf16.mxu0 0
  %2993 = vmatpush1.bf16.msra.mxu0 0
  %2994 = vmatprep.subr.bf16.mxu0 0
  %2995 = vmatpush1.bf16.msra.mxu0 0
  %2996 = vmatprep.subr.bf16.mxu0 0
  %2997 = vmatpush1.bf16.msra.mxu0 0
  %2998 = vmatprep.subr.bf16.mxu0 0
  %2999 = vmatpush1.bf16.msra.mxu0 0
  %3000 = vmatprep.subr.bf16.mxu0 0
  %3001 = vmatpush1.bf16.msra.mxu0 0
  %3002 = vmatprep.subr.bf16.mxu0 0
  %3003 = vmatpush1.bf16.msra.mxu0 0
  %3004 = vmatprep.subr.bf16.mxu0 0
  %3005 = vmatpush1.bf16.msra.mxu0 0
  %3006 = vmatprep.mubr.bf16.mxu0 0
  %3007 = vmatmul.mubr.bf16.gmra.mrb[0].mxu0 %v2872
  %v3008 = vpop.f32.mrb[0].mxu0
  %v3009 = vadd.f32 0.0, %v3008
  %v3010 = vpop.f32.mrb[0].mxu0
  %v3011 = vadd.f32 0.0, %v3010
  %v3012 = vpop.f32.mrb[0].mxu0
  %v3013 = vpop.f32.mrb[0].mxu0
  %3014 = vdwg.mxu0
  %v3015 = vadd.f32 %v2845, %v2927
  %v3016 = vadd.f32 %v2846, %v2929
  %v3017 = vadd.f32 %v2847, %v2968
  %v3018 = vadd.f32 %v2848, %v2970
  %v3019 = vadd.f32 %v2849, %v3009
  %v3020 = vadd.f32 %v2850, %v3011
  %s3021 = scalar_lea.vmem %s4, 56
  %v3022 = vld [vmem:[%s3021] sm:$0xff]
  %v3023 = vpack.c.bf16 %v3022, %v3022
  %3024 = vrot.lane.b32.xlu0 %v2345, 110
  %v3025 = vpop.permute.xlu0 %3024
  %3026 = vrot.lane.b32.xlu0 %v2346, 110
  %v3027 = vpop.permute.xlu0 %3026
  %3028 = vrot.lane.b32.xlu0 %v2347, 110
  %v3029 = vpop.permute.xlu0 %3028
  %3030 = vrot.lane.b32.xlu0 %v2348, 110
  %v3031 = vpop.permute.xlu0 %3030
  %3032 = vrot.lane.b32.xlu0 %v2349, 110
  %v3033 = vpop.permute.xlu0 %3032
  %3034 = vrot.lane.b32.xlu0 %v2350, 110
  %v3035 = vpop.permute.xlu0 %3034
  %v3036 = vsel %vm1405, %v3025, %v3027
  %v3037 = vsel %vm1405, %v3027, %v3029
  %v3038 = vsel %vm1405, %v3029, %v3031
  %v3039 = vsel %vm1405, %v3031, %v3033
  %v3040 = vsel %vm1405, %v3033, %v3035
  %v3042 = vsel %vm1816, %v3023, 0
  %v3045 = vsel %vm1861, %v3036, 0
  %v3048 = vsel %vm1861, %v3037, 0
  %v3051 = vsel %vm1861, %v3038, 0
  %v3054 = vsel %vm1861, %v3039, 0
  %v3057 = vsel %vm1861, %v3040, 0
  %v3060 = vsel %vm1861, %v3035, 0
  %3062 = vmatprep.subr.bf16.mxu0 %v3048
  %3063 = vmatpush1.bf16.msra.mxu0 %v3045
  %3064 = vmatprep.subr.bf16.mxu0 0
  %3065 = vmatpush1.bf16.msra.mxu0 0
  %3066 = vmatprep.subr.bf16.mxu0 0
  %3067 = vmatpush1.bf16.msra.mxu0 0
  %3068 = vmatprep.subr.bf16.mxu0 0
  %3069 = vmatpush1.bf16.msra.mxu0 0
  %3070 = vmatprep.subr.bf16.mxu0 0
  %3071 = vmatpush1.bf16.msra.mxu0 0
  %3072 = vmatprep.subr.bf16.mxu0 0
  %3073 = vmatpush1.bf16.msra.mxu0 0
  %3074 = vmatprep.subr.bf16.mxu0 0
  %3075 = vmatpush1.bf16.msra.mxu0 0
  %3076 = vmatprep.subr.bf16.mxu0 0
  %3077 = vmatpush1.bf16.msra.mxu0 0
  %3078 = vmatprep.subr.bf16.mxu0 0
  %3079 = vmatpush1.bf16.msra.mxu0 0
  %3080 = vmatprep.subr.bf16.mxu0 0
  %3081 = vmatpush1.bf16.msra.mxu0 0
  %3082 = vmatprep.subr.bf16.mxu0 0
  %3083 = vmatpush1.bf16.msra.mxu0 0
  %3084 = vmatprep.subr.bf16.mxu0 0
  %3085 = vmatpush1.bf16.msra.mxu0 0
  %3086 = vmatprep.subr.bf16.mxu0 0
  %3087 = vmatpush1.bf16.msra.mxu0 0
  %3088 = vmatprep.subr.bf16.mxu0 0
  %3089 = vmatpush1.bf16.msra.mxu0 0
  %3090 = vmatprep.subr.bf16.mxu0 0
  %3091 = vmatpush1.bf16.msra.mxu0 0
  %3092 = vmatprep.subr.bf16.mxu0 0
  %3093 = vmatpush1.bf16.msra.mxu0 0
  %3094 = vmatprep.mubr.bf16.mxu0 0
  %3095 = vmatmul.mubr.bf16.gmra.mrb[0].mxu0 %v3042
  %v3096 = vpop.f32.mrb[0].mxu0
  %v3097 = vadd.f32 0.0, %v3096
  %v3098 = vpop.f32.mrb[0].mxu0
  %v3099 = vadd.f32 0.0, %v3098
  %v3100 = vpop.f32.mrb[0].mxu0
  %v3101 = vpop.f32.mrb[0].mxu0
  %3102 = vdwg.mxu0
  %3103 = vmatprep.subr.bf16.mxu0 %v3054
  %3104 = vmatpush1.bf16.msra.mxu0 %v3051
  %3105 = vmatprep.subr.bf16.mxu0 0
  %3106 = vmatpush1.bf16.msra.mxu0 0
  %3107 = vmatprep.subr.bf16.mxu0 0
  %3108 = vmatpush1.bf16.msra.mxu0 0
  %3109 = vmatprep.subr.bf16.mxu0 0
  %3110 = vmatpush1.bf16.msra.mxu0 0
  %3111 = vmatprep.subr.bf16.mxu0 0
  %3112 = vmatpush1.bf16.msra.mxu0 0
  %3113 = vmatprep.subr.bf16.mxu0 0
  %3114 = vmatpush1.bf16.msra.mxu0 0
  %3115 = vmatprep.subr.bf16.mxu0 0
  %3116 = vmatpush1.bf16.msra.mxu0 0
  %3117 = vmatprep.subr.bf16.mxu0 0
  %3118 = vmatpush1.bf16.msra.mxu0 0
  %3119 = vmatprep.subr.bf16.mxu0 0
  %3120 = vmatpush1.bf16.msra.mxu0 0
  %3121 = vmatprep.subr.bf16.mxu0 0
  %3122 = vmatpush1.bf16.msra.mxu0 0
  %3123 = vmatprep.subr.bf16.mxu0 0
  %3124 = vmatpush1.bf16.msra.mxu0 0
  %3125 = vmatprep.subr.bf16.mxu0 0
  %3126 = vmatpush1.bf16.msra.mxu0 0
  %3127 = vmatprep.subr.bf16.mxu0 0
  %3128 = vmatpush1.bf16.msra.mxu0 0
  %3129 = vmatprep.subr.bf16.mxu0 0
  %3130 = vmatpush1.bf16.msra.mxu0 0
  %3131 = vmatprep.subr.bf16.mxu0 0
  %3132 = vmatpush1.bf16.msra.mxu0 0
  %3133 = vmatprep.subr.bf16.mxu0 0
  %3134 = vmatpush1.bf16.msra.mxu0 0
  %3135 = vmatprep.mubr.bf16.mxu0 0
  %3136 = vmatmul.mubr.bf16.gmra.mrb[0].mxu0 %v3042
  %v3137 = vpop.f32.mrb[0].mxu0
  %v3138 = vadd.f32 0.0, %v3137
  %v3139 = vpop.f32.mrb[0].mxu0
  %v3140 = vadd.f32 0.0, %v3139
  %v3141 = vpop.f32.mrb[0].mxu0
  %v3142 = vpop.f32.mrb[0].mxu0
  %3143 = vdwg.mxu0
  %3144 = vmatprep.subr.bf16.mxu0 %v3060
  %3145 = vmatpush1.bf16.msra.mxu0 %v3057
  %3146 = vmatprep.subr.bf16.mxu0 0
  %3147 = vmatpush1.bf16.msra.mxu0 0
  %3148 = vmatprep.subr.bf16.mxu0 0
  %3149 = vmatpush1.bf16.msra.mxu0 0
  %3150 = vmatprep.subr.bf16.mxu0 0
  %3151 = vmatpush1.bf16.msra.mxu0 0
  %3152 = vmatprep.subr.bf16.mxu0 0
  %3153 = vmatpush1.bf16.msra.mxu0 0
  %3154 = vmatprep.subr.bf16.mxu0 0
  %3155 = vmatpush1.bf16.msra.mxu0 0
  %3156 = vmatprep.subr.bf16.mxu0 0
  %3157 = vmatpush1.bf16.msra.mxu0 0
  %3158 = vmatprep.subr.bf16.mxu0 0
  %3159 = vmatpush1.bf16.msra.mxu0 0
  %3160 = vmatprep.subr.bf16.mxu0 0
  %3161 = vmatpush1.bf16.msra.mxu0 0
  %3162 = vmatprep.subr.bf16.mxu0 0
  %3163 = vmatpush1.bf16.msra.mxu0 0
  %3164 = vmatprep.subr.bf16.mxu0 0
  %3165 = vmatpush1.bf16.msra.mxu0 0
  %3166 = vmatprep.subr.bf16.mxu0 0
  %3167 = vmatpush1.bf16.msra.mxu0 0
  %3168 = vmatprep.subr.bf16.mxu0 0
  %3169 = vmatpush1.bf16.msra.mxu0 0
  %3170 = vmatprep.subr.bf16.mxu0 0
  %3171 = vmatpush1.bf16.msra.mxu0 0
  %3172 = vmatprep.subr.bf16.mxu0 0
  %3173 = vmatpush1.bf16.msra.mxu0 0
  %3174 = vmatprep.subr.bf16.mxu0 0
  %3175 = vmatpush1.bf16.msra.mxu0 0
  %3176 = vmatprep.mubr.bf16.mxu0 0
  %3177 = vmatmul.mubr.bf16.gmra.mrb[0].mxu0 %v3042
  %v3178 = vpop.f32.mrb[0].mxu0
  %v3179 = vadd.f32 0.0, %v3178
  %v3180 = vpop.f32.mrb[0].mxu0
  %v3181 = vadd.f32 0.0, %v3180
  %v3182 = vpop.f32.mrb[0].mxu0
  %v3183 = vpop.f32.mrb[0].mxu0
  %3184 = vdwg.mxu0
  %v3185 = vadd.f32 %v3015, %v3097
  %v3186 = vadd.f32 %v3016, %v3099
  %v3187 = vadd.f32 %v3017, %v3138
  %v3188 = vadd.f32 %v3018, %v3140
  %v3189 = vadd.f32 %v3019, %v3179
  %v3190 = vadd.f32 %v3020, %v3181
  %s3191 = scalar_lea.vmem %s4, 64
  %v3192 = vld [vmem:[%s3191] sm:$0xff]
  %v3193 = vpack.c.bf16 %v3192, %v3192
  %3194 = vrot.lane.b32.xlu0 %v2345, 109
  %v3195 = vpop.permute.xlu0 %3194
  %3196 = vrot.lane.b32.xlu0 %v2346, 109
  %v3197 = vpop.permute.xlu0 %3196
  %3198 = vrot.lane.b32.xlu0 %v2347, 109
  %v3199 = vpop.permute.xlu0 %3198
  %3200 = vrot.lane.b32.xlu0 %v2348, 109
  %v3201 = vpop.permute.xlu0 %3200
  %3202 = vrot.lane.b32.xlu0 %v2349, 109
  %v3203 = vpop.permute.xlu0 %3202
  %3204 = vrot.lane.b32.xlu0 %v2350, 109
  %v3205 = vpop.permute.xlu0 %3204
  %v3206 = vsel %vm1600, %v3195, %v3197
  %v3207 = vsel %vm1600, %v3197, %v3199
  %v3208 = vsel %vm1600, %v3199, %v3201
  %v3209 = vsel %vm1600, %v3201, %v3203
  %v3210 = vsel %vm1600, %v3203, %v3205
  %v3212 = vsel %vm1816, %v3193, 0
  %v3215 = vsel %vm1861, %v3206, 0
  %v3218 = vsel %vm1861, %v3207, 0
  %v3221 = vsel %vm1861, %v3208, 0
  %v3224 = vsel %vm1861, %v3209, 0
  %v3227 = vsel %vm1861, %v3210, 0
  %v3230 = vsel %vm1861, %v3205, 0
  %3232 = vmatprep.subr.bf16.mxu0 %v3218
  %3233 = vmatpush1.bf16.msra.mxu0 %v3215
  %3234 = vmatprep.subr.bf16.mxu0 0
  %3235 = vmatpush1.bf16.msra.mxu0 0
  %3236 = vmatprep.subr.bf16.mxu0 0
  %3237 = vmatpush1.bf16.msra.mxu0 0
  %3238 = vmatprep.subr.bf16.mxu0 0
  %3239 = vmatpush1.bf16.msra.mxu0 0
  %3240 = vmatprep.subr.bf16.mxu0 0
  %3241 = vmatpush1.bf16.msra.mxu0 0
  %3242 = vmatprep.subr.bf16.mxu0 0
  %3243 = vmatpush1.bf16.msra.mxu0 0
  %3244 = vmatprep.subr.bf16.mxu0 0
  %3245 = vmatpush1.bf16.msra.mxu0 0
  %3246 = vmatprep.subr.bf16.mxu0 0
  %3247 = vmatpush1.bf16.msra.mxu0 0
  %3248 = vmatprep.subr.bf16.mxu0 0
  %3249 = vmatpush1.bf16.msra.mxu0 0
  %3250 = vmatprep.subr.bf16.mxu0 0
  %3251 = vmatpush1.bf16.msra.mxu0 0
  %3252 = vmatprep.subr.bf16.mxu0 0
  %3253 = vmatpush1.bf16.msra.mxu0 0
  %3254 = vmatprep.subr.bf16.mxu0 0
  %3255 = vmatpush1.bf16.msra.mxu0 0
  %3256 = vmatprep.subr.bf16.mxu0 0
  %3257 = vmatpush1.bf16.msra.mxu0 0
  %3258 = vmatprep.subr.bf16.mxu0 0
  %3259 = vmatpush1.bf16.msra.mxu0 0
  %3260 = vmatprep.subr.bf16.mxu0 0
  %3261 = vmatpush1.bf16.msra.mxu0 0
  %3262 = vmatprep.subr.bf16.mxu0 0
  %3263 = vmatpush1.bf16.msra.mxu0 0
  %3264 = vmatprep.mubr.bf16.mxu0 0
  %3265 = vmatmul.mubr.bf16.gmra.mrb[0].mxu0 %v3212
  %v3266 = vpop.f32.mrb[0].mxu0
  %v3267 = vadd.f32 0.0, %v3266
  %v3268 = vpop.f32.mrb[0].mxu0
  %v3269 = vadd.f32 0.0, %v3268
  %v3270 = vpop.f32.mrb[0].mxu0
  %v3271 = vpop.f32.mrb[0].mxu0
  %3272 = vdwg.mxu0
  %3273 = vmatprep.subr.bf16.mxu0 %v3224
  %3274 = vmatpush1.bf16.msra.mxu0 %v3221
  %3275 = vmatprep.subr.bf16.mxu0 0
  %3276 = vmatpush1.bf16.msra.mxu0 0
  %3277 = vmatprep.subr.bf16.mxu0 0
  %3278 = vmatpush1.bf16.msra.mxu0 0
  %3279 = vmatprep.subr.bf16.mxu0 0
  %3280 = vmatpush1.bf16.msra.mxu0 0
  %3281 = vmatprep.subr.bf16.mxu0 0
  %3282 = vmatpush1.bf16.msra.mxu0 0
  %3283 = vmatprep.subr.bf16.mxu0 0
  %3284 = vmatpush1.bf16.msra.mxu0 0
  %3285 = vmatprep.subr.bf16.mxu0 0
  %3286 = vmatpush1.bf16.msra.mxu0 0
  %3287 = vmatprep.subr.bf16.mxu0 0
  %3288 = vmatpush1.bf16.msra.mxu0 0
  %3289 = vmatprep.subr.bf16.mxu0 0
  %3290 = vmatpush1.bf16.msra.mxu0 0
  %3291 = vmatprep.subr.bf16.mxu0 0
  %3292 = vmatpush1.bf16.msra.mxu0 0
  %3293 = vmatprep.subr.bf16.mxu0 0
  %3294 = vmatpush1.bf16.msra.mxu0 0
  %3295 = vmatprep.subr.bf16.mxu0 0
  %3296 = vmatpush1.bf16.msra.mxu0 0
  %3297 = vmatprep.subr.bf16.mxu0 0
  %3298 = vmatpush1.bf16.msra.mxu0 0
  %3299 = vmatprep.subr.bf16.mxu0 0
  %3300 = vmatpush1.bf16.msra.mxu0 0
  %3301 = vmatprep.subr.bf16.mxu0 0
  %3302 = vmatpush1.bf16.msra.mxu0 0
  %3303 = vmatprep.subr.bf16.mxu0 0
  %3304 = vmatpush1.bf16.msra.mxu0 0
  %3305 = vmatprep.mubr.bf16.mxu0 0
  %3306 = vmatmul.mubr.bf16.gmra.mrb[0].mxu0 %v3212
  %v3307 = vpop.f32.mrb[0].mxu0
  %v3308 = vadd.f32 0.0, %v3307
  %v3309 = vpop.f32.mrb[0].mxu0
  %v3310 = vadd.f32 0.0, %v3309
  %v3311 = vpop.f32.mrb[0].mxu0
  %v3312 = vpop.f32.mrb[0].mxu0
  %3313 = vdwg.mxu0
  %3314 = vmatprep.subr.bf16.mxu0 %v3230
  %3315 = vmatpush1.bf16.msra.mxu0 %v3227
  %3316 = vmatprep.subr.bf16.mxu0 0
  %3317 = vmatpush1.bf16.msra.mxu0 0
  %3318 = vmatprep.subr.bf16.mxu0 0
  %3319 = vmatpush1.bf16.msra.mxu0 0
  %3320 = vmatprep.subr.bf16.mxu0 0
  %3321 = vmatpush1.bf16.msra.mxu0 0
  %3322 = vmatprep.subr.bf16.mxu0 0
  %3323 = vmatpush1.bf16.msra.mxu0 0
  %3324 = vmatprep.subr.bf16.mxu0 0
  %3325 = vmatpush1.bf16.msra.mxu0 0
  %3326 = vmatprep.subr.bf16.mxu0 0
  %3327 = vmatpush1.bf16.msra.mxu0 0
  %3328 = vmatprep.subr.bf16.mxu0 0
  %3329 = vmatpush1.bf16.msra.mxu0 0
  %3330 = vmatprep.subr.bf16.mxu0 0
  %3331 = vmatpush1.bf16.msra.mxu0 0
  %3332 = vmatprep.subr.bf16.mxu0 0
  %3333 = vmatpush1.bf16.msra.mxu0 0
  %3334 = vmatprep.subr.bf16.mxu0 0
  %3335 = vmatpush1.bf16.msra.mxu0 0
  %3336 = vmatprep.subr.bf16.mxu0 0
  %3337 = vmatpush1.bf16.msra.mxu0 0
  %3338 = vmatprep.subr.bf16.mxu0 0
  %3339 = vmatpush1.bf16.msra.mxu0 0
  %3340 = vmatprep.subr.bf16.mxu0 0
  %3341 = vmatpush1.bf16.msra.mxu0 0
  %3342 = vmatprep.subr.bf16.mxu0 0
  %3343 = vmatpush1.bf16.msra.mxu0 0
  %3344 = vmatprep.subr.bf16.mxu0 0
  %3345 = vmatpush1.bf16.msra.mxu0 0
  %3346 = vmatprep.mubr.bf16.mxu0 0
  %3347 = vmatmul.mubr.bf16.gmra.mrb[0].mxu0 %v3212
  %v3348 = vpop.f32.mrb[0].mxu0
  %v3349 = vadd.f32 0.0, %v3348
  %v3350 = vpop.f32.mrb[0].mxu0
  %v3351 = vadd.f32 0.0, %v3350
  %v3352 = vpop.f32.mrb[0].mxu0
  %v3353 = vpop.f32.mrb[0].mxu0
  %3354 = vdwg.mxu0
  %v3355 = vadd.f32 %v3185, %v3267
  %v3356 = vadd.f32 %v3186, %v3269
  %v3357 = vadd.f32 %v3187, %v3308
  %v3358 = vadd.f32 %v3188, %v3310
  %v3359 = vadd.f32 %v3189, %v3349
  %v3360 = vadd.f32 %v3190, %v3351
  %v3361 = vld [vmem:[%s5] sm:$0xff]
  %3363 = vset.pattern.permute.xlu0 0
  %3364 = vperm.xlu0 %3363, %v3361
  %v3365 = vpop.permute.xlu0 %3364
  %v3367 = vadd.f32 %v3355, %v3365
  %v3368 = vadd.f32 %v3356, %v3365
  %v3369 = vadd.f32 %v3357, %v3365
  %v3370 = vadd.f32 %v3358, %v3365
  %v3371 = vadd.f32 %v3359, %v3365
  %v3372 = vadd.f32 %v3360, %v3365
  %v3373 = vadd.f32 %v1799, %v3367
  %v3374 = vadd.f32 %v1800, %v3368
  %v3375 = vadd.f32 %v1801, %v3369
  %v3376 = vadd.f32 %v1802, %v3370
  %v3377 = vadd.f32 %v1803, %v3371
  %v3378 = vadd.f32 %v1804, %v3372
  %v3379 = vmax.f32 %v3373, 0.0
  %v3380 = vmax.f32 %v3374, 0.0
  %v3381 = vmax.f32 %v3375, 0.0
  %v3382 = vmax.f32 %v3376, 0.0
  %v3383 = vmax.f32 %v3377, 0.0
  %v3384 = vmax.f32 %v3378, 0.0
  %v3385 = vmul.f32 %v3379, %v1772
  %v3386 = vmul.f32 %v3380, %v1776
  %v3387 = vmul.f32 %v3381, %v1780
  %v3388 = vmul.f32 %v3382, %v1784
  %v3389 = vmul.f32 %v3383, %v1788
  %v3390 = vmul.f32 %v3384, %v1792
  %3391 = vst [vmem:[#allocation3 + $0x8] sm:$0xff] %v3385
  %3392 = vst [vmem:[#allocation3 + $0x10] sm:$0xff] %v3386
  %3393 = vst [vmem:[#allocation3 + $0x18] sm:$0xff] %v3387
  %3394 = vst [vmem:[#allocation3 + $0x20] sm:$0xff] %v3388
  %3395 = vst [vmem:[#allocation3 + $0x28] sm:$0xff] %v3389
  %3396 = vst.msk [vmem:[#allocation3 + $0x30] sm:$0xff] %vm1816, %v3390
  %v3397 = vld [vmem:[#allocation3] sm:$0xff]
  %v3398 = vld [vmem:[#allocation3 + $0x8] sm:$0xff]
  %v3399 = vld [vmem:[#allocation3 + $0x10] sm:$0xff]
  %v3400 = vld [vmem:[#allocation3 + $0x18] sm:$0xff]
  %v3401 = vld [vmem:[#allocation3 + $0x20] sm:$0xff]
  %v3402 = vld [vmem:[#allocation3 + $0x28] sm:$0xff]
  %v3403 = vld [vmem:[%s6] sm:$0xff]
  %v3404 = vld [vmem:[%s6 + $0x8] sm:$0xff]
  %v3405 = vpack.c.bf16 %v3404, %v3403
  %v3406 = vpack.c.bf16 %v3397, %v3397
  %v3407 = vpack.c.bf16 %v3398, %v3398
  %v3408 = vpack.c.bf16 %v3399, %v3399
  %v3409 = vpack.c.bf16 %v3400, %v3400
  %v3410 = vpack.c.bf16 %v3401, %v3401
  %v3411 = vpack.c.bf16 %v3402, %v3402
  %s3412 = scalar_lea.vmem %s6, 16
  %v3413 = vld [vmem:[%s3412] sm:$0xff]
  %v3414 = vld [vmem:[%s3412 + $0x8] sm:$0xff]
  %v3415 = vpack.c.bf16 %v3414, %v3413
  %3422 = vrot.lane.b32.xlu0 %v3406, 18
  %v3423 = vpop.permute.xlu0 %3422
  %3424 = vrot.lane.b32.xlu0 %v3407, 18
  %v3425 = vpop.permute.xlu0 %3424
  %3426 = vrot.lane.b32.xlu0 %v3408, 18
  %v3427 = vpop.permute.xlu0 %3426
  %3428 = vrot.lane.b32.xlu0 %v3409, 18
  %v3429 = vpop.permute.xlu0 %3428
  %3430 = vrot.lane.b32.xlu0 %v3410, 18
  %v3431 = vpop.permute.xlu0 %3430
  %3432 = vrot.lane.b32.xlu0 %v3411, 18
  %v3433 = vpop.permute.xlu0 %3432
  %v3434 = vsel %vm95, %v3423, %v3425
  %v3435 = vsel %vm95, %v3425, %v3427
  %v3436 = vsel %vm95, %v3427, %v3429
  %v3437 = vsel %vm95, %v3429, %v3431
  %v3438 = vsel %vm95, %v3431, %v3433
  %v3440 = vsel %vm1816, %v3415, 0
  %v3443 = vsel %vm1861, %v3434, 0
  %v3446 = vsel %vm1861, %v3435, 0
  %v3449 = vsel %vm1861, %v3436, 0
  %v3452 = vsel %vm1861, %v3437, 0
  %v3455 = vsel %vm1861, %v3438, 0
  %v3458 = vsel %vm1861, %v3433, 0
  %3460 = vmatprep.subr.bf16.mxu0 %v3446
  %3461 = vmatpush1.bf16.msra.mxu0 %v3443
  %3462 = vmatprep.subr.bf16.mxu0 0
  %3463 = vmatpush1.bf16.msra.mxu0 0
  %3464 = vmatprep.subr.bf16.mxu0 0
  %3465 = vmatpush1.bf16.msra.mxu0 0
  %3466 = vmatprep.subr.bf16.mxu0 0
  %3467 = vmatpush1.bf16.msra.mxu0 0
  %3468 = vmatprep.subr.bf16.mxu0 0
  %3469 = vmatpush1.bf16.msra.mxu0 0
  %3470 = vmatprep.subr.bf16.mxu0 0
  %3471 = vmatpush1.bf16.msra.mxu0 0
  %3472 = vmatprep.subr.bf16.mxu0 0
  %3473 = vmatpush1.bf16.msra.mxu0 0
  %3474 = vmatprep.subr.bf16.mxu0 0
  %3475 = vmatpush1.bf16.msra.mxu0 0
  %3476 = vmatprep.subr.bf16.mxu0 0
  %3477 = vmatpush1.bf16.msra.mxu0 0
  %3478 = vmatprep.subr.bf16.mxu0 0
  %3479 = vmatpush1.bf16.msra.mxu0 0
  %3480 = vmatprep.subr.bf16.mxu0 0
  %3481 = vmatpush1.bf16.msra.mxu0 0
  %3482 = vmatprep.subr.bf16.mxu0 0
  %3483 = vmatpush1.bf16.msra.mxu0 0
  %3484 = vmatprep.subr.bf16.mxu0 0
  %3485 = vmatpush1.bf16.msra.mxu0 0
  %3486 = vmatprep.subr.bf16.mxu0 0
  %3487 = vmatpush1.bf16.msra.mxu0 0
  %3488 = vmatprep.subr.bf16.mxu0 0
  %3489 = vmatpush1.bf16.msra.mxu0 0
  %3490 = vmatprep.subr.bf16.mxu0 0
  %3491 = vmatpush1.bf16.msra.mxu0 0
  %3492 = vmatprep.mubr.bf16.mxu0 0
  %3493 = vmatmul.mubr.bf16.gmra.mrb[0].mxu0 %v3440
  %v3494 = vpop.f32.mrb[0].mxu0
  %v3495 = vadd.f32 0.0, %v3494
  %v3496 = vpop.f32.mrb[0].mxu0
  %v3497 = vadd.f32 0.0, %v3496
  %v3498 = vpop.f32.mrb[0].mxu0
  %v3499 = vadd.f32 0.0, %v3498
  %v3500 = vpop.f32.mrb[0].mxu0
  %v3501 = vadd.f32 0.0, %v3500
  %3502 = vdwg.mxu0
  %3503 = vmatprep.subr.bf16.mxu0 %v3452
  %3504 = vmatpush1.bf16.msra.mxu0 %v3449
  %3505 = vmatprep.subr.bf16.mxu0 0
  %3506 = vmatpush1.bf16.msra.mxu0 0
  %3507 = vmatprep.subr.bf16.mxu0 0
  %3508 = vmatpush1.bf16.msra.mxu0 0
  %3509 = vmatprep.subr.bf16.mxu0 0
  %3510 = vmatpush1.bf16.msra.mxu0 0
  %3511 = vmatprep.subr.bf16.mxu0 0
  %3512 = vmatpush1.bf16.msra.mxu0 0
  %3513 = vmatprep.subr.bf16.mxu0 0
  %3514 = vmatpush1.bf16.msra.mxu0 0
  %3515 = vmatprep.subr.bf16.mxu0 0
  %3516 = vmatpush1.bf16.msra.mxu0 0
  %3517 = vmatprep.subr.bf16.mxu0 0
  %3518 = vmatpush1.bf16.msra.mxu0 0
  %3519 = vmatprep.subr.bf16.mxu0 0
  %3520 = vmatpush1.bf16.msra.mxu0 0
  %3521 = vmatprep.subr.bf16.mxu0 0
  %3522 = vmatpush1.bf16.msra.mxu0 0
  %3523 = vmatprep.subr.bf16.mxu0 0
  %3524 = vmatpush1.bf16.msra.mxu0 0
  %3525 = vmatprep.subr.bf16.mxu0 0
  %3526 = vmatpush1.bf16.msra.mxu0 0
  %3527 = vmatprep.subr.bf16.mxu0 0
  %3528 = vmatpush1.bf16.msra.mxu0 0
  %3529 = vmatprep.subr.bf16.mxu0 0
  %3530 = vmatpush1.bf16.msra.mxu0 0
  %3531 = vmatprep.subr.bf16.mxu0 0
  %3532 = vmatpush1.bf16.msra.mxu0 0
  %3533 = vmatprep.subr.bf16.mxu0 0
  %3534 = vmatpush1.bf16.msra.mxu0 0
  %3535 = vmatprep.mubr.bf16.mxu0 0
  %3536 = vmatmul.mubr.bf16.gmra.mrb[0].mxu0 %v3440
  %v3537 = vpop.f32.mrb[0].mxu0
  %v3538 = vadd.f32 0.0, %v3537
  %v3539 = vpop.f32.mrb[0].mxu0
  %v3540 = vadd.f32 0.0, %v3539
  %v3541 = vpop.f32.mrb[0].mxu0
  %v3542 = vadd.f32 0.0, %v3541
  %v3543 = vpop.f32.mrb[0].mxu0
  %v3544 = vadd.f32 0.0, %v3543
  %3545 = vdwg.mxu0
  %3546 = vmatprep.subr.bf16.mxu0 %v3458
  %3547 = vmatpush1.bf16.msra.mxu0 %v3455
  %3548 = vmatprep.subr.bf16.mxu0 0
  %3549 = vmatpush1.bf16.msra.mxu0 0
  %3550 = vmatprep.subr.bf16.mxu0 0
  %3551 = vmatpush1.bf16.msra.mxu0 0
  %3552 = vmatprep.subr.bf16.mxu0 0
  %3553 = vmatpush1.bf16.msra.mxu0 0
  %3554 = vmatprep.subr.bf16.mxu0 0
  %3555 = vmatpush1.bf16.msra.mxu0 0
  %3556 = vmatprep.subr.bf16.mxu0 0
  %3557 = vmatpush1.bf16.msra.mxu0 0
  %3558 = vmatprep.subr.bf16.mxu0 0
  %3559 = vmatpush1.bf16.msra.mxu0 0
  %3560 = vmatprep.subr.bf16.mxu0 0
  %3561 = vmatpush1.bf16.msra.mxu0 0
  %3562 = vmatprep.subr.bf16.mxu0 0
  %3563 = vmatpush1.bf16.msra.mxu0 0
  %3564 = vmatprep.subr.bf16.mxu0 0
  %3565 = vmatpush1.bf16.msra.mxu0 0
  %3566 = vmatprep.subr.bf16.mxu0 0
  %3567 = vmatpush1.bf16.msra.mxu0 0
  %3568 = vmatprep.subr.bf16.mxu0 0
  %3569 = vmatpush1.bf16.msra.mxu0 0
  %3570 = vmatprep.subr.bf16.mxu0 0
  %3571 = vmatpush1.bf16.msra.mxu0 0
  %3572 = vmatprep.subr.bf16.mxu0 0
  %3573 = vmatpush1.bf16.msra.mxu0 0
  %3574 = vmatprep.subr.bf16.mxu0 0
  %3575 = vmatpush1.bf16.msra.mxu0 0
  %3576 = vmatprep.subr.bf16.mxu0 0
  %3577 = vmatpush1.bf16.msra.mxu0 0
  %3578 = vmatprep.mubr.bf16.mxu0 0
  %3579 = vmatmul.mubr.bf16.gmra.mrb[0].mxu0 %v3440
  %v3580 = vpop.f32.mrb[0].mxu0
  %v3581 = vadd.f32 0.0, %v3580
  %v3582 = vpop.f32.mrb[0].mxu0
  %v3583 = vadd.f32 0.0, %v3582
  %v3584 = vpop.f32.mrb[0].mxu0
  %v3585 = vadd.f32 0.0, %v3584
  %v3586 = vpop.f32.mrb[0].mxu0
  %v3587 = vadd.f32 0.0, %v3586
  %3588 = vdwg.mxu0
  %3589 = vrot.lane.b32.xlu0 %v3406, 19
  %v3590 = vpop.permute.xlu0 %3589
  %3591 = vrot.lane.b32.xlu0 %v3407, 19
  %v3592 = vpop.permute.xlu0 %3591
  %3593 = vrot.lane.b32.xlu0 %v3408, 19
  %v3594 = vpop.permute.xlu0 %3593
  %3595 = vrot.lane.b32.xlu0 %v3409, 19
  %v3596 = vpop.permute.xlu0 %3595
  %3597 = vrot.lane.b32.xlu0 %v3410, 19
  %v3598 = vpop.permute.xlu0 %3597
  %3599 = vrot.lane.b32.xlu0 %v3411, 19
  %v3600 = vpop.permute.xlu0 %3599
  %v3601 = vsel %vm259, %v3590, %v3592
  %v3602 = vsel %vm259, %v3592, %v3594
  %v3603 = vsel %vm259, %v3594, %v3596
  %v3604 = vsel %vm259, %v3596, %v3598
  %v3605 = vsel %vm259, %v3598, %v3600
  %v3607 = vsel %vm1816, %v3405, 0
  %v3610 = vsel %vm1861, %v3601, 0
  %v3613 = vsel %vm1861, %v3602, 0
  %v3616 = vsel %vm1861, %v3603, 0
  %v3619 = vsel %vm1861, %v3604, 0
  %v3622 = vsel %vm1861, %v3605, 0
  %v3625 = vsel %vm1861, %v3600, 0
  %3627 = vmatprep.subr.bf16.mxu0 %v3613
  %3628 = vmatpush1.bf16.msra.mxu0 %v3610
  %3629 = vmatprep.subr.bf16.mxu0 0
  %3630 = vmatpush1.bf16.msra.mxu0 0
  %3631 = vmatprep.subr.bf16.mxu0 0
  %3632 = vmatpush1.bf16.msra.mxu0 0
  %3633 = vmatprep.subr.bf16.mxu0 0
  %3634 = vmatpush1.bf16.msra.mxu0 0
  %3635 = vmatprep.subr.bf16.mxu0 0
  %3636 = vmatpush1.bf16.msra.mxu0 0
  %3637 = vmatprep.subr.bf16.mxu0 0
  %3638 = vmatpush1.bf16.msra.mxu0 0
  %3639 = vmatprep.subr.bf16.mxu0 0
  %3640 = vmatpush1.bf16.msra.mxu0 0
  %3641 = vmatprep.subr.bf16.mxu0 0
  %3642 = vmatpush1.bf16.msra.mxu0 0
  %3643 = vmatprep.subr.bf16.mxu0 0
  %3644 = vmatpush1.bf16.msra.mxu0 0
  %3645 = vmatprep.subr.bf16.mxu0 0
  %3646 = vmatpush1.bf16.msra.mxu0 0
  %3647 = vmatprep.subr.bf16.mxu0 0
  %3648 = vmatpush1.bf16.msra.mxu0 0
  %3649 = vmatprep.subr.bf16.mxu0 0
  %3650 = vmatpush1.bf16.msra.mxu0 0
  %3651 = vmatprep.subr.bf16.mxu0 0
  %3652 = vmatpush1.bf16.msra.mxu0 0
  %3653 = vmatprep.subr.bf16.mxu0 0
  %3654 = vmatpush1.bf16.msra.mxu0 0
  %3655 = vmatprep.subr.bf16.mxu0 0
  %3656 = vmatpush1.bf16.msra.mxu0 0
  %3657 = vmatprep.subr.bf16.mxu0 0
  %3658 = vmatpush1.bf16.msra.mxu0 0
  %3659 = vmatprep.mubr.bf16.mxu0 0
  %3660 = vmatmul.mubr.bf16.gmra.mrb[0].mxu0 %v3607
  %v3661 = vpop.f32.mrb[0].mxu0
  %v3662 = vadd.f32 %v3495, %v3661
  %v3663 = vpop.f32.mrb[0].mxu0
  %v3664 = vadd.f32 %v3497, %v3663
  %v3665 = vpop.f32.mrb[0].mxu0
  %v3666 = vadd.f32 %v3499, %v3665
  %v3667 = vpop.f32.mrb[0].mxu0
  %v3668 = vadd.f32 %v3501, %v3667
  %3669 = vdwg.mxu0
  %3670 = vmatprep.subr.bf16.mxu0 %v3619
  %3671 = vmatpush1.bf16.msra.mxu0 %v3616
  %3672 = vmatprep.subr.bf16.mxu0 0
  %3673 = vmatpush1.bf16.msra.mxu0 0
  %3674 = vmatprep.subr.bf16.mxu0 0
  %3675 = vmatpush1.bf16.msra.mxu0 0
  %3676 = vmatprep.subr.bf16.mxu0 0
  %3677 = vmatpush1.bf16.msra.mxu0 0
  %3678 = vmatprep.subr.bf16.mxu0 0
  %3679 = vmatpush1.bf16.msra.mxu0 0
  %3680 = vmatprep.subr.bf16.mxu0 0
  %3681 = vmatpush1.bf16.msra.mxu0 0
  %3682 = vmatprep.subr.bf16.mxu0 0
  %3683 = vmatpush1.bf16.msra.mxu0 0
  %3684 = vmatprep.subr.bf16.mxu0 0
  %3685 = vmatpush1.bf16.msra.mxu0 0
  %3686 = vmatprep.subr.bf16.mxu0 0
  %3687 = vmatpush1.bf16.msra.mxu0 0
  %3688 = vmatprep.subr.bf16.mxu0 0
  %3689 = vmatpush1.bf16.msra.mxu0 0
  %3690 = vmatprep.subr.bf16.mxu0 0
  %3691 = vmatpush1.bf16.msra.mxu0 0
  %3692 = vmatprep.subr.bf16.mxu0 0
  %3693 = vmatpush1.bf16.msra.mxu0 0
  %3694 = vmatprep.subr.bf16.mxu0 0
  %3695 = vmatpush1.bf16.msra.mxu0 0
  %3696 = vmatprep.subr.bf16.mxu0 0
  %3697 = vmatpush1.bf16.msra.mxu0 0
  %3698 = vmatprep.subr.bf16.mxu0 0
  %3699 = vmatpush1.bf16.msra.mxu0 0
  %3700 = vmatprep.subr.bf16.mxu0 0
  %3701 = vmatpush1.bf16.msra.mxu0 0
  %3702 = vmatprep.mubr.bf16.mxu0 0
  %3703 = vmatmul.mubr.bf16.gmra.mrb[0].mxu0 %v3607
  %v3704 = vpop.f32.mrb[0].mxu0
  %v3705 = vadd.f32 %v3538, %v3704
  %v3706 = vpop.f32.mrb[0].mxu0
  %v3707 = vadd.f32 %v3540, %v3706
  %v3708 = vpop.f32.mrb[0].mxu0
  %v3709 = vadd.f32 %v3542, %v3708
  %v3710 = vpop.f32.mrb[0].mxu0
  %v3711 = vadd.f32 %v3544, %v3710
  %3712 = vdwg.mxu0
  %3713 = vmatprep.subr.bf16.mxu0 %v3625
  %3714 = vmatpush1.bf16.msra.mxu0 %v3622
  %3715 = vmatprep.subr.bf16.mxu0 0
  %3716 = vmatpush1.bf16.msra.mxu0 0
  %3717 = vmatprep.subr.bf16.mxu0 0
  %3718 = vmatpush1.bf16.msra.mxu0 0
  %3719 = vmatprep.subr.bf16.mxu0 0
  %3720 = vmatpush1.bf16.msra.mxu0 0
  %3721 = vmatprep.subr.bf16.mxu0 0
  %3722 = vmatpush1.bf16.msra.mxu0 0
  %3723 = vmatprep.subr.bf16.mxu0 0
  %3724 = vmatpush1.bf16.msra.mxu0 0
  %3725 = vmatprep.subr.bf16.mxu0 0
  %3726 = vmatpush1.bf16.msra.mxu0 0
  %3727 = vmatprep.subr.bf16.mxu0 0
  %3728 = vmatpush1.bf16.msra.mxu0 0
  %3729 = vmatprep.subr.bf16.mxu0 0
  %3730 = vmatpush1.bf16.msra.mxu0 0
  %3731 = vmatprep.subr.bf16.mxu0 0
  %3732 = vmatpush1.bf16.msra.mxu0 0
  %3733 = vmatprep.subr.bf16.mxu0 0
  %3734 = vmatpush1.bf16.msra.mxu0 0
  %3735 = vmatprep.subr.bf16.mxu0 0
  %3736 = vmatpush1.bf16.msra.mxu0 0
  %3737 = vmatprep.subr.bf16.mxu0 0
  %3738 = vmatpush1.bf16.msra.mxu0 0
  %3739 = vmatprep.subr.bf16.mxu0 0
  %3740 = vmatpush1.bf16.msra.mxu0 0
  %3741 = vmatprep.subr.bf16.mxu0 0
  %3742 = vmatpush1.bf16.msra.mxu0 0
  %3743 = vmatprep.subr.bf16.mxu0 0
  %3744 = vmatpush1.bf16.msra.mxu0 0
  %3745 = vmatprep.mubr.bf16.mxu0 0
  %3746 = vmatmul.mubr.bf16.gmra.mrb[0].mxu0 %v3607
  %v3747 = vpop.f32.mrb[0].mxu0
  %v3748 = vadd.f32 %v3581, %v3747
  %v3749 = vpop.f32.mrb[0].mxu0
  %v3750 = vadd.f32 %v3583, %v3749
  %v3751 = vpop.f32.mrb[0].mxu0
  %v3752 = vadd.f32 %v3585, %v3751
  %v3753 = vpop.f32.mrb[0].mxu0
  %v3754 = vadd.f32 %v3587, %v3753
  %3755 = vdwg.mxu0
  %s3756 = scalar_lea.vmem %s6, 32
  %v3757 = vld [vmem:[%s3756] sm:$0xff]
  %v3758 = vld [vmem:[%s3756 + $0x8] sm:$0xff]
  %v3759 = vpack.c.bf16 %v3758, %v3757
  %3760 = vrot.lane.b32.xlu0 %v3406, 17
  %v3761 = vpop.permute.xlu0 %3760
  %3762 = vrot.lane.b32.xlu0 %v3407, 17
  %v3763 = vpop.permute.xlu0 %3762
  %3764 = vrot.lane.b32.xlu0 %v3408, 17
  %v3765 = vpop.permute.xlu0 %3764
  %3766 = vrot.lane.b32.xlu0 %v3409, 17
  %v3767 = vpop.permute.xlu0 %3766
  %3768 = vrot.lane.b32.xlu0 %v3410, 17
  %v3769 = vpop.permute.xlu0 %3768
  %3770 = vrot.lane.b32.xlu0 %v3411, 17
  %v3771 = vpop.permute.xlu0 %3770
  %v3772 = vsel %vm448, %v3761, %v3763
  %v3773 = vsel %vm448, %v3763, %v3765
  %v3774 = vsel %vm448, %v3765, %v3767
  %v3775 = vsel %vm448, %v3767, %v3769
  %v3776 = vsel %vm448, %v3769, %v3771
  %v3778 = vsel %vm1816, %v3759, 0
  %v3781 = vsel %vm1861, %v3772, 0
  %v3784 = vsel %vm1861, %v3773, 0
  %v3787 = vsel %vm1861, %v3774, 0
  %v3790 = vsel %vm1861, %v3775, 0
  %v3793 = vsel %vm1861, %v3776, 0
  %v3796 = vsel %vm1861, %v3771, 0
  %3798 = vmatprep.subr.bf16.mxu0 %v3784
  %3799 = vmatpush1.bf16.msra.mxu0 %v3781
  %3800 = vmatprep.subr.bf16.mxu0 0
  %3801 = vmatpush1.bf16.msra.mxu0 0
  %3802 = vmatprep.subr.bf16.mxu0 0
  %3803 = vmatpush1.bf16.msra.mxu0 0
  %3804 = vmatprep.subr.bf16.mxu0 0
  %3805 = vmatpush1.bf16.msra.mxu0 0
  %3806 = vmatprep.subr.bf16.mxu0 0
  %3807 = vmatpush1.bf16.msra.mxu0 0
  %3808 = vmatprep.subr.bf16.mxu0 0
  %3809 = vmatpush1.bf16.msra.mxu0 0
  %3810 = vmatprep.subr.bf16.mxu0 0
  %3811 = vmatpush1.bf16.msra.mxu0 0
  %3812 = vmatprep.subr.bf16.mxu0 0
  %3813 = vmatpush1.bf16.msra.mxu0 0
  %3814 = vmatprep.subr.bf16.mxu0 0
  %3815 = vmatpush1.bf16.msra.mxu0 0
  %3816 = vmatprep.subr.bf16.mxu0 0
  %3817 = vmatpush1.bf16.msra.mxu0 0
  %3818 = vmatprep.subr.bf16.mxu0 0
  %3819 = vmatpush1.bf16.msra.mxu0 0
  %3820 = vmatprep.subr.bf16.mxu0 0
  %3821 = vmatpush1.bf16.msra.mxu0 0
  %3822 = vmatprep.subr.bf16.mxu0 0
  %3823 = vmatpush1.bf16.msra.mxu0 0
  %3824 = vmatprep.subr.bf16.mxu0 0
  %3825 = vmatpush1.bf16.msra.mxu0 0
  %3826 = vmatprep.subr.bf16.mxu0 0
  %3827 = vmatpush1.bf16.msra.mxu0 0
  %3828 = vmatprep.subr.bf16.mxu0 0
  %3829 = vmatpush1.bf16.msra.mxu0 0
  %3830 = vmatprep.mubr.bf16.mxu0 0
  %3831 = vmatmul.mubr.bf16.gmra.mrb[0].mxu0 %v3778
  %v3832 = vpop.f32.mrb[0].mxu0
  %v3833 = vadd.f32 0.0, %v3832
  %v3834 = vpop.f32.mrb[0].mxu0
  %v3835 = vadd.f32 0.0, %v3834
  %v3836 = vpop.f32.mrb[0].mxu0
  %v3837 = vadd.f32 0.0, %v3836
  %v3838 = vpop.f32.mrb[0].mxu0
  %v3839 = vadd.f32 0.0, %v3838
  %3840 = vdwg.mxu0
  %3841 = vmatprep.subr.bf16.mxu0 %v3790
  %3842 = vmatpush1.bf16.msra.mxu0 %v3787
  %3843 = vmatprep.subr.bf16.mxu0 0
  %3844 = vmatpush1.bf16.msra.mxu0 0
  %3845 = vmatprep.subr.bf16.mxu0 0
  %3846 = vmatpush1.bf16.msra.mxu0 0
  %3847 = vmatprep.subr.bf16.mxu0 0
  %3848 = vmatpush1.bf16.msra.mxu0 0
  %3849 = vmatprep.subr.bf16.mxu0 0
  %3850 = vmatpush1.bf16.msra.mxu0 0
  %3851 = vmatprep.subr.bf16.mxu0 0
  %3852 = vmatpush1.bf16.msra.mxu0 0
  %3853 = vmatprep.subr.bf16.mxu0 0
  %3854 = vmatpush1.bf16.msra.mxu0 0
  %3855 = vmatprep.subr.bf16.mxu0 0
  %3856 = vmatpush1.bf16.msra.mxu0 0
  %3857 = vmatprep.subr.bf16.mxu0 0
  %3858 = vmatpush1.bf16.msra.mxu0 0
  %3859 = vmatprep.subr.bf16.mxu0 0
  %3860 = vmatpush1.bf16.msra.mxu0 0
  %3861 = vmatprep.subr.bf16.mxu0 0
  %3862 = vmatpush1.bf16.msra.mxu0 0
  %3863 = vmatprep.subr.bf16.mxu0 0
  %3864 = vmatpush1.bf16.msra.mxu0 0
  %3865 = vmatprep.subr.bf16.mxu0 0
  %3866 = vmatpush1.bf16.msra.mxu0 0
  %3867 = vmatprep.subr.bf16.mxu0 0
  %3868 = vmatpush1.bf16.msra.mxu0 0
  %3869 = vmatprep.subr.bf16.mxu0 0
  %3870 = vmatpush1.bf16.msra.mxu0 0
  %3871 = vmatprep.subr.bf16.mxu0 0
  %3872 = vmatpush1.bf16.msra.mxu0 0
  %3873 = vmatprep.mubr.bf16.mxu0 0
  %3874 = vmatmul.mubr.bf16.gmra.mrb[0].mxu0 %v3778
  %v3875 = vpop.f32.mrb[0].mxu0
  %v3876 = vadd.f32 0.0, %v3875
  %v3877 = vpop.f32.mrb[0].mxu0
  %v3878 = vadd.f32 0.0, %v3877
  %v3879 = vpop.f32.mrb[0].mxu0
  %v3880 = vadd.f32 0.0, %v3879
  %v3881 = vpop.f32.mrb[0].mxu0
  %v3882 = vadd.f32 0.0, %v3881
  %3883 = vdwg.mxu0
  %3884 = vmatprep.subr.bf16.mxu0 %v3796
  %3885 = vmatpush1.bf16.msra.mxu0 %v3793
  %3886 = vmatprep.subr.bf16.mxu0 0
  %3887 = vmatpush1.bf16.msra.mxu0 0
  %3888 = vmatprep.subr.bf16.mxu0 0
  %3889 = vmatpush1.bf16.msra.mxu0 0
  %3890 = vmatprep.subr.bf16.mxu0 0
  %3891 = vmatpush1.bf16.msra.mxu0 0
  %3892 = vmatprep.subr.bf16.mxu0 0
  %3893 = vmatpush1.bf16.msra.mxu0 0
  %3894 = vmatprep.subr.bf16.mxu0 0
  %3895 = vmatpush1.bf16.msra.mxu0 0
  %3896 = vmatprep.subr.bf16.mxu0 0
  %3897 = vmatpush1.bf16.msra.mxu0 0
  %3898 = vmatprep.subr.bf16.mxu0 0
  %3899 = vmatpush1.bf16.msra.mxu0 0
  %3900 = vmatprep.subr.bf16.mxu0 0
  %3901 = vmatpush1.bf16.msra.mxu0 0
  %3902 = vmatprep.subr.bf16.mxu0 0
  %3903 = vmatpush1.bf16.msra.mxu0 0
  %3904 = vmatprep.subr.bf16.mxu0 0
  %3905 = vmatpush1.bf16.msra.mxu0 0
  %3906 = vmatprep.subr.bf16.mxu0 0
  %3907 = vmatpush1.bf16.msra.mxu0 0
  %3908 = vmatprep.subr.bf16.mxu0 0
  %3909 = vmatpush1.bf16.msra.mxu0 0
  %3910 = vmatprep.subr.bf16.mxu0 0
  %3911 = vmatpush1.bf16.msra.mxu0 0
  %3912 = vmatprep.subr.bf16.mxu0 0
  %3913 = vmatpush1.bf16.msra.mxu0 0
  %3914 = vmatprep.subr.bf16.mxu0 0
  %3915 = vmatpush1.bf16.msra.mxu0 0
  %3916 = vmatprep.mubr.bf16.mxu0 0
  %3917 = vmatmul.mubr.bf16.gmra.mrb[0].mxu0 %v3778
  %v3918 = vpop.f32.mrb[0].mxu0
  %v3919 = vadd.f32 0.0, %v3918
  %v3920 = vpop.f32.mrb[0].mxu0
  %v3921 = vadd.f32 0.0, %v3920
  %v3922 = vpop.f32.mrb[0].mxu0
  %v3923 = vadd.f32 0.0, %v3922
  %v3924 = vpop.f32.mrb[0].mxu0
  %v3925 = vadd.f32 0.0, %v3924
  %3926 = vdwg.mxu0
  %v3927 = vadd.f32 %v3662, %v3833
  %v3928 = vadd.f32 %v3664, %v3835
  %v3929 = vadd.f32 %v3705, %v3876
  %v3930 = vadd.f32 %v3707, %v3878
  %v3931 = vadd.f32 %v3748, %v3919
  %v3932 = vadd.f32 %v3750, %v3921
  %v3933 = vadd.f32 %v3666, %v3837
  %v3934 = vadd.f32 %v3668, %v3839
  %v3935 = vadd.f32 %v3709, %v3880
  %v3936 = vadd.f32 %v3711, %v3882
  %v3937 = vadd.f32 %v3752, %v3923
  %v3938 = vadd.f32 %v3754, %v3925
  %v3939 = vld [vmem:[#allocation3] sm:$0xff]
  %v3940 = vld [vmem:[#allocation3 + $0x8] sm:$0xff]
  %v3941 = vld [vmem:[#allocation3 + $0x10] sm:$0xff]
  %v3942 = vld [vmem:[#allocation3 + $0x18] sm:$0xff]
  %v3943 = vld [vmem:[#allocation3 + $0x20] sm:$0xff]
  %v3944 = vld [vmem:[#allocation3 + $0x28] sm:$0xff]
  %v3945 = vld [vmem:[#allocation3 + $0x30] sm:$0xff]
  %s3946 = scalar_lea.vmem %s6, 48
  %v3947 = vld [vmem:[%s3946] sm:$0xff]
  %v3948 = vld [vmem:[%s3946 + $0x8] sm:$0xff]
  %v3949 = vpack.c.bf16 %v3948, %v3947
  %v3950 = vpack.c.bf16 %v3939, %v3939
  %v3951 = vpack.c.bf16 %v3940, %v3940
  %v3952 = vpack.c.bf16 %v3941, %v3941
  %v3953 = vpack.c.bf16 %v3942, %v3942
  %v3954 = vpack.c.bf16 %v3943, %v3943
  %v3955 = vpack.c.bf16 %v3944, %v3944
  %v3956 = vpack.c.bf16 %v3945, %v3945
  %3964 = vrot.lane.b32.xlu0 %v3950, 1
  %v3965 = vpop.permute.xlu0 %3964
  %3966 = vrot.lane.b32.xlu0 %v3951, 1
  %v3967 = vpop.permute.xlu0 %3966
  %3968 = vrot.lane.b32.xlu0 %v3952, 1
  %v3969 = vpop.permute.xlu0 %3968
  %3970 = vrot.lane.b32.xlu0 %v3953, 1
  %v3971 = vpop.permute.xlu0 %3970
  %3972 = vrot.lane.b32.xlu0 %v3954, 1
  %v3973 = vpop.permute.xlu0 %3972
  %3974 = vrot.lane.b32.xlu0 %v3955, 1
  %v3975 = vpop.permute.xlu0 %3974
  %3976 = vrot.lane.b32.xlu0 %v3956, 1
  %v3977 = vpop.permute.xlu0 %3976
  %v3978 = vsel %vm648, %v3965, %v3967
  %v3979 = vsel %vm648, %v3967, %v3969
  %v3980 = vsel %vm648, %v3969, %v3971
  %v3981 = vsel %vm648, %v3971, %v3973
  %v3982 = vsel %vm648, %v3973, %v3975
  %v3983 = vsel %vm648, %v3975, %v3977
  %v3985 = vsel %vm1816, %v3949, 0
  %v3988 = vsel %vm1861, %v3978, 0
  %v3991 = vsel %vm1861, %v3979, 0
  %v3994 = vsel %vm1861, %v3980, 0
  %v3997 = vsel %vm1861, %v3981, 0
  %v4000 = vsel %vm1861, %v3982, 0
  %v4003 = vsel %vm1861, %v3983, 0
  %4005 = vmatprep.subr.bf16.mxu0 %v3991
  %4006 = vmatpush1.bf16.msra.mxu0 %v3988
  %4007 = vmatprep.subr.bf16.mxu0 0
  %4008 = vmatpush1.bf16.msra.mxu0 0
  %4009 = vmatprep.subr.bf16.mxu0 0
  %4010 = vmatpush1.bf16.msra.mxu0 0
  %4011 = vmatprep.subr.bf16.mxu0 0
  %4012 = vmatpush1.bf16.msra.mxu0 0
  %4013 = vmatprep.subr.bf16.mxu0 0
  %4014 = vmatpush1.bf16.msra.mxu0 0
  %4015 = vmatprep.subr.bf16.mxu0 0
  %4016 = vmatpush1.bf16.msra.mxu0 0
  %4017 = vmatprep.subr.bf16.mxu0 0
  %4018 = vmatpush1.bf16.msra.mxu0 0
  %4019 = vmatprep.subr.bf16.mxu0 0
  %4020 = vmatpush1.bf16.msra.mxu0 0
  %4021 = vmatprep.subr.bf16.mxu0 0
  %4022 = vmatpush1.bf16.msra.mxu0 0
  %4023 = vmatprep.subr.bf16.mxu0 0
  %4024 = vmatpush1.bf16.msra.mxu0 0
  %4025 = vmatprep.subr.bf16.mxu0 0
  %4026 = vmatpush1.bf16.msra.mxu0 0
  %4027 = vmatprep.subr.bf16.mxu0 0
  %4028 = vmatpush1.bf16.msra.mxu0 0
  %4029 = vmatprep.subr.bf16.mxu0 0
  %4030 = vmatpush1.bf16.msra.mxu0 0
  %4031 = vmatprep.subr.bf16.mxu0 0
  %4032 = vmatpush1.bf16.msra.mxu0 0
  %4033 = vmatprep.subr.bf16.mxu0 0
  %4034 = vmatpush1.bf16.msra.mxu0 0
  %4035 = vmatprep.subr.bf16.mxu0 0
  %4036 = vmatpush1.bf16.msra.mxu0 0
  %4037 = vmatprep.mubr.bf16.mxu0 0
  %4038 = vmatmul.mubr.bf16.gmra.mrb[0].mxu0 %v3985
  %v4039 = vpop.f32.mrb[0].mxu0
  %v4040 = vadd.f32 0.0, %v4039
  %v4041 = vpop.f32.mrb[0].mxu0
  %v4042 = vadd.f32 0.0, %v4041
  %v4043 = vpop.f32.mrb[0].mxu0
  %v4044 = vadd.f32 0.0, %v4043
  %v4045 = vpop.f32.mrb[0].mxu0
  %v4046 = vadd.f32 0.0, %v4045
  %4047 = vdwg.mxu0
  %4048 = vmatprep.subr.bf16.mxu0 %v3997
  %4049 = vmatpush1.bf16.msra.mxu0 %v3994
  %4050 = vmatprep.subr.bf16.mxu0 0
  %4051 = vmatpush1.bf16.msra.mxu0 0
  %4052 = vmatprep.subr.bf16.mxu0 0
  %4053 = vmatpush1.bf16.msra.mxu0 0
  %4054 = vmatprep.subr.bf16.mxu0 0
  %4055 = vmatpush1.bf16.msra.mxu0 0
  %4056 = vmatprep.subr.bf16.mxu0 0
  %4057 = vmatpush1.bf16.msra.mxu0 0
  %4058 = vmatprep.subr.bf16.mxu0 0
  %4059 = vmatpush1.bf16.msra.mxu0 0
  %4060 = vmatprep.subr.bf16.mxu0 0
  %4061 = vmatpush1.bf16.msra.mxu0 0
  %4062 = vmatprep.subr.bf16.mxu0 0
  %4063 = vmatpush1.bf16.msra.mxu0 0
  %4064 = vmatprep.subr.bf16.mxu0 0
  %4065 = vmatpush1.bf16.msra.mxu0 0
  %4066 = vmatprep.subr.bf16.mxu0 0
  %4067 = vmatpush1.bf16.msra.mxu0 0
  %4068 = vmatprep.subr.bf16.mxu0 0
  %4069 = vmatpush1.bf16.msra.mxu0 0
  %4070 = vmatprep.subr.bf16.mxu0 0
  %4071 = vmatpush1.bf16.msra.mxu0 0
  %4072 = vmatprep.subr.bf16.mxu0 0
  %4073 = vmatpush1.bf16.msra.mxu0 0
  %4074 = vmatprep.subr.bf16.mxu0 0
  %4075 = vmatpush1.bf16.msra.mxu0 0
  %4076 = vmatprep.subr.bf16.mxu0 0
  %4077 = vmatpush1.bf16.msra.mxu0 0
  %4078 = vmatprep.subr.bf16.mxu0 0
  %4079 = vmatpush1.bf16.msra.mxu0 0
  %4080 = vmatprep.mubr.bf16.mxu0 0
  %4081 = vmatmul.mubr.bf16.gmra.mrb[0].mxu0 %v3985
  %v4082 = vpop.f32.mrb[0].mxu0
  %v4083 = vadd.f32 0.0, %v4082
  %v4084 = vpop.f32.mrb[0].mxu0
  %v4085 = vadd.f32 0.0, %v4084
  %v4086 = vpop.f32.mrb[0].mxu0
  %v4087 = vadd.f32 0.0, %v4086
  %v4088 = vpop.f32.mrb[0].mxu0
  %v4089 = vadd.f32 0.0, %v4088
  %4090 = vdwg.mxu0
  %4091 = vmatprep.subr.bf16.mxu0 %v4003
  %4092 = vmatpush1.bf16.msra.mxu0 %v4000
  %4093 = vmatprep.subr.bf16.mxu0 0
  %4094 = vmatpush1.bf16.msra.mxu0 0
  %4095 = vmatprep.subr.bf16.mxu0 0
  %4096 = vmatpush1.bf16.msra.mxu0 0
  %4097 = vmatprep.subr.bf16.mxu0 0
  %4098 = vmatpush1.bf16.msra.mxu0 0
  %4099 = vmatprep.subr.bf16.mxu0 0
  %4100 = vmatpush1.bf16.msra.mxu0 0
  %4101 = vmatprep.subr.bf16.mxu0 0
  %4102 = vmatpush1.bf16.msra.mxu0 0
  %4103 = vmatprep.subr.bf16.mxu0 0
  %4104 = vmatpush1.bf16.msra.mxu0 0
  %4105 = vmatprep.subr.bf16.mxu0 0
  %4106 = vmatpush1.bf16.msra.mxu0 0
  %4107 = vmatprep.subr.bf16.mxu0 0
  %4108 = vmatpush1.bf16.msra.mxu0 0
  %4109 = vmatprep.subr.bf16.mxu0 0
  %4110 = vmatpush1.bf16.msra.mxu0 0
  %4111 = vmatprep.subr.bf16.mxu0 0
  %4112 = vmatpush1.bf16.msra.mxu0 0
  %4113 = vmatprep.subr.bf16.mxu0 0
  %4114 = vmatpush1.bf16.msra.mxu0 0
  %4115 = vmatprep.subr.bf16.mxu0 0
  %4116 = vmatpush1.bf16.msra.mxu0 0
  %4117 = vmatprep.subr.bf16.mxu0 0
  %4118 = vmatpush1.bf16.msra.mxu0 0
  %4119 = vmatprep.subr.bf16.mxu0 0
  %4120 = vmatpush1.bf16.msra.mxu0 0
  %4121 = vmatprep.subr.bf16.mxu0 0
  %4122 = vmatpush1.bf16.msra.mxu0 0
  %4123 = vmatprep.mubr.bf16.mxu0 0
  %4124 = vmatmul.mubr.bf16.gmra.mrb[0].mxu0 %v3985
  %v4125 = vpop.f32.mrb[0].mxu0
  %v4126 = vadd.f32 0.0, %v4125
  %v4127 = vpop.f32.mrb[0].mxu0
  %v4128 = vadd.f32 0.0, %v4127
  %v4129 = vpop.f32.mrb[0].mxu0
  %v4130 = vadd.f32 0.0, %v4129
  %v4131 = vpop.f32.mrb[0].mxu0
  %v4132 = vadd.f32 0.0, %v4131
  %4133 = vdwg.mxu0
  %v4134 = vadd.f32 %v3927, %v4040
  %v4135 = vadd.f32 %v3928, %v4042
  %v4136 = vadd.f32 %v3929, %v4083
  %v4137 = vadd.f32 %v3930, %v4085
  %v4138 = vadd.f32 %v3931, %v4126
  %v4139 = vadd.f32 %v3932, %v4128
  %v4140 = vadd.f32 %v3933, %v4044
  %v4141 = vadd.f32 %v3934, %v4046
  %v4142 = vadd.f32 %v3935, %v4087
  %v4143 = vadd.f32 %v3936, %v4089
  %v4144 = vadd.f32 %v3937, %v4130
  %v4145 = vadd.f32 %v3938, %v4132
  %s4146 = scalar_lea.vmem %s6, 64
  %v4147 = vld [vmem:[%s4146] sm:$0xff]
  %v4148 = vld [vmem:[%s4146 + $0x8] sm:$0xff]
  %v4149 = vpack.c.bf16 %v4148, %v4147
  %v4151 = vsel %vm1816, %v4149, 0
  %v4154 = vsel %vm1861, %v3951, 0
  %v4157 = vsel %vm1861, %v3952, 0
  %v4160 = vsel %vm1861, %v3953, 0
  %v4163 = vsel %vm1861, %v3954, 0
  %v4166 = vsel %vm1861, %v3955, 0
  %v4169 = vsel %vm1861, %v3956, 0
  %4171 = vmatprep.subr.bf16.mxu0 %v4157
  %4172 = vmatpush1.bf16.msra.mxu0 %v4154
  %4173 = vmatprep.subr.bf16.mxu0 0
  %4174 = vmatpush1.bf16.msra.mxu0 0
  %4175 = vmatprep.subr.bf16.mxu0 0
  %4176 = vmatpush1.bf16.msra.mxu0 0
  %4177 = vmatprep.subr.bf16.mxu0 0
  %4178 = vmatpush1.bf16.msra.mxu0 0
  %4179 = vmatprep.subr.bf16.mxu0 0
  %4180 = vmatpush1.bf16.msra.mxu0 0
  %4181 = vmatprep.subr.bf16.mxu0 0
  %4182 = vmatpush1.bf16.msra.mxu0 0
  %4183 = vmatprep.subr.bf16.mxu0 0
  %4184 = vmatpush1.bf16.msra.mxu0 0
  %4185 = vmatprep.subr.bf16.mxu0 0
  %4186 = vmatpush1.bf16.msra.mxu0 0
  %4187 = vmatprep.subr.bf16.mxu0 0
  %4188 = vmatpush1.bf16.msra.mxu0 0
  %4189 = vmatprep.subr.bf16.mxu0 0
  %4190 = vmatpush1.bf16.msra.mxu0 0
  %4191 = vmatprep.subr.bf16.mxu0 0
  %4192 = vmatpush1.bf16.msra.mxu0 0
  %4193 = vmatprep.subr.bf16.mxu0 0
  %4194 = vmatpush1.bf16.msra.mxu0 0
  %4195 = vmatprep.subr.bf16.mxu0 0
  %4196 = vmatpush1.bf16.msra.mxu0 0
  %4197 = vmatprep.subr.bf16.mxu0 0
  %4198 = vmatpush1.bf16.msra.mxu0 0
  %4199 = vmatprep.subr.bf16.mxu0 0
  %4200 = vmatpush1.bf16.msra.mxu0 0
  %4201 = vmatprep.subr.bf16.mxu0 0
  %4202 = vmatpush1.bf16.msra.mxu0 0
  %4203 = vmatprep.mubr.bf16.mxu0 0
  %4204 = vmatmul.mubr.bf16.gmra.mrb[0].mxu0 %v4151
  %v4205 = vpop.f32.mrb[0].mxu0
  %v4206 = vadd.f32 0.0, %v4205
  %v4207 = vpop.f32.mrb[0].mxu0
  %v4208 = vadd.f32 0.0, %v4207
  %v4209 = vpop.f32.mrb[0].mxu0
  %v4210 = vadd.f32 0.0, %v4209
  %v4211 = vpop.f32.mrb[0].mxu0
  %v4212 = vadd.f32 0.0, %v4211
  %4213 = vdwg.mxu0
  %4214 = vmatprep.subr.bf16.mxu0 %v4163
  %4215 = vmatpush1.bf16.msra.mxu0 %v4160
  %4216 = vmatprep.subr.bf16.mxu0 0
  %4217 = vmatpush1.bf16.msra.mxu0 0
  %4218 = vmatprep.subr.bf16.mxu0 0
  %4219 = vmatpush1.bf16.msra.mxu0 0
  %4220 = vmatprep.subr.bf16.mxu0 0
  %4221 = vmatpush1.bf16.msra.mxu0 0
  %4222 = vmatprep.subr.bf16.mxu0 0
  %4223 = vmatpush1.bf16.msra.mxu0 0
  %4224 = vmatprep.subr.bf16.mxu0 0
  %4225 = vmatpush1.bf16.msra.mxu0 0
  %4226 = vmatprep.subr.bf16.mxu0 0
  %4227 = vmatpush1.bf16.msra.mxu0 0
  %4228 = vmatprep.subr.bf16.mxu0 0
  %4229 = vmatpush1.bf16.msra.mxu0 0
  %4230 = vmatprep.subr.bf16.mxu0 0
  %4231 = vmatpush1.bf16.msra.mxu0 0
  %4232 = vmatprep.subr.bf16.mxu0 0
  %4233 = vmatpush1.bf16.msra.mxu0 0
  %4234 = vmatprep.subr.bf16.mxu0 0
  %4235 = vmatpush1.bf16.msra.mxu0 0
  %4236 = vmatprep.subr.bf16.mxu0 0
  %4237 = vmatpush1.bf16.msra.mxu0 0
  %4238 = vmatprep.subr.bf16.mxu0 0
  %4239 = vmatpush1.bf16.msra.mxu0 0
  %4240 = vmatprep.subr.bf16.mxu0 0
  %4241 = vmatpush1.bf16.msra.mxu0 0
  %4242 = vmatprep.subr.bf16.mxu0 0
  %4243 = vmatpush1.bf16.msra.mxu0 0
  %4244 = vmatprep.subr.bf16.mxu0 0
  %4245 = vmatpush1.bf16.msra.mxu0 0
  %4246 = vmatprep.mubr.bf16.mxu0 0
  %4247 = vmatmul.mubr.bf16.gmra.mrb[0].mxu0 %v4151
  %v4248 = vpop.f32.mrb[0].mxu0
  %v4249 = vadd.f32 0.0, %v4248
  %v4250 = vpop.f32.mrb[0].mxu0
  %v4251 = vadd.f32 0.0, %v4250
  %v4252 = vpop.f32.mrb[0].mxu0
  %v4253 = vadd.f32 0.0, %v4252
  %v4254 = vpop.f32.mrb[0].mxu0
  %v4255 = vadd.f32 0.0, %v4254
  %4256 = vdwg.mxu0
  %4257 = vmatprep.subr.bf16.mxu0 %v4169
  %4258 = vmatpush1.bf16.msra.mxu0 %v4166
  %4259 = vmatprep.subr.bf16.mxu0 0
  %4260 = vmatpush1.bf16.msra.mxu0 0
  %4261 = vmatprep.subr.bf16.mxu0 0
  %4262 = vmatpush1.bf16.msra.mxu0 0
  %4263 = vmatprep.subr.bf16.mxu0 0
  %4264 = vmatpush1.bf16.msra.mxu0 0
  %4265 = vmatprep.subr.bf16.mxu0 0
  %4266 = vmatpush1.bf16.msra.mxu0 0
  %4267 = vmatprep.subr.bf16.mxu0 0
  %4268 = vmatpush1.bf16.msra.mxu0 0
  %4269 = vmatprep.subr.bf16.mxu0 0
  %4270 = vmatpush1.bf16.msra.mxu0 0
  %4271 = vmatprep.subr.bf16.mxu0 0
  %4272 = vmatpush1.bf16.msra.mxu0 0
  %4273 = vmatprep.subr.bf16.mxu0 0
  %4274 = vmatpush1.bf16.msra.mxu0 0
  %4275 = vmatprep.subr.bf16.mxu0 0
  %4276 = vmatpush1.bf16.msra.mxu0 0
  %4277 = vmatprep.subr.bf16.mxu0 0
  %4278 = vmatpush1.bf16.msra.mxu0 0
  %4279 = vmatprep.subr.bf16.mxu0 0
  %4280 = vmatpush1.bf16.msra.mxu0 0
  %4281 = vmatprep.subr.bf16.mxu0 0
  %4282 = vmatpush1.bf16.msra.mxu0 0
  %4283 = vmatprep.subr.bf16.mxu0 0
  %4284 = vmatpush1.bf16.msra.mxu0 0
  %4285 = vmatprep.subr.bf16.mxu0 0
  %4286 = vmatpush1.bf16.msra.mxu0 0
  %4287 = vmatprep.subr.bf16.mxu0 0
  %4288 = vmatpush1.bf16.msra.mxu0 0
  %4289 = vmatprep.mubr.bf16.mxu0 0
  %4290 = vmatmul.mubr.bf16.gmra.mrb[0].mxu0 %v4151
  %v4291 = vpop.f32.mrb[0].mxu0
  %v4292 = vadd.f32 0.0, %v4291
  %v4293 = vpop.f32.mrb[0].mxu0
  %v4294 = vadd.f32 0.0, %v4293
  %v4295 = vpop.f32.mrb[0].mxu0
  %v4296 = vadd.f32 0.0, %v4295
  %v4297 = vpop.f32.mrb[0].mxu0
  %v4298 = vadd.f32 0.0, %v4297
  %4299 = vdwg.mxu0
  %v4300 = vadd.f32 %v4134, %v4206
  %v4301 = vadd.f32 %v4135, %v4208
  %v4302 = vadd.f32 %v4136, %v4249
  %v4303 = vadd.f32 %v4137, %v4251
  %v4304 = vadd.f32 %v4138, %v4292
  %v4305 = vadd.f32 %v4139, %v4294
  %v4306 = vadd.f32 %v4140, %v4210
  %v4307 = vadd.f32 %v4141, %v4212
  %v4308 = vadd.f32 %v4142, %v4253
  %v4309 = vadd.f32 %v4143, %v4255
  %v4310 = vadd.f32 %v4144, %v4296
  %v4311 = vadd.f32 %v4145, %v4298
  %s4312 = scalar_lea.vmem %s6, 80
  %v4313 = vld [vmem:[%s4312] sm:$0xff]
  %v4314 = vld [vmem:[%s4312 + $0x8] sm:$0xff]
  %v4315 = vpack.c.bf16 %v4314, %v4313
  %4316 = vrot.lane.b32.xlu0 %v3951, 127
  %v4317 = vpop.permute.xlu0 %4316
  %4318 = vrot.lane.b32.xlu0 %v3952, 127
  %v4319 = vpop.permute.xlu0 %4318
  %4320 = vrot.lane.b32.xlu0 %v3953, 127
  %v4321 = vpop.permute.xlu0 %4320
  %4322 = vrot.lane.b32.xlu0 %v3954, 127
  %v4323 = vpop.permute.xlu0 %4322
  %4324 = vrot.lane.b32.xlu0 %v3955, 127
  %v4325 = vpop.permute.xlu0 %4324
  %4326 = vrot.lane.b32.xlu0 %v3956, 127
  %v4327 = vpop.permute.xlu0 %4326
  %v4328 = vsel %vm1015, %v4317, %v4319
  %v4329 = vsel %vm1015, %v4319, %v4321
  %v4330 = vsel %vm1015, %v4321, %v4323
  %v4331 = vsel %vm1015, %v4323, %v4325
  %v4332 = vsel %vm1015, %v4325, %v4327
  %v4334 = vsel %vm1816, %v4315, 0
  %v4337 = vsel %vm1861, %v4328, 0
  %v4340 = vsel %vm1861, %v4329, 0
  %v4343 = vsel %vm1861, %v4330, 0
  %v4346 = vsel %vm1861, %v4331, 0
  %v4349 = vsel %vm1861, %v4332, 0
  %v4352 = vsel %vm1861, %v4327, 0
  %4354 = vmatprep.subr.bf16.mxu0 %v4340
  %4355 = vmatpush1.bf16.msra.mxu0 %v4337
  %4356 = vmatprep.subr.bf16.mxu0 0
  %4357 = vmatpush1.bf16.msra.mxu0 0
  %4358 = vmatprep.subr.bf16.mxu0 0
  %4359 = vmatpush1.bf16.msra.mxu0 0
  %4360 = vmatprep.subr.bf16.mxu0 0
  %4361 = vmatpush1.bf16.msra.mxu0 0
  %4362 = vmatprep.subr.bf16.mxu0 0
  %4363 = vmatpush1.bf16.msra.mxu0 0
  %4364 = vmatprep.subr.bf16.mxu0 0
  %4365 = vmatpush1.bf16.msra.mxu0 0
  %4366 = vmatprep.subr.bf16.mxu0 0
  %4367 = vmatpush1.bf16.msra.mxu0 0
  %4368 = vmatprep.subr.bf16.mxu0 0
  %4369 = vmatpush1.bf16.msra.mxu0 0
  %4370 = vmatprep.subr.bf16.mxu0 0
  %4371 = vmatpush1.bf16.msra.mxu0 0
  %4372 = vmatprep.subr.bf16.mxu0 0
  %4373 = vmatpush1.bf16.msra.mxu0 0
  %4374 = vmatprep.subr.bf16.mxu0 0
  %4375 = vmatpush1.bf16.msra.mxu0 0
  %4376 = vmatprep.subr.bf16.mxu0 0
  %4377 = vmatpush1.bf16.msra.mxu0 0
  %4378 = vmatprep.subr.bf16.mxu0 0
  %4379 = vmatpush1.bf16.msra.mxu0 0
  %4380 = vmatprep.subr.bf16.mxu0 0
  %4381 = vmatpush1.bf16.msra.mxu0 0
  %4382 = vmatprep.subr.bf16.mxu0 0
  %4383 = vmatpush1.bf16.msra.mxu0 0
  %4384 = vmatprep.subr.bf16.mxu0 0
  %4385 = vmatpush1.bf16.msra.mxu0 0
  %4386 = vmatprep.mubr.bf16.mxu0 0
  %4387 = vmatmul.mubr.bf16.gmra.mrb[0].mxu0 %v4334
  %v4388 = vpop.f32.mrb[0].mxu0
  %v4389 = vadd.f32 0.0, %v4388
  %v4390 = vpop.f32.mrb[0].mxu0
  %v4391 = vadd.f32 0.0, %v4390
  %v4392 = vpop.f32.mrb[0].mxu0
  %v4393 = vadd.f32 0.0, %v4392
  %v4394 = vpop.f32.mrb[0].mxu0
  %v4395 = vadd.f32 0.0, %v4394
  %4396 = vdwg.mxu0
  %4397 = vmatprep.subr.bf16.mxu0 %v4346
  %4398 = vmatpush1.bf16.msra.mxu0 %v4343
  %4399 = vmatprep.subr.bf16.mxu0 0
  %4400 = vmatpush1.bf16.msra.mxu0 0
  %4401 = vmatprep.subr.bf16.mxu0 0
  %4402 = vmatpush1.bf16.msra.mxu0 0
  %4403 = vmatprep.subr.bf16.mxu0 0
  %4404 = vmatpush1.bf16.msra.mxu0 0
  %4405 = vmatprep.subr.bf16.mxu0 0
  %4406 = vmatpush1.bf16.msra.mxu0 0
  %4407 = vmatprep.subr.bf16.mxu0 0
  %4408 = vmatpush1.bf16.msra.mxu0 0
  %4409 = vmatprep.subr.bf16.mxu0 0
  %4410 = vmatpush1.bf16.msra.mxu0 0
  %4411 = vmatprep.subr.bf16.mxu0 0
  %4412 = vmatpush1.bf16.msra.mxu0 0
  %4413 = vmatprep.subr.bf16.mxu0 0
  %4414 = vmatpush1.bf16.msra.mxu0 0
  %4415 = vmatprep.subr.bf16.mxu0 0
  %4416 = vmatpush1.bf16.msra.mxu0 0
  %4417 = vmatprep.subr.bf16.mxu0 0
  %4418 = vmatpush1.bf16.msra.mxu0 0
  %4419 = vmatprep.subr.bf16.mxu0 0
  %4420 = vmatpush1.bf16.msra.mxu0 0
  %4421 = vmatprep.subr.bf16.mxu0 0
  %4422 = vmatpush1.bf16.msra.mxu0 0
  %4423 = vmatprep.subr.bf16.mxu0 0
  %4424 = vmatpush1.bf16.msra.mxu0 0
  %4425 = vmatprep.subr.bf16.mxu0 0
  %4426 = vmatpush1.bf16.msra.mxu0 0
  %4427 = vmatprep.subr.bf16.mxu0 0
  %4428 = vmatpush1.bf16.msra.mxu0 0
  %4429 = vmatprep.mubr.bf16.mxu0 0
  %4430 = vmatmul.mubr.bf16.gmra.mrb[0].mxu0 %v4334
  %v4431 = vpop.f32.mrb[0].mxu0
  %v4432 = vadd.f32 0.0, %v4431
  %v4433 = vpop.f32.mrb[0].mxu0
  %v4434 = vadd.f32 0.0, %v4433
  %v4435 = vpop.f32.mrb[0].mxu0
  %v4436 = vadd.f32 0.0, %v4435
  %v4437 = vpop.f32.mrb[0].mxu0
  %v4438 = vadd.f32 0.0, %v4437
  %4439 = vdwg.mxu0
  %4440 = vmatprep.subr.bf16.mxu0 %v4352
  %4441 = vmatpush1.bf16.msra.mxu0 %v4349
  %4442 = vmatprep.subr.bf16.mxu0 0
  %4443 = vmatpush1.bf16.msra.mxu0 0
  %4444 = vmatprep.subr.bf16.mxu0 0
  %4445 = vmatpush1.bf16.msra.mxu0 0
  %4446 = vmatprep.subr.bf16.mxu0 0
  %4447 = vmatpush1.bf16.msra.mxu0 0
  %4448 = vmatprep.subr.bf16.mxu0 0
  %4449 = vmatpush1.bf16.msra.mxu0 0
  %4450 = vmatprep.subr.bf16.mxu0 0
  %4451 = vmatpush1.bf16.msra.mxu0 0
  %4452 = vmatprep.subr.bf16.mxu0 0
  %4453 = vmatpush1.bf16.msra.mxu0 0
  %4454 = vmatprep.subr.bf16.mxu0 0
  %4455 = vmatpush1.bf16.msra.mxu0 0
  %4456 = vmatprep.subr.bf16.mxu0 0
  %4457 = vmatpush1.bf16.msra.mxu0 0
  %4458 = vmatprep.subr.bf16.mxu0 0
  %4459 = vmatpush1.bf16.msra.mxu0 0
  %4460 = vmatprep.subr.bf16.mxu0 0
  %4461 = vmatpush1.bf16.msra.mxu0 0
  %4462 = vmatprep.subr.bf16.mxu0 0
  %4463 = vmatpush1.bf16.msra.mxu0 0
  %4464 = vmatprep.subr.bf16.mxu0 0
  %4465 = vmatpush1.bf16.msra.mxu0 0
  %4466 = vmatprep.subr.bf16.mxu0 0
  %4467 = vmatpush1.bf16.msra.mxu0 0
  %4468 = vmatprep.subr.bf16.mxu0 0
  %4469 = vmatpush1.bf16.msra.mxu0 0
  %4470 = vmatprep.subr.bf16.mxu0 0
  %4471 = vmatpush1.bf16.msra.mxu0 0
  %4472 = vmatprep.mubr.bf16.mxu0 0
  %4473 = vmatmul.mubr.bf16.gmra.mrb[0].mxu0 %v4334
  %v4474 = vpop.f32.mrb[0].mxu0
  %v4475 = vadd.f32 0.0, %v4474
  %v4476 = vpop.f32.mrb[0].mxu0
  %v4477 = vadd.f32 0.0, %v4476
  %v4478 = vpop.f32.mrb[0].mxu0
  %v4479 = vadd.f32 0.0, %v4478
  %v4480 = vpop.f32.mrb[0].mxu0
  %v4481 = vadd.f32 0.0, %v4480
  %4482 = vdwg.mxu0
  %v4483 = vadd.f32 %v4300, %v4389
  %v4484 = vadd.f32 %v4301, %v4391
  %v4485 = vadd.f32 %v4302, %v4432
  %v4486 = vadd.f32 %v4303, %v4434
  %v4487 = vadd.f32 %v4304, %v4475
  %v4488 = vadd.f32 %v4305, %v4477
  %v4489 = vadd.f32 %v4306, %v4393
  %v4490 = vadd.f32 %v4307, %v4395
  %v4491 = vadd.f32 %v4308, %v4436
  %v4492 = vadd.f32 %v4309, %v4438
  %v4493 = vadd.f32 %v4310, %v4479
  %v4494 = vadd.f32 %v4311, %v4481
  %s4495 = scalar_lea.vmem %s6, 96
  %v4496 = vld [vmem:[%s4495] sm:$0xff]
  %v4497 = vld [vmem:[%s4495 + $0x8] sm:$0xff]
  %v4498 = vpack.c.bf16 %v4497, %v4496
  %4499 = vrot.lane.b32.xlu0 %v3951, 111
  %v4500 = vpop.permute.xlu0 %4499
  %4501 = vrot.lane.b32.xlu0 %v3952, 111
  %v4502 = vpop.permute.xlu0 %4501
  %4503 = vrot.lane.b32.xlu0 %v3953, 111
  %v4504 = vpop.permute.xlu0 %4503
  %4505 = vrot.lane.b32.xlu0 %v3954, 111
  %v4506 = vpop.permute.xlu0 %4505
  %4507 = vrot.lane.b32.xlu0 %v3955, 111
  %v4508 = vpop.permute.xlu0 %4507
  %4509 = vrot.lane.b32.xlu0 %v3956, 111
  %v4510 = vpop.permute.xlu0 %4509
  %v4511 = vsel %vm1210, %v4500, %v4502
  %v4512 = vsel %vm1210, %v4502, %v4504
  %v4513 = vsel %vm1210, %v4504, %v4506
  %v4514 = vsel %vm1210, %v4506, %v4508
  %v4515 = vsel %vm1210, %v4508, %v4510
  %v4517 = vsel %vm1816, %v4498, 0
  %v4520 = vsel %vm1861, %v4511, 0
  %v4523 = vsel %vm1861, %v4512, 0
  %v4526 = vsel %vm1861, %v4513, 0
  %v4529 = vsel %vm1861, %v4514, 0
  %v4532 = vsel %vm1861, %v4515, 0
  %v4535 = vsel %vm1861, %v4510, 0
  %4537 = vmatprep.subr.bf16.mxu0 %v4523
  %4538 = vmatpush1.bf16.msra.mxu0 %v4520
  %4539 = vmatprep.subr.bf16.mxu0 0
  %4540 = vmatpush1.bf16.msra.mxu0 0
  %4541 = vmatprep.subr.bf16.mxu0 0
  %4542 = vmatpush1.bf16.msra.mxu0 0
  %4543 = vmatprep.subr.bf16.mxu0 0
  %4544 = vmatpush1.bf16.msra.mxu0 0
  %4545 = vmatprep.subr.bf16.mxu0 0
  %4546 = vmatpush1.bf16.msra.mxu0 0
  %4547 = vmatprep.subr.bf16.mxu0 0
  %4548 = vmatpush1.bf16.msra.mxu0 0
  %4549 = vmatprep.subr.bf16.mxu0 0
  %4550 = vmatpush1.bf16.msra.mxu0 0
  %4551 = vmatprep.subr.bf16.mxu0 0
  %4552 = vmatpush1.bf16.msra.mxu0 0
  %4553 = vmatprep.subr.bf16.mxu0 0
  %4554 = vmatpush1.bf16.msra.mxu0 0
  %4555 = vmatprep.subr.bf16.mxu0 0
  %4556 = vmatpush1.bf16.msra.mxu0 0
  %4557 = vmatprep.subr.bf16.mxu0 0
  %4558 = vmatpush1.bf16.msra.mxu0 0
  %4559 = vmatprep.subr.bf16.mxu0 0
  %4560 = vmatpush1.bf16.msra.mxu0 0
  %4561 = vmatprep.subr.bf16.mxu0 0
  %4562 = vmatpush1.bf16.msra.mxu0 0
  %4563 = vmatprep.subr.bf16.mxu0 0
  %4564 = vmatpush1.bf16.msra.mxu0 0
  %4565 = vmatprep.subr.bf16.mxu0 0
  %4566 = vmatpush1.bf16.msra.mxu0 0
  %4567 = vmatprep.subr.bf16.mxu0 0
  %4568 = vmatpush1.bf16.msra.mxu0 0
  %4569 = vmatprep.mubr.bf16.mxu0 0
  %4570 = vmatmul.mubr.bf16.gmra.mrb[0].mxu0 %v4517
  %v4571 = vpop.f32.mrb[0].mxu0
  %v4572 = vadd.f32 0.0, %v4571
  %v4573 = vpop.f32.mrb[0].mxu0
  %v4574 = vadd.f32 0.0, %v4573
  %v4575 = vpop.f32.mrb[0].mxu0
  %v4576 = vadd.f32 0.0, %v4575
  %v4577 = vpop.f32.mrb[0].mxu0
  %v4578 = vadd.f32 0.0, %v4577
  %4579 = vdwg.mxu0
  %4580 = vmatprep.subr.bf16.mxu0 %v4529
  %4581 = vmatpush1.bf16.msra.mxu0 %v4526
  %4582 = vmatprep.subr.bf16.mxu0 0
  %4583 = vmatpush1.bf16.msra.mxu0 0
  %4584 = vmatprep.subr.bf16.mxu0 0
  %4585 = vmatpush1.bf16.msra.mxu0 0
  %4586 = vmatprep.subr.bf16.mxu0 0
  %4587 = vmatpush1.bf16.msra.mxu0 0
  %4588 = vmatprep.subr.bf16.mxu0 0
  %4589 = vmatpush1.bf16.msra.mxu0 0
  %4590 = vmatprep.subr.bf16.mxu0 0
  %4591 = vmatpush1.bf16.msra.mxu0 0
  %4592 = vmatprep.subr.bf16.mxu0 0
  %4593 = vmatpush1.bf16.msra.mxu0 0
  %4594 = vmatprep.subr.bf16.mxu0 0
  %4595 = vmatpush1.bf16.msra.mxu0 0
  %4596 = vmatprep.subr.bf16.mxu0 0
  %4597 = vmatpush1.bf16.msra.mxu0 0
  %4598 = vmatprep.subr.bf16.mxu0 0
  %4599 = vmatpush1.bf16.msra.mxu0 0
  %4600 = vmatprep.subr.bf16.mxu0 0
  %4601 = vmatpush1.bf16.msra.mxu0 0
  %4602 = vmatprep.subr.bf16.mxu0 0
  %4603 = vmatpush1.bf16.msra.mxu0 0
  %4604 = vmatprep.subr.bf16.mxu0 0
  %4605 = vmatpush1.bf16.msra.mxu0 0
  %4606 = vmatprep.subr.bf16.mxu0 0
  %4607 = vmatpush1.bf16.msra.mxu0 0
  %4608 = vmatprep.subr.bf16.mxu0 0
  %4609 = vmatpush1.bf16.msra.mxu0 0
  %4610 = vmatprep.subr.bf16.mxu0 0
  %4611 = vmatpush1.bf16.msra.mxu0 0
  %4612 = vmatprep.mubr.bf16.mxu0 0
  %4613 = vmatmul.mubr.bf16.gmra.mrb[0].mxu0 %v4517
  %v4614 = vpop.f32.mrb[0].mxu0
  %v4615 = vadd.f32 0.0, %v4614
  %v4616 = vpop.f32.mrb[0].mxu0
  %v4617 = vadd.f32 0.0, %v4616
  %v4618 = vpop.f32.mrb[0].mxu0
  %v4619 = vadd.f32 0.0, %v4618
  %v4620 = vpop.f32.mrb[0].mxu0
  %v4621 = vadd.f32 0.0, %v4620
  %4622 = vdwg.mxu0
  %4623 = vmatprep.subr.bf16.mxu0 %v4535
  %4624 = vmatpush1.bf16.msra.mxu0 %v4532
  %4625 = vmatprep.subr.bf16.mxu0 0
  %4626 = vmatpush1.bf16.msra.mxu0 0
  %4627 = vmatprep.subr.bf16.mxu0 0
  %4628 = vmatpush1.bf16.msra.mxu0 0
  %4629 = vmatprep.subr.bf16.mxu0 0
  %4630 = vmatpush1.bf16.msra.mxu0 0
  %4631 = vmatprep.subr.bf16.mxu0 0
  %4632 = vmatpush1.bf16.msra.mxu0 0
  %4633 = vmatprep.subr.bf16.mxu0 0
  %4634 = vmatpush1.bf16.msra.mxu0 0
  %4635 = vmatprep.subr.bf16.mxu0 0
  %4636 = vmatpush1.bf16.msra.mxu0 0
  %4637 = vmatprep.subr.bf16.mxu0 0
  %4638 = vmatpush1.bf16.msra.mxu0 0
  %4639 = vmatprep.subr.bf16.mxu0 0
  %4640 = vmatpush1.bf16.msra.mxu0 0
  %4641 = vmatprep.subr.bf16.mxu0 0
  %4642 = vmatpush1.bf16.msra.mxu0 0
  %4643 = vmatprep.subr.bf16.mxu0 0
  %4644 = vmatpush1.bf16.msra.mxu0 0
  %4645 = vmatprep.subr.bf16.mxu0 0
  %4646 = vmatpush1.bf16.msra.mxu0 0
  %4647 = vmatprep.subr.bf16.mxu0 0
  %4648 = vmatpush1.bf16.msra.mxu0 0
  %4649 = vmatprep.subr.bf16.mxu0 0
  %4650 = vmatpush1.bf16.msra.mxu0 0
  %4651 = vmatprep.subr.bf16.mxu0 0
  %4652 = vmatpush1.bf16.msra.mxu0 0
  %4653 = vmatprep.subr.bf16.mxu0 0
  %4654 = vmatpush1.bf16.msra.mxu0 0
  %4655 = vmatprep.mubr.bf16.mxu0 0
  %4656 = vmatmul.mubr.bf16.gmra.mrb[0].mxu0 %v4517
  %v4657 = vpop.f32.mrb[0].mxu0
  %v4658 = vadd.f32 0.0, %v4657
  %v4659 = vpop.f32.mrb[0].mxu0
  %v4660 = vadd.f32 0.0, %v4659
  %v4661 = vpop.f32.mrb[0].mxu0
  %v4662 = vadd.f32 0.0, %v4661
  %v4663 = vpop.f32.mrb[0].mxu0
  %v4664 = vadd.f32 0.0, %v4663
  %4665 = vdwg.mxu0
  %v4666 = vadd.f32 %v4483, %v4572
  %v4667 = vadd.f32 %v4484, %v4574
  %v4668 = vadd.f32 %v4485, %v4615
  %v4669 = vadd.f32 %v4486, %v4617
  %v4670 = vadd.f32 %v4487, %v4658
  %v4671 = vadd.f32 %v4488, %v4660
  %v4672 = vadd.f32 %v4489, %v4576
  %v4673 = vadd.f32 %v4490, %v4578
  %v4674 = vadd.f32 %v4491, %v4619
  %v4675 = vadd.f32 %v4492, %v4621
  %v4676 = vadd.f32 %v4493, %v4662
  %v4677 = vadd.f32 %v4494, %v4664
  %s4678 = scalar_lea.vmem %s6, 112
  %v4679 = vld [vmem:[%s4678] sm:$0xff]
  %v4680 = vld [vmem:[%s4678 + $0x8] sm:$0xff]
  %v4681 = vpack.c.bf16 %v4680, %v4679
  %4682 = vrot.lane.b32.xlu0 %v3951, 110
  %v4683 = vpop.permute.xlu0 %4682
  %4684 = vrot.lane.b32.xlu0 %v3952, 110
  %v4685 = vpop.permute.xlu0 %4684
  %4686 = vrot.lane.b32.xlu0 %v3953, 110
  %v4687 = vpop.permute.xlu0 %4686
  %4688 = vrot.lane.b32.xlu0 %v3954, 110
  %v4689 = vpop.permute.xlu0 %4688
  %4690 = vrot.lane.b32.xlu0 %v3955, 110
  %v4691 = vpop.permute.xlu0 %4690
  %4692 = vrot.lane.b32.xlu0 %v3956, 110
  %v4693 = vpop.permute.xlu0 %4692
  %v4694 = vsel %vm1405, %v4683, %v4685
  %v4695 = vsel %vm1405, %v4685, %v4687
  %v4696 = vsel %vm1405, %v4687, %v4689
  %v4697 = vsel %vm1405, %v4689, %v4691
  %v4698 = vsel %vm1405, %v4691, %v4693
  %v4700 = vsel %vm1816, %v4681, 0
  %v4703 = vsel %vm1861, %v4694, 0
  %v4706 = vsel %vm1861, %v4695, 0
  %v4709 = vsel %vm1861, %v4696, 0
  %v4712 = vsel %vm1861, %v4697, 0
  %v4715 = vsel %vm1861, %v4698, 0
  %v4718 = vsel %vm1861, %v4693, 0
  %4720 = vmatprep.subr.bf16.mxu0 %v4706
  %4721 = vmatpush1.bf16.msra.mxu0 %v4703
  %4722 = vmatprep.subr.bf16.mxu0 0
  %4723 = vmatpush1.bf16.msra.mxu0 0
  %4724 = vmatprep.subr.bf16.mxu0 0
  %4725 = vmatpush1.bf16.msra.mxu0 0
  %4726 = vmatprep.subr.bf16.mxu0 0
  %4727 = vmatpush1.bf16.msra.mxu0 0
  %4728 = vmatprep.subr.bf16.mxu0 0
  %4729 = vmatpush1.bf16.msra.mxu0 0
  %4730 = vmatprep.subr.bf16.mxu0 0
  %4731 = vmatpush1.bf16.msra.mxu0 0
  %4732 = vmatprep.subr.bf16.mxu0 0
  %4733 = vmatpush1.bf16.msra.mxu0 0
  %4734 = vmatprep.subr.bf16.mxu0 0
  %4735 = vmatpush1.bf16.msra.mxu0 0
  %4736 = vmatprep.subr.bf16.mxu0 0
  %4737 = vmatpush1.bf16.msra.mxu0 0
  %4738 = vmatprep.subr.bf16.mxu0 0
  %4739 = vmatpush1.bf16.msra.mxu0 0
  %4740 = vmatprep.subr.bf16.mxu0 0
  %4741 = vmatpush1.bf16.msra.mxu0 0
  %4742 = vmatprep.subr.bf16.mxu0 0
  %4743 = vmatpush1.bf16.msra.mxu0 0
  %4744 = vmatprep.subr.bf16.mxu0 0
  %4745 = vmatpush1.bf16.msra.mxu0 0
  %4746 = vmatprep.subr.bf16.mxu0 0
  %4747 = vmatpush1.bf16.msra.mxu0 0
  %4748 = vmatprep.subr.bf16.mxu0 0
  %4749 = vmatpush1.bf16.msra.mxu0 0
  %4750 = vmatprep.subr.bf16.mxu0 0
  %4751 = vmatpush1.bf16.msra.mxu0 0
  %4752 = vmatprep.mubr.bf16.mxu0 0
  %4753 = vmatmul.mubr.bf16.gmra.mrb[0].mxu0 %v4700
  %v4754 = vpop.f32.mrb[0].mxu0
  %v4755 = vadd.f32 0.0, %v4754
  %v4756 = vpop.f32.mrb[0].mxu0
  %v4757 = vadd.f32 0.0, %v4756
  %v4758 = vpop.f32.mrb[0].mxu0
  %v4759 = vadd.f32 0.0, %v4758
  %v4760 = vpop.f32.mrb[0].mxu0
  %v4761 = vadd.f32 0.0, %v4760
  %4762 = vdwg.mxu0
  %4763 = vmatprep.subr.bf16.mxu0 %v4712
  %4764 = vmatpush1.bf16.msra.mxu0 %v4709
  %4765 = vmatprep.subr.bf16.mxu0 0
  %4766 = vmatpush1.bf16.msra.mxu0 0
  %4767 = vmatprep.subr.bf16.mxu0 0
  %4768 = vmatpush1.bf16.msra.mxu0 0
  %4769 = vmatprep.subr.bf16.mxu0 0
  %4770 = vmatpush1.bf16.msra.mxu0 0
  %4771 = vmatprep.subr.bf16.mxu0 0
  %4772 = vmatpush1.bf16.msra.mxu0 0
  %4773 = vmatprep.subr.bf16.mxu0 0
  %4774 = vmatpush1.bf16.msra.mxu0 0
  %4775 = vmatprep.subr.bf16.mxu0 0
  %4776 = vmatpush1.bf16.msra.mxu0 0
  %4777 = vmatprep.subr.bf16.mxu0 0
  %4778 = vmatpush1.bf16.msra.mxu0 0
  %4779 = vmatprep.subr.bf16.mxu0 0
  %4780 = vmatpush1.bf16.msra.mxu0 0
  %4781 = vmatprep.subr.bf16.mxu0 0
  %4782 = vmatpush1.bf16.msra.mxu0 0
  %4783 = vmatprep.subr.bf16.mxu0 0
  %4784 = vmatpush1.bf16.msra.mxu0 0
  %4785 = vmatprep.subr.bf16.mxu0 0
  %4786 = vmatpush1.bf16.msra.mxu0 0
  %4787 = vmatprep.subr.bf16.mxu0 0
  %4788 = vmatpush1.bf16.msra.mxu0 0
  %4789 = vmatprep.subr.bf16.mxu0 0
  %4790 = vmatpush1.bf16.msra.mxu0 0
  %4791 = vmatprep.subr.bf16.mxu0 0
  %4792 = vmatpush1.bf16.msra.mxu0 0
  %4793 = vmatprep.subr.bf16.mxu0 0
  %4794 = vmatpush1.bf16.msra.mxu0 0
  %4795 = vmatprep.mubr.bf16.mxu0 0
  %4796 = vmatmul.mubr.bf16.gmra.mrb[0].mxu0 %v4700
  %v4797 = vpop.f32.mrb[0].mxu0
  %v4798 = vadd.f32 0.0, %v4797
  %v4799 = vpop.f32.mrb[0].mxu0
  %v4800 = vadd.f32 0.0, %v4799
  %v4801 = vpop.f32.mrb[0].mxu0
  %v4802 = vadd.f32 0.0, %v4801
  %v4803 = vpop.f32.mrb[0].mxu0
  %v4804 = vadd.f32 0.0, %v4803
  %4805 = vdwg.mxu0
  %4806 = vmatprep.subr.bf16.mxu0 %v4718
  %4807 = vmatpush1.bf16.msra.mxu0 %v4715
  %4808 = vmatprep.subr.bf16.mxu0 0
  %4809 = vmatpush1.bf16.msra.mxu0 0
  %4810 = vmatprep.subr.bf16.mxu0 0
  %4811 = vmatpush1.bf16.msra.mxu0 0
  %4812 = vmatprep.subr.bf16.mxu0 0
  %4813 = vmatpush1.bf16.msra.mxu0 0
  %4814 = vmatprep.subr.bf16.mxu0 0
  %4815 = vmatpush1.bf16.msra.mxu0 0
  %4816 = vmatprep.subr.bf16.mxu0 0
  %4817 = vmatpush1.bf16.msra.mxu0 0
  %4818 = vmatprep.subr.bf16.mxu0 0
  %4819 = vmatpush1.bf16.msra.mxu0 0
  %4820 = vmatprep.subr.bf16.mxu0 0
  %4821 = vmatpush1.bf16.msra.mxu0 0
  %4822 = vmatprep.subr.bf16.mxu0 0
  %4823 = vmatpush1.bf16.msra.mxu0 0
  %4824 = vmatprep.subr.bf16.mxu0 0
  %4825 = vmatpush1.bf16.msra.mxu0 0
  %4826 = vmatprep.subr.bf16.mxu0 0
  %4827 = vmatpush1.bf16.msra.mxu0 0
  %4828 = vmatprep.subr.bf16.mxu0 0
  %4829 = vmatpush1.bf16.msra.mxu0 0
  %4830 = vmatprep.subr.bf16.mxu0 0
  %4831 = vmatpush1.bf16.msra.mxu0 0
  %4832 = vmatprep.subr.bf16.mxu0 0
  %4833 = vmatpush1.bf16.msra.mxu0 0
  %4834 = vmatprep.subr.bf16.mxu0 0
  %4835 = vmatpush1.bf16.msra.mxu0 0
  %4836 = vmatprep.subr.bf16.mxu0 0
  %4837 = vmatpush1.bf16.msra.mxu0 0
  %4838 = vmatprep.mubr.bf16.mxu0 0
  %4839 = vmatmul.mubr.bf16.gmra.mrb[0].mxu0 %v4700
  %v4840 = vpop.f32.mrb[0].mxu0
  %v4841 = vadd.f32 0.0, %v4840
  %v4842 = vpop.f32.mrb[0].mxu0
  %v4843 = vadd.f32 0.0, %v4842
  %v4844 = vpop.f32.mrb[0].mxu0
  %v4845 = vadd.f32 0.0, %v4844
  %v4846 = vpop.f32.mrb[0].mxu0
  %v4847 = vadd.f32 0.0, %v4846
  %4848 = vdwg.mxu0
  %v4849 = vadd.f32 %v4666, %v4755
  %v4850 = vadd.f32 %v4667, %v4757
  %v4851 = vadd.f32 %v4668, %v4798
  %v4852 = vadd.f32 %v4669, %v4800
  %v4853 = vadd.f32 %v4670, %v4841
  %v4854 = vadd.f32 %v4671, %v4843
  %v4855 = vadd.f32 %v4672, %v4759
  %v4856 = vadd.f32 %v4673, %v4761
  %v4857 = vadd.f32 %v4674, %v4802
  %v4858 = vadd.f32 %v4675, %v4804
  %v4859 = vadd.f32 %v4676, %v4845
  %v4860 = vadd.f32 %v4677, %v4847
  %s4861 = scalar_lea.vmem %s6, 128
  %v4862 = vld [vmem:[%s4861] sm:$0xff]
  %v4863 = vld [vmem:[%s4861 + $0x8] sm:$0xff]
  %v4864 = vpack.c.bf16 %v4863, %v4862
  %4865 = vrot.lane.b32.xlu0 %v3951, 109
  %v4866 = vpop.permute.xlu0 %4865
  %4867 = vrot.lane.b32.xlu0 %v3952, 109
  %v4868 = vpop.permute.xlu0 %4867
  %4869 = vrot.lane.b32.xlu0 %v3953, 109
  %v4870 = vpop.permute.xlu0 %4869
  %4871 = vrot.lane.b32.xlu0 %v3954, 109
  %v4872 = vpop.permute.xlu0 %4871
  %4873 = vrot.lane.b32.xlu0 %v3955, 109
  %v4874 = vpop.permute.xlu0 %4873
  %4875 = vrot.lane.b32.xlu0 %v3956, 109
  %v4876 = vpop.permute.xlu0 %4875
  %v4877 = vsel %vm1600, %v4866, %v4868
  %v4878 = vsel %vm1600, %v4868, %v4870
  %v4879 = vsel %vm1600, %v4870, %v4872
  %v4880 = vsel %vm1600, %v4872, %v4874
  %v4881 = vsel %vm1600, %v4874, %v4876
  %v4883 = vsel %vm1816, %v4864, 0
  %v4886 = vsel %vm1861, %v4877, 0
  %v4889 = vsel %vm1861, %v4878, 0
  %v4892 = vsel %vm1861, %v4879, 0
  %v4895 = vsel %vm1861, %v4880, 0
  %v4898 = vsel %vm1861, %v4881, 0
  %v4901 = vsel %vm1861, %v4876, 0
  %4903 = vmatprep.subr.bf16.mxu0 %v4889
  %4904 = vmatpush1.bf16.msra.mxu0 %v4886
  %4905 = vmatprep.subr.bf16.mxu0 0
  %4906 = vmatpush1.bf16.msra.mxu0 0
  %4907 = vmatprep.subr.bf16.mxu0 0
  %4908 = vmatpush1.bf16.msra.mxu0 0
  %4909 = vmatprep.subr.bf16.mxu0 0
  %4910 = vmatpush1.bf16.msra.mxu0 0
  %4911 = vmatprep.subr.bf16.mxu0 0
  %4912 = vmatpush1.bf16.msra.mxu0 0
  %4913 = vmatprep.subr.bf16.mxu0 0
  %4914 = vmatpush1.bf16.msra.mxu0 0
  %4915 = vmatprep.subr.bf16.mxu0 0
  %4916 = vmatpush1.bf16.msra.mxu0 0
  %4917 = vmatprep.subr.bf16.mxu0 0
  %4918 = vmatpush1.bf16.msra.mxu0 0
  %4919 = vmatprep.subr.bf16.mxu0 0
  %4920 = vmatpush1.bf16.msra.mxu0 0
  %4921 = vmatprep.subr.bf16.mxu0 0
  %4922 = vmatpush1.bf16.msra.mxu0 0
  %4923 = vmatprep.subr.bf16.mxu0 0
  %4924 = vmatpush1.bf16.msra.mxu0 0
  %4925 = vmatprep.subr.bf16.mxu0 0
  %4926 = vmatpush1.bf16.msra.mxu0 0
  %4927 = vmatprep.subr.bf16.mxu0 0
  %4928 = vmatpush1.bf16.msra.mxu0 0
  %4929 = vmatprep.subr.bf16.mxu0 0
  %4930 = vmatpush1.bf16.msra.mxu0 0
  %4931 = vmatprep.subr.bf16.mxu0 0
  %4932 = vmatpush1.bf16.msra.mxu0 0
  %4933 = vmatprep.subr.bf16.mxu0 0
  %4934 = vmatpush1.bf16.msra.mxu0 0
  %4935 = vmatprep.mubr.bf16.mxu0 0
  %4936 = vmatmul.mubr.bf16.gmra.mrb[0].mxu0 %v4883
  %v4937 = vpop.f32.mrb[0].mxu0
  %v4938 = vadd.f32 0.0, %v4937
  %v4939 = vpop.f32.mrb[0].mxu0
  %v4940 = vadd.f32 0.0, %v4939
  %v4941 = vpop.f32.mrb[0].mxu0
  %v4942 = vadd.f32 0.0, %v4941
  %v4943 = vpop.f32.mrb[0].mxu0
  %v4944 = vadd.f32 0.0, %v4943
  %4945 = vdwg.mxu0
  %4946 = vmatprep.subr.bf16.mxu0 %v4895
  %4947 = vmatpush1.bf16.msra.mxu0 %v4892
  %4948 = vmatprep.subr.bf16.mxu0 0
  %4949 = vmatpush1.bf16.msra.mxu0 0
  %4950 = vmatprep.subr.bf16.mxu0 0
  %4951 = vmatpush1.bf16.msra.mxu0 0
  %4952 = vmatprep.subr.bf16.mxu0 0
  %4953 = vmatpush1.bf16.msra.mxu0 0
  %4954 = vmatprep.subr.bf16.mxu0 0
  %4955 = vmatpush1.bf16.msra.mxu0 0
  %4956 = vmatprep.subr.bf16.mxu0 0
  %4957 = vmatpush1.bf16.msra.mxu0 0
  %4958 = vmatprep.subr.bf16.mxu0 0
  %4959 = vmatpush1.bf16.msra.mxu0 0
  %4960 = vmatprep.subr.bf16.mxu0 0
  %4961 = vmatpush1.bf16.msra.mxu0 0
  %4962 = vmatprep.subr.bf16.mxu0 0
  %4963 = vmatpush1.bf16.msra.mxu0 0
  %4964 = vmatprep.subr.bf16.mxu0 0
  %4965 = vmatpush1.bf16.msra.mxu0 0
  %4966 = vmatprep.subr.bf16.mxu0 0
  %4967 = vmatpush1.bf16.msra.mxu0 0
  %4968 = vmatprep.subr.bf16.mxu0 0
  %4969 = vmatpush1.bf16.msra.mxu0 0
  %4970 = vmatprep.subr.bf16.mxu0 0
  %4971 = vmatpush1.bf16.msra.mxu0 0
  %4972 = vmatprep.subr.bf16.mxu0 0
  %4973 = vmatpush1.bf16.msra.mxu0 0
  %4974 = vmatprep.subr.bf16.mxu0 0
  %4975 = vmatpush1.bf16.msra.mxu0 0
  %4976 = vmatprep.subr.bf16.mxu0 0
  %4977 = vmatpush1.bf16.msra.mxu0 0
  %4978 = vmatprep.mubr.bf16.mxu0 0
  %4979 = vmatmul.mubr.bf16.gmra.mrb[0].mxu0 %v4883
  %v4980 = vpop.f32.mrb[0].mxu0
  %v4981 = vadd.f32 0.0, %v4980
  %v4982 = vpop.f32.mrb[0].mxu0
  %v4983 = vadd.f32 0.0, %v4982
  %v4984 = vpop.f32.mrb[0].mxu0
  %v4985 = vadd.f32 0.0, %v4984
  %v4986 = vpop.f32.mrb[0].mxu0
  %v4987 = vadd.f32 0.0, %v4986
  %4988 = vdwg.mxu0
  %4989 = vmatprep.subr.bf16.mxu0 %v4901
  %4990 = vmatpush1.bf16.msra.mxu0 %v4898
  %4991 = vmatprep.subr.bf16.mxu0 0
  %4992 = vmatpush1.bf16.msra.mxu0 0
  %4993 = vmatprep.subr.bf16.mxu0 0
  %4994 = vmatpush1.bf16.msra.mxu0 0
  %4995 = vmatprep.subr.bf16.mxu0 0
  %4996 = vmatpush1.bf16.msra.mxu0 0
  %4997 = vmatprep.subr.bf16.mxu0 0
  %4998 = vmatpush1.bf16.msra.mxu0 0
  %4999 = vmatprep.subr.bf16.mxu0 0
  %5000 = vmatpush1.bf16.msra.mxu0 0
  %5001 = vmatprep.subr.bf16.mxu0 0
  %5002 = vmatpush1.bf16.msra.mxu0 0
  %5003 = vmatprep.subr.bf16.mxu0 0
  %5004 = vmatpush1.bf16.msra.mxu0 0
  %5005 = vmatprep.subr.bf16.mxu0 0
  %5006 = vmatpush1.bf16.msra.mxu0 0
  %5007 = vmatprep.subr.bf16.mxu0 0
  %5008 = vmatpush1.bf16.msra.mxu0 0
  %5009 = vmatprep.subr.bf16.mxu0 0
  %5010 = vmatpush1.bf16.msra.mxu0 0
  %5011 = vmatprep.subr.bf16.mxu0 0
  %5012 = vmatpush1.bf16.msra.mxu0 0
  %5013 = vmatprep.subr.bf16.mxu0 0
  %5014 = vmatpush1.bf16.msra.mxu0 0
  %5015 = vmatprep.subr.bf16.mxu0 0
  %5016 = vmatpush1.bf16.msra.mxu0 0
  %5017 = vmatprep.subr.bf16.mxu0 0
  %5018 = vmatpush1.bf16.msra.mxu0 0
  %5019 = vmatprep.subr.bf16.mxu0 0
  %5020 = vmatpush1.bf16.msra.mxu0 0
  %5021 = vmatprep.mubr.bf16.mxu0 0
  %5022 = vmatmul.mubr.bf16.gmra.mrb[0].mxu0 %v4883
  %v5023 = vpop.f32.mrb[0].mxu0
  %v5024 = vadd.f32 0.0, %v5023
  %v5025 = vpop.f32.mrb[0].mxu0
  %v5026 = vadd.f32 0.0, %v5025
  %v5027 = vpop.f32.mrb[0].mxu0
  %v5028 = vadd.f32 0.0, %v5027
  %v5029 = vpop.f32.mrb[0].mxu0
  %v5030 = vadd.f32 0.0, %v5029
  %5031 = vdwg.mxu0
  %v5032 = vadd.f32 %v4849, %v4938
  %v5033 = vadd.f32 %v4850, %v4940
  %v5034 = vadd.f32 %v4851, %v4981
  %v5035 = vadd.f32 %v4852, %v4983
  %v5036 = vadd.f32 %v4853, %v5024
  %v5037 = vadd.f32 %v4854, %v5026
  %v5038 = vadd.f32 %v4855, %v4942
  %v5039 = vadd.f32 %v4856, %v4944
  %v5040 = vadd.f32 %v4857, %v4985
  %v5041 = vadd.f32 %v4858, %v4987
  %v5042 = vadd.f32 %v4859, %v5028
  %v5043 = vadd.f32 %v4860, %v5030
  %v5044 = vld [vmem:[%s7] sm:$0xff]
  %v5045 = vld [vmem:[%s7 + $0x8] sm:$0xff]
  %5047 = vset.pattern.permute.xlu0 0
  %5048 = vperm.xlu0 %5047, %v5044
  %v5049 = vpop.permute.xlu0 %5048
  %5052 = vset.pattern.permute.xlu0 0
  %5053 = vperm.xlu0 %5052, %v5045
  %v5054 = vpop.permute.xlu0 %5053
  %v5056 = vadd.f32 %v5032, %v5049
  %v5057 = vadd.f32 %v5033, %v5049
  %v5058 = vadd.f32 %v5034, %v5049
  %v5059 = vadd.f32 %v5035, %v5049
  %v5060 = vadd.f32 %v5036, %v5049
  %v5061 = vadd.f32 %v5037, %v5049
  %v5062 = vadd.f32 %v5038, %v5054
  %v5063 = vadd.f32 %v5039, %v5054
  %v5064 = vadd.f32 %v5040, %v5054
  %v5065 = vadd.f32 %v5041, %v5054
  %v5066 = vadd.f32 %v5042, %v5054
  %v5067 = vadd.f32 %v5043, %v5054
  %v5068 = vld [vmem:[%s8] sm:$0xff]
  %v5069 = vpack.c.bf16 %v5068, %v5068
  %v5070 = vpack.c.bf16 %v3385, %v3385
  %v5071 = vpack.c.bf16 %v3386, %v3386
  %v5072 = vpack.c.bf16 %v3387, %v3387
  %v5073 = vpack.c.bf16 %v3388, %v3388
  %v5074 = vpack.c.bf16 %v3389, %v3389
  %v5075 = vpack.c.bf16 %v3390, %v3390
  %v5076 = vld [vmem:[%s9] sm:$0xff]
  %v5077 = vpack.c.bf16 %v5076, %v5076
  %v5078 = vpack.c.bf16 %v5062, %v5056
  %v5079 = vpack.c.bf16 %v5063, %v5057
  %v5080 = vpack.c.bf16 %v5064, %v5058
  %v5081 = vpack.c.bf16 %v5065, %v5059
  %v5082 = vpack.c.bf16 %v5066, %v5060
  %v5083 = vpack.c.bf16 %v5067, %v5061
  %vm5084 = vcmask 130048
  %v5086 = vsel %vm5084, %v5077, 0
  %5088 = vmatprep.subr.bf16.mxu0 %v5079
  %5089 = vmatpush1.bf16.msra.mxu0 %v5078
  %5090 = vmatprep.subr.bf16.mxu0 0
  %5091 = vmatpush1.bf16.msra.mxu0 0
  %5092 = vmatprep.subr.bf16.mxu0 0
  %5093 = vmatpush1.bf16.msra.mxu0 0
  %5094 = vmatprep.subr.bf16.mxu0 0
  %5095 = vmatpush1.bf16.msra.mxu0 0
  %5096 = vmatprep.subr.bf16.mxu0 0
  %5097 = vmatpush1.bf16.msra.mxu0 0
  %5098 = vmatprep.subr.bf16.mxu0 0
  %5099 = vmatpush1.bf16.msra.mxu0 0
  %5100 = vmatprep.subr.bf16.mxu0 0
  %5101 = vmatpush1.bf16.msra.mxu0 0
  %5102 = vmatprep.subr.bf16.mxu0 0
  %5103 = vmatpush1.bf16.msra.mxu0 0
  %5104 = vmatprep.subr.bf16.mxu0 0
  %5105 = vmatpush1.bf16.msra.mxu0 0
  %5106 = vmatprep.subr.bf16.mxu0 0
  %5107 = vmatpush1.bf16.msra.mxu0 0
  %5108 = vmatprep.subr.bf16.mxu0 0
  %5109 = vmatpush1.bf16.msra.mxu0 0
  %5110 = vmatprep.subr.bf16.mxu0 0
  %5111 = vmatpush1.bf16.msra.mxu0 0
  %5112 = vmatprep.subr.bf16.mxu0 0
  %5113 = vmatpush1.bf16.msra.mxu0 0
  %5114 = vmatprep.subr.bf16.mxu0 0
  %5115 = vmatpush1.bf16.msra.mxu0 0
  %5116 = vmatprep.subr.bf16.mxu0 0
  %5117 = vmatpush1.bf16.msra.mxu0 0
  %5118 = vmatprep.subr.bf16.mxu0 0
  %5119 = vmatpush1.bf16.msra.mxu0 0
  %5120 = vmatprep.mubr.bf16.mxu0 0
  %5121 = vmatmul.mubr.bf16.gmra.mrb[0].mxu0 %v5086
  %v5122 = vpop.f32.mrb[0].mxu0
  %v5123 = vadd.f32 0.0, %v5122
  %v5124 = vpop.f32.mrb[0].mxu0
  %v5125 = vadd.f32 0.0, %v5124
  %v5126 = vpop.f32.mrb[0].mxu0
  %v5127 = vpop.f32.mrb[0].mxu0
  %5128 = vdwg.mxu0
  %5129 = vmatprep.subr.bf16.mxu0 %v5081
  %5130 = vmatpush1.bf16.msra.mxu0 %v5080
  %5131 = vmatprep.subr.bf16.mxu0 0
  %5132 = vmatpush1.bf16.msra.mxu0 0
  %5133 = vmatprep.subr.bf16.mxu0 0
  %5134 = vmatpush1.bf16.msra.mxu0 0
  %5135 = vmatprep.subr.bf16.mxu0 0
  %5136 = vmatpush1.bf16.msra.mxu0 0
  %5137 = vmatprep.subr.bf16.mxu0 0
  %5138 = vmatpush1.bf16.msra.mxu0 0
  %5139 = vmatprep.subr.bf16.mxu0 0
  %5140 = vmatpush1.bf16.msra.mxu0 0
  %5141 = vmatprep.subr.bf16.mxu0 0
  %5142 = vmatpush1.bf16.msra.mxu0 0
  %5143 = vmatprep.subr.bf16.mxu0 0
  %5144 = vmatpush1.bf16.msra.mxu0 0
  %5145 = vmatprep.subr.bf16.mxu0 0
  %5146 = vmatpush1.bf16.msra.mxu0 0
  %5147 = vmatprep.subr.bf16.mxu0 0
  %5148 = vmatpush1.bf16.msra.mxu0 0
  %5149 = vmatprep.subr.bf16.mxu0 0
  %5150 = vmatpush1.bf16.msra.mxu0 0
  %5151 = vmatprep.subr.bf16.mxu0 0
  %5152 = vmatpush1.bf16.msra.mxu0 0
  %5153 = vmatprep.subr.bf16.mxu0 0
  %5154 = vmatpush1.bf16.msra.mxu0 0
  %5155 = vmatprep.subr.bf16.mxu0 0
  %5156 = vmatpush1.bf16.msra.mxu0 0
  %5157 = vmatprep.subr.bf16.mxu0 0
  %5158 = vmatpush1.bf16.msra.mxu0 0
  %5159 = vmatprep.subr.bf16.mxu0 0
  %5160 = vmatpush1.bf16.msra.mxu0 0
  %5161 = vmatprep.mubr.bf16.mxu0 0
  %5162 = vmatmul.mubr.bf16.gmra.mrb[0].mxu0 %v5086
  %v5163 = vpop.f32.mrb[0].mxu0
  %v5164 = vadd.f32 0.0, %v5163
  %v5165 = vpop.f32.mrb[0].mxu0
  %v5166 = vadd.f32 0.0, %v5165
  %v5167 = vpop.f32.mrb[0].mxu0
  %v5168 = vpop.f32.mrb[0].mxu0
  %5169 = vdwg.mxu0
  %5170 = vmatprep.subr.bf16.mxu0 %v5083
  %5171 = vmatpush1.bf16.msra.mxu0 %v5082
  %5172 = vmatprep.subr.bf16.mxu0 0
  %5173 = vmatpush1.bf16.msra.mxu0 0
  %5174 = vmatprep.subr.bf16.mxu0 0
  %5175 = vmatpush1.bf16.msra.mxu0 0
  %5176 = vmatprep.subr.bf16.mxu0 0
  %5177 = vmatpush1.bf16.msra.mxu0 0
  %5178 = vmatprep.subr.bf16.mxu0 0
  %5179 = vmatpush1.bf16.msra.mxu0 0
  %5180 = vmatprep.subr.bf16.mxu0 0
  %5181 = vmatpush1.bf16.msra.mxu0 0
  %5182 = vmatprep.subr.bf16.mxu0 0
  %5183 = vmatpush1.bf16.msra.mxu0 0
  %5184 = vmatprep.subr.bf16.mxu0 0
  %5185 = vmatpush1.bf16.msra.mxu0 0
  %5186 = vmatprep.subr.bf16.mxu0 0
  %5187 = vmatpush1.bf16.msra.mxu0 0
  %5188 = vmatprep.subr.bf16.mxu0 0
  %5189 = vmatpush1.bf16.msra.mxu0 0
  %5190 = vmatprep.subr.bf16.mxu0 0
  %5191 = vmatpush1.bf16.msra.mxu0 0
  %5192 = vmatprep.subr.bf16.mxu0 0
  %5193 = vmatpush1.bf16.msra.mxu0 0
  %5194 = vmatprep.subr.bf16.mxu0 0
  %5195 = vmatpush1.bf16.msra.mxu0 0
  %5196 = vmatprep.subr.bf16.mxu0 0
  %5197 = vmatpush1.bf16.msra.mxu0 0
  %5198 = vmatprep.subr.bf16.mxu0 0
  %5199 = vmatpush1.bf16.msra.mxu0 0
  %5200 = vmatprep.subr.bf16.mxu0 0
  %5201 = vmatpush1.bf16.msra.mxu0 0
  %5202 = vmatprep.mubr.bf16.mxu0 0
  %5203 = vmatmul.mubr.bf16.gmra.mrb[0].mxu0 %v5086
  %v5204 = vpop.f32.mrb[0].mxu0
  %v5205 = vadd.f32 0.0, %v5204
  %v5206 = vpop.f32.mrb[0].mxu0
  %v5207 = vadd.f32 0.0, %v5206
  %v5208 = vpop.f32.mrb[0].mxu0
  %v5209 = vpop.f32.mrb[0].mxu0
  %5210 = vdwg.mxu0
  %v5212 = vsel %vm1816, %v5069, 0
  %v5215 = vsel %vm1861, %v5070, 0
  %v5218 = vsel %vm1861, %v5071, 0
  %v5221 = vsel %vm1861, %v5072, 0
  %v5224 = vsel %vm1861, %v5073, 0
  %v5227 = vsel %vm1861, %v5074, 0
  %v5230 = vsel %vm1861, %v5075, 0
  %5232 = vmatprep.subr.bf16.mxu0 %v5218
  %5233 = vmatpush1.bf16.msra.mxu0 %v5215
  %5234 = vmatprep.subr.bf16.mxu0 0
  %5235 = vmatpush1.bf16.msra.mxu0 0
  %5236 = vmatprep.subr.bf16.mxu0 0
  %5237 = vmatpush1.bf16.msra.mxu0 0
  %5238 = vmatprep.subr.bf16.mxu0 0
  %5239 = vmatpush1.bf16.msra.mxu0 0
  %5240 = vmatprep.subr.bf16.mxu0 0
  %5241 = vmatpush1.bf16.msra.mxu0 0
  %5242 = vmatprep.subr.bf16.mxu0 0
  %5243 = vmatpush1.bf16.msra.mxu0 0
  %5244 = vmatprep.subr.bf16.mxu0 0
  %5245 = vmatpush1.bf16.msra.mxu0 0
  %5246 = vmatprep.subr.bf16.mxu0 0
  %5247 = vmatpush1.bf16.msra.mxu0 0
  %5248 = vmatprep.subr.bf16.mxu0 0
  %5249 = vmatpush1.bf16.msra.mxu0 0
  %5250 = vmatprep.subr.bf16.mxu0 0
  %5251 = vmatpush1.bf16.msra.mxu0 0
  %5252 = vmatprep.subr.bf16.mxu0 0
  %5253 = vmatpush1.bf16.msra.mxu0 0
  %5254 = vmatprep.subr.bf16.mxu0 0
  %5255 = vmatpush1.bf16.msra.mxu0 0
  %5256 = vmatprep.subr.bf16.mxu0 0
  %5257 = vmatpush1.bf16.msra.mxu0 0
  %5258 = vmatprep.subr.bf16.mxu0 0
  %5259 = vmatpush1.bf16.msra.mxu0 0
  %5260 = vmatprep.subr.bf16.mxu0 0
  %5261 = vmatpush1.bf16.msra.mxu0 0
  %5262 = vmatprep.subr.bf16.mxu0 0
  %5263 = vmatpush1.bf16.msra.mxu0 0
  %5264 = vmatprep.mubr.bf16.mxu0 0
  %5265 = vmatmul.mubr.bf16.gmra.mrb[0].mxu0 %v5212
  %v5266 = vpop.f32.mrb[0].mxu0
  %v5267 = vadd.f32 %v5123, %v5266
  %v5268 = vpop.f32.mrb[0].mxu0
  %v5269 = vadd.f32 %v5125, %v5268
  %v5270 = vpop.f32.mrb[0].mxu0
  %v5271 = vpop.f32.mrb[0].mxu0
  %5272 = vdwg.mxu0
  %5273 = vmatprep.subr.bf16.mxu0 %v5224
  %5274 = vmatpush1.bf16.msra.mxu0 %v5221
  %5275 = vmatprep.subr.bf16.mxu0 0
  %5276 = vmatpush1.bf16.msra.mxu0 0
  %5277 = vmatprep.subr.bf16.mxu0 0
  %5278 = vmatpush1.bf16.msra.mxu0 0
  %5279 = vmatprep.subr.bf16.mxu0 0
  %5280 = vmatpush1.bf16.msra.mxu0 0
  %5281 = vmatprep.subr.bf16.mxu0 0
  %5282 = vmatpush1.bf16.msra.mxu0 0
  %5283 = vmatprep.subr.bf16.mxu0 0
  %5284 = vmatpush1.bf16.msra.mxu0 0
  %5285 = vmatprep.subr.bf16.mxu0 0
  %5286 = vmatpush1.bf16.msra.mxu0 0
  %5287 = vmatprep.subr.bf16.mxu0 0
  %5288 = vmatpush1.bf16.msra.mxu0 0
  %5289 = vmatprep.subr.bf16.mxu0 0
  %5290 = vmatpush1.bf16.msra.mxu0 0
  %5291 = vmatprep.subr.bf16.mxu0 0
  %5292 = vmatpush1.bf16.msra.mxu0 0
  %5293 = vmatprep.subr.bf16.mxu0 0
  %5294 = vmatpush1.bf16.msra.mxu0 0
  %5295 = vmatprep.subr.bf16.mxu0 0
  %5296 = vmatpush1.bf16.msra.mxu0 0
  %5297 = vmatprep.subr.bf16.mxu0 0
  %5298 = vmatpush1.bf16.msra.mxu0 0
  %5299 = vmatprep.subr.bf16.mxu0 0
  %5300 = vmatpush1.bf16.msra.mxu0 0
  %5301 = vmatprep.subr.bf16.mxu0 0
  %5302 = vmatpush1.bf16.msra.mxu0 0
  %5303 = vmatprep.subr.bf16.mxu0 0
  %5304 = vmatpush1.bf16.msra.mxu0 0
  %5305 = vmatprep.mubr.bf16.mxu0 0
  %5306 = vmatmul.mubr.bf16.gmra.mrb[0].mxu0 %v5212
  %v5307 = vpop.f32.mrb[0].mxu0
  %v5308 = vadd.f32 %v5164, %v5307
  %v5309 = vpop.f32.mrb[0].mxu0
  %v5310 = vadd.f32 %v5166, %v5309
  %v5311 = vpop.f32.mrb[0].mxu0
  %v5312 = vpop.f32.mrb[0].mxu0
  %5313 = vdwg.mxu0
  %5314 = vmatprep.subr.bf16.mxu0 %v5230
  %5315 = vmatpush1.bf16.msra.mxu0 %v5227
  %5316 = vmatprep.subr.bf16.mxu0 0
  %5317 = vmatpush1.bf16.msra.mxu0 0
  %5318 = vmatprep.subr.bf16.mxu0 0
  %5319 = vmatpush1.bf16.msra.mxu0 0
  %5320 = vmatprep.subr.bf16.mxu0 0
  %5321 = vmatpush1.bf16.msra.mxu0 0
  %5322 = vmatprep.subr.bf16.mxu0 0
  %5323 = vmatpush1.bf16.msra.mxu0 0
  %5324 = vmatprep.subr.bf16.mxu0 0
  %5325 = vmatpush1.bf16.msra.mxu0 0
  %5326 = vmatprep.subr.bf16.mxu0 0
  %5327 = vmatpush1.bf16.msra.mxu0 0
  %5328 = vmatprep.subr.bf16.mxu0 0
  %5329 = vmatpush1.bf16.msra.mxu0 0
  %5330 = vmatprep.subr.bf16.mxu0 0
  %5331 = vmatpush1.bf16.msra.mxu0 0
  %5332 = vmatprep.subr.bf16.mxu0 0
  %5333 = vmatpush1.bf16.msra.mxu0 0
  %5334 = vmatprep.subr.bf16.mxu0 0
  %5335 = vmatpush1.bf16.msra.mxu0 0
  %5336 = vmatprep.subr.bf16.mxu0 0
  %5337 = vmatpush1.bf16.msra.mxu0 0
  %5338 = vmatprep.subr.bf16.mxu0 0
  %5339 = vmatpush1.bf16.msra.mxu0 0
  %5340 = vmatprep.subr.bf16.mxu0 0
  %5341 = vmatpush1.bf16.msra.mxu0 0
  %5342 = vmatprep.subr.bf16.mxu0 0
  %5343 = vmatpush1.bf16.msra.mxu0 0
  %5344 = vmatprep.subr.bf16.mxu0 0
  %5345 = vmatpush1.bf16.msra.mxu0 0
  %5346 = vmatprep.mubr.bf16.mxu0 0
  %5347 = vmatmul.mubr.bf16.gmra.mrb[0].mxu0 %v5212
  %v5348 = vpop.f32.mrb[0].mxu0
  %v5349 = vadd.f32 %v5205, %v5348
  %v5350 = vpop.f32.mrb[0].mxu0
  %v5351 = vadd.f32 %v5207, %v5350
  %v5352 = vpop.f32.mrb[0].mxu0
  %v5353 = vpop.f32.mrb[0].mxu0
  %5354 = vdwg.mxu0
  %v5355 = vld [vmem:[%s10] sm:$0xff]
  %5357 = vset.pattern.permute.xlu0 0
  %5358 = vperm.xlu0 %5357, %v5355
  %v5359 = vpop.permute.xlu0 %5358
  %v5361 = vadd.f32 %v5267, %v5359
  %v5362 = vadd.f32 %v5269, %v5359
  %v5363 = vadd.f32 %v5308, %v5359
  %v5364 = vadd.f32 %v5310, %v5359
  %v5365 = vadd.f32 %v5349, %v5359
  %v5366 = vadd.f32 %v5351, %v5359
  %5367 = vst [vmem:[%s11] sm:$0xff] 0.0
  %5368 = vst [vmem:[%s11 + $0x8] sm:$0xff] 0.0
  %5369 = vst [vmem:[%s11 + $0x10] sm:$0xff] 0.0
  %5370 = vst [vmem:[%s11 + $0x18] sm:$0xff] 0.0
  %5371 = vst [vmem:[%s11 + $0x20] sm:$0xff] 0.0
  %5372 = vst [vmem:[%s11 + $0x28] sm:$0xff] 0.0
  %5373 = vst [vmem:[%s11] sm:$0xff] %v5361
  %5374 = vst [vmem:[%s11 + $0x8] sm:$0xff] %v5362
  %5375 = vst [vmem:[%s11 + $0x10] sm:$0xff] %v5363
  %5376 = vst [vmem:[%s11 + $0x18] sm:$0xff] %v5364
  %5377 = vst [vmem:[%s11 + $0x20] sm:$0xff] %v5365
  %5378 = vst.msk [vmem:[%s11 + $0x28] sm:$0xff] %vm1816, %v5366
  // Predicated region
  $region46: #{fused_standard_model_forward.1} parent=0 // pred_check
    _
  $region47: #{fused_standard_model_forward.1} parent=0 // pred_check_branch
    %5380 = sbr.rel (0) target = $region49
  $region48: #{fused_standard_model_forward.1} parent=0 // pred_region
    _
  $region49: #{fused_standard_model_forward.1} parent=0 // pred_fallthru
    _
  // Predicated region
  $region50: #{fused_standard_model_forward.1} parent=0 // pred_check
    _
  $region51: #{fused_standard_model_forward.1} parent=0 // pred_check_branch
    %5382 = sbr.rel (0) target = $region53
  $region52: #{fused_standard_model_forward.1} parent=0 // pred_region
    _
  $region53: #{fused_standard_model_forward.1} parent=0 // pred_fallthru
    _

</llo_original>
